<compile_context>
chip_gen: v5e
topology: v5e:2x2
jax: 0.10.0
libtpu: 0.0.40
codegen_flags: <defaults>
</compile_context>

<pallas_src>
import functools
import random

import jax
import jax.numpy as jnp
from jax.experimental import pallas as pl
from jax.experimental.pallas import tpu as pltpu

PLANES = 128      # channels (torch default is 256; kept 128 for the example)
NUM_BLOCK = 8
SHRINK = 2
EPS = 1e-5        # nn.GroupNorm default eps
LEAKY = 0.01      # nn.LeakyReLU default negative_slope
NSC = 8           # lanes in the per-channel scale slab (dra + nsel + padding)


# --------------------------------------------------------------------------
# Kernel 1: pooling + conv1 + fc path + grouped domain adaptor -> scale slab.
# --------------------------------------------------------------------------
def pool_adaptor_kernel(x_ref, drop_ref,
                        w1_ref, b1c_ref,
                        wa1t_ref, ba1f_ref, g1f_ref, be1f_ref,
                        gavg1_ref, gexp1_ref,
                        wa2t_ref, ba2f_ref, g2f_ref, be2f_ref,
                        gavg2_ref, gexp2_ref,
                        fc1w_ref, fc1bc_ref, fc2w_ref, fc2bc_ref,
                        scales_ref, *, sel, nb, c2):
    f32 = jnp.float32
    xb = x_ref[0]                                          # (C, HW)
    C = xb.shape[0]

    # ---- global avg / max pooling over the spatial (lane) axis ------------
    x_avg = jnp.mean(xb, axis=1, keepdims=True)            # (C, 1)
    x_max = jnp.max(xb, axis=1, keepdims=True)             # (C, 1)

    # ---- conv1 (1x1) + pooling of domain_x ---------------------------------
    # avg path uses linearity: mean(w1 @ x + b1) == w1 @ mean(x) + b1
    dxm = jnp.dot(w1_ref[...], xb, preferred_element_type=f32)       # (nb, HW)
    dx_max = jnp.max(dxm, axis=1, keepdims=True) + b1c_ref[...]      # (nb, 1)
    dx_avg = jnp.dot(w1_ref[...], x_avg,
                     preferred_element_type=f32) + b1c_ref[...]      # (nb, 1)

    # ---- fc1 -> relu -> fc2 -> softmax (column layout, variants on lanes) --
    V = jnp.concatenate([dx_avg, dx_max], axis=1)                    # (nb, 2)
    h = jnp.dot(fc1w_ref[...], V, preferred_element_type=f32) + fc1bc_ref[...]
    h = jnp.maximum(h, 0.0)                                          # (nb/2, 2)
    z = jnp.dot(fc2w_ref[...], h, preferred_element_type=f32) + fc2bc_ref[...]
    z = z - jnp.max(z, axis=0, keepdims=True)                        # softmax over nb
    e = jnp.exp(z)
    o = e / jnp.sum(e, axis=0, keepdims=True)                        # (nb, 2)
    w_col = (o[:, 0:1] + o[:, 1:2]) * drop_ref[0]                    # (nb, 1)

    # ---- lane<->sublane crossing #1: small (C, 8) slab -> (8, C) ------------
    pooled = jnp.concatenate(
        [x_avg, x_max, jnp.zeros((C, 6), f32)], axis=1)              # (C, 8)
    P2 = pooled.T[0:2, :]                                            # (2, C)

    # ---- domain adaptor (avg & max variants together), lane-dense -----------
    # grouped conv1 as one flat matmul: (2, C) @ (C, nb*c2)
    y1 = jnp.dot(P2, wa1t_ref[...], preferred_element_type=f32) + ba1f_ref[...]
    # GroupNorm1: stats via constant block-average / expansion matmuls
    mu1 = jnp.dot(y1, gavg1_ref[...], preferred_element_type=f32)    # (2, nb)
    mu1e = jnp.dot(mu1, gexp1_ref[...], preferred_element_type=f32)  # (2, nb*c2)
    d1 = y1 - mu1e
    var1 = jnp.dot(d1 * d1, gavg1_ref[...], preferred_element_type=f32)
    inv1e = jnp.dot(jax.lax.rsqrt(var1 + EPS), gexp1_ref[...],
                    preferred_element_type=f32)
    y1n = d1 * inv1e * g1f_ref[...] + be1f_ref[...]
    y1n = jnp.where(y1n >= 0, y1n, LEAKY * y1n)                      # LeakyReLU

    # grouped conv2 as nb compact static per-group matmuls (no block-diag zeros)
    y2_parts = []
    for g in range(nb):
        y2_parts.append(jnp.dot(y1n[:, g * c2:(g + 1) * c2],
                                wa2t_ref[g * c2:(g + 1) * c2, :],
                                preferred_element_type=f32))         # (2, C)
    y2 = jnp.concatenate(y2_parts, axis=1) + ba2f_ref[...]           # (2, nb*C)

    mu2 = jnp.dot(y2, gavg2_ref[...], preferred_element_type=f32)    # (2, nb)
    mu2e = jnp.dot(mu2, gexp2_ref[...], preferred_element_type=f32)  # (2, nb*C)
    d2 = y2 - mu2e
    var2 = jnp.dot(d2 * d2, gavg2_ref[...], preferred_element_type=f32)
    inv2e = jnp.dot(jax.lax.rsqrt(var2 + EPS), gexp2_ref[...],
                    preferred_element_type=f32)
    y2n = d2 * inv2e * g2f_ref[...] + be2f_ref[...]
    att = jax.nn.sigmoid(y2n)                                        # (2, nb*C)
    att_sum = att[0:1, :] + att[1:2, :]                              # (1, nb*C)

    # reinterpret (1, nb*C) as (nb, C): 128-lane chunks stack onto sublanes
    att_rows = jnp.concatenate(
        [att_sum[:, g * C:(g + 1) * C] for g in range(nb)], axis=0)  # (nb, C)

    # domain recal attention: weighted sublane-sum -> (1, C), no transpose
    dra_row = jax.nn.sigmoid(
        jnp.sum(att_rows * w_col, axis=0, keepdims=True))            # (1, C)

    # ---- lane<->sublane crossing #2: only the consumed rows (<=8, C) --------
    rows = [dra_row] + [att_rows[d:d + 1, :] for d in sel]
    pad = NSC - len(rows)
    if pad > 0:
        rows.append(jnp.zeros((pad, C), f32))
    slab = jnp.concatenate(rows, axis=0)                             # (8, C)
    scales_ref[0] = slab.T                                           # (C, 8)


# --------------------------------------------------------------------------
# Kernel 2: mem-bound apply pass over HW tiles.
# --------------------------------------------------------------------------
def apply_kernel(x_ref, scales_ref, out_ref, feat_ref, *, nsel):
    xt = x_ref[0]                                     # (C, THW)
    sc = scales_ref[0]                                # (C, NSC)
    dra_col = sc[:, 0:1]                              # (C, 1)
    out_ref[0] = xt * (dra_col + 1.0)                 # fused x*dra + x
    for i in range(nsel):                             # static, nsel blocks
        feat_ref[0, i] = xt * sc[:, i + 1:i + 2]


# --------------------------------------------------------------------------
# Host-side one-time parameter preprocessing (layouts / GN helper matrices).
# --------------------------------------------------------------------------
def prepare_params(params, planes=PLANES, nb=NUM_BLOCK, shrink=SHRINK):
    f32 = jnp.float32
    c2 = planes // shrink
    wa1 = params["wa1"]                                   # (nb, c2, C)
    wa2 = params["wa2"]                                   # (nb, C, c2)
    return dict(
        w1=params["w1"],                                  # (nb, C)
        b1c=params["b1"].reshape(nb, 1),
        wa1t=wa1.reshape(nb * c2, planes).T,              # (C, nb*c2)
        ba1f=params["ba1"].reshape(1, nb * c2),
        g1f=params["g1"].reshape(1, nb * c2),
        be1f=params["be1"].reshape(1, nb * c2),
        gavg1=jnp.kron(jnp.eye(nb, dtype=f32), jnp.full((c2, 1), 1.0 / c2, f32)),
        gexp1=jnp.kron(jnp.eye(nb, dtype=f32), jnp.ones((1, c2), f32)),
        # compact grouped-conv2 weight: row g*c2+k, col c == wa2[g, c, k]
        wa2t=jnp.transpose(wa2, (0, 2, 1)).reshape(nb * c2, planes),
        ba2f=params["ba2"].reshape(1, nb * planes),
        g2f=params["g2"].reshape(1, nb * planes),
        be2f=params["be2"].reshape(1, nb * planes),
        gavg2=jnp.kron(jnp.eye(nb, dtype=f32),
                       jnp.full((planes, 1), 1.0 / planes, f32)),
        gexp2=jnp.kron(jnp.eye(nb, dtype=f32), jnp.ones((1, planes), f32)),
        fc1w=params["fc1w"],                              # (nb2, nb)
        fc1bc=params["fc1b"].reshape(-1, 1),
        fc2w=params["fc2w"],                              # (nb, nb2)
        fc2bc=params["fc2b"].reshape(-1, 1),
    )


def _vmem_limit_bytes():
    """Generation-aware scoped-VMEM limit (≈48 MiB on v7x, ≈96 MiB on v5e/v6e)."""
    try:
        cap = getattr(pltpu.get_tpu_info(), "vmem_capacity_bytes", None)
    except Exception:  # pragma: no cover - info not available
        cap = None
    if not cap:
        return 64 * 1024 * 1024
    return int(min(cap * 3 // 4, 100 * 1024 * 1024))


def _pick_hw_tile(hw, max_tile=1024):
    """Largest multiple-of-128 exact divisor of hw (<= max_tile), else full hw."""
    if hw <= max_tile:
        return hw
    best = 0
    for t in range(128, max_tile + 1, 128):
        if hw % t == 0:
            best = t
    return best if best else hw


# --------------------------------------------------------------------------
# Forward (glue is only free reshapes — no host transposes).
# --------------------------------------------------------------------------
def domadaptor_forward(x, prep, drop, sel):
    B, C, H, W = x.shape
    HW = H * W
    nb = NUM_BLOCK
    c2 = C // SHRINK
    nb2 = prep["fc1w"].shape[0]
    nsel = len(sel)
    vmem_limit = _vmem_limit_bytes()

    x_k = x.reshape(B, C, HW)            # NCHW -> (B, C, HW): free
    drop_c = drop.reshape(B, nb, 1)

    def full(shape):
        return pl.BlockSpec(shape, lambda *_: (0,) * len(shape))

    # ---- call 1: pooling + adaptor + fc -> tiny (B, C, NSC) scale slab ------
    pool_kernel = functools.partial(pool_adaptor_kernel,
                                    sel=tuple(sel), nb=nb, c2=c2)
    scales = pl.pallas_call(
        pool_kernel,
        out_shape=jax.ShapeDtypeStruct((B, C, NSC), jnp.float32),
        grid=(B,),
        in_specs=[
            pl.BlockSpec((1, C, HW), lambda b: (b, 0, 0)),      # x
            pl.BlockSpec((1, nb, 1), lambda b: (b, 0, 0)),      # drop mask
            full((nb, C)),                                      # w1
            full((nb, 1)),                                      # b1
            full((C, nb * c2)),                                 # wa1t
            full((1, nb * c2)),                                 # ba1
            full((1, nb * c2)),                                 # gn1 gamma
            full((1, nb * c2)),                                 # gn1 beta
            full((nb * c2, nb)),                                # gn1 block-avg
            full((nb, nb * c2)),                                # gn1 expand
            full((nb * c2, C)),                                 # wa2t (compact)
            full((1, nb * C)),                                  # ba2
            full((1, nb * C)),                                  # gn2 gamma
            full((1, nb * C)),                                  # gn2 beta
            full((nb * C, nb)),                                 # gn2 block-avg
            full((nb, nb * C)),                                 # gn2 expand
            full((nb2, nb)),                                    # fc1 w
            full((nb2, 1)),                                     # fc1 b
            full((nb, nb2)),                                    # fc2 w
            full((nb, 1)),                                      # fc2 b
        ],
        out_specs=pl.BlockSpec((1, C, NSC), lambda b: (b, 0, 0)),
        compiler_params=pltpu.CompilerParams(
            dimension_semantics=("parallel",),
            vmem_limit_bytes=vmem_limit,
        ),
    )(x_k, drop_c,
      prep["w1"], prep["b1c"],
      prep["wa1t"], prep["ba1f"], prep["g1f"], prep["be1f"],
      prep["gavg1"], prep["gexp1"],
      prep["wa2t"], prep["ba2f"], prep["g2f"], prep["be2f"],
      prep["gavg2"], prep["gexp2"],
      prep["fc1w"], prep["fc1bc"], prep["fc2w"], prep["fc2bc"])

    # ---- call 2: mem-bound apply pass over HW tiles --------------------------
    thw = _pick_hw_tile(HW)
    n_t = HW // thw
    out_k, feat_k = pl.pallas_call(
        functools.partial(apply_kernel, nsel=nsel),
        out_shape=(
            jax.ShapeDtypeStruct((B, C, HW), jnp.float32),
            jax.ShapeDtypeStruct((B, nsel, C, HW), jnp.float32),
        ),
        grid=(B, n_t),
        in_specs=[
            pl.BlockSpec((1, C, thw), lambda b, t: (b, 0, t)),
            pl.BlockSpec((1, C, NSC), lambda b, t: (b, 0, 0)),
        ],
        out_specs=(
            pl.BlockSpec((1, C, thw), lambda b, t: (b, 0, t)),
            pl.BlockSpec((1, nsel, C, thw), lambda b, t: (b, 0, 0, t)),
        ),
        compiler_params=pltpu.CompilerParams(
            dimension_semantics=("parallel", "parallel"),
            vmem_limit_bytes=vmem_limit,
        ),
    )(x_k, scales)

    domain_recal_feature = out_k.reshape(B, C, H, W)
    domain_recal_att = scales[:, :, 0].reshape(B, C, 1, 1)
    domain_feature = [feat_k[:, i].reshape(B, C, H, W) for i in range(nsel)]
    return domain_recal_feature, domain_recal_att, domain_feature


# --------------------------------------------------------------------------
# Pure-JAX reference (mirrors the torch forward) for a correctness check.
# --------------------------------------------------------------------------
def reference_forward(x, params, drop, sel):
    B, C, H, W = x.shape
    xf = x.reshape(B, C, H * W)
    x_avg = xf.mean(-1)
    x_max = xf.max(-1)
    dx = jnp.einsum("oc,bcs->bos", params["w1"], xf) + params["b1"][None, :, None]
    dx_avg, dx_max = dx.mean(-1), dx.max(-1)

    def adaptor(p):
        y1 = jnp.einsum("gkc,bc->bgk", params["wa1"], p) + params["ba1"][None]
        mu = y1.mean(-1, keepdims=True)
        var = ((y1 - mu) ** 2).mean(-1, keepdims=True)
        y1 = (y1 - mu) * jax.lax.rsqrt(var + EPS) * params["g1"][None] + params["be1"][None]
        y1 = jnp.where(y1 >= 0, y1, LEAKY * y1)
        y2 = jnp.einsum("gck,bgk->bgc", params["wa2"], y1) + params["ba2"][None]
        mu = y2.mean(-1, keepdims=True)
        var = ((y2 - mu) ** 2).mean(-1, keepdims=True)
        y2 = (y2 - mu) * jax.lax.rsqrt(var + EPS) * params["g2"][None] + params["be2"][None]
        return jax.nn.sigmoid(y2)

    att_sum = adaptor(x_avg) + adaptor(x_max)                    # (B, nb, C)
    recal = jnp.transpose(att_sum, (0, 2, 1))                    # (B, C, nb)

    def fcp(v):
        h = jnp.maximum(v @ params["fc1w"].T + params["fc1b"], 0.0)
        return jax.nn.softmax(h @ params["fc2w"].T + params["fc2b"], axis=1)

    w = (fcp(dx_avg) + fcp(dx_max)) * drop
    dra = jax.nn.sigmoid(jnp.einsum("bcg,bg->bc", recal, w))[:, :, None, None]
    out = x * dra + x
    feats = [x * recal[:, :, d][:, :, None, None] for d in sel]
    return out, dra, feats


# --------------------------------------------------------------------------
def init_params(key, planes=PLANES, nb=NUM_BLOCK, shrink=SHRINK):
    c2 = planes // shrink
    ks = jax.random.split(key, 12)

    def rnd(k, shape, scale):
        return (scale * jax.random.normal(k, shape)).astype(jnp.float32)

    return dict(
        w1=rnd(ks[0], (nb, planes), 0.05),            # conv1 (1x1)
        b1=rnd(ks[1], (nb,), 0.05),
        wa1=rnd(ks[2], (nb, c2, planes), 0.05),       # domain_adaptor1 (grouped)
        ba1=rnd(ks[3], (nb, c2), 0.05),
        g1=jnp.ones((nb, c2), jnp.float32) + rnd(ks[4], (nb, c2), 0.05),
        be1=rnd(ks[5], (nb, c2), 0.05),
        wa2=rnd(ks[6], (nb, planes, c2), 0.05),       # domain_adaptor2 (grouped)
        ba2=rnd(ks[7], (nb, planes), 0.05),
        g2=jnp.ones((nb, planes), jnp.float32) + rnd(ks[8], (nb, planes), 0.05),
        be2=rnd(ks[9], (nb, planes), 0.05),
        fc1w=rnd(ks[10], (nb // shrink, nb), 0.2),
        fc1b=jnp.zeros((nb // shrink,), jnp.float32),
        fc2w=rnd(ks[11], (nb, nb // shrink), 0.2),
        fc2b=jnp.zeros((nb,), jnp.float32),
    )


if __name__ == "__main__":
    # random.sample(range(0, num_block), 3) in the torch code -> deterministic here
    random.seed(0)
    sel = tuple(random.sample(range(0, NUM_BLOCK), 3))

    key = jax.random.PRNGKey(0)
    kx, kp, kd = jax.random.split(key, 3)
    B, H, W = 2, 8, 8
    x = jax.random.normal(kx, (B, PLANES, H, W), dtype=jnp.float32)
    params = init_params(kp)
    # torch.rand(...) thresholded at 0.2 -> deterministic 0/1 mask here
    # (the torch module applies the raw 0/1 mask, no 1/(1-p) rescale)
    drop = (jax.random.uniform(kd, (B, NUM_BLOCK)) >= 0.2).astype(jnp.float32)

    prep = prepare_params(params)
    out, dra, feats = domadaptor_forward(x, prep, drop, sel)
    jax.block_until_ready((out, dra, feats))

    ro, rd, rf = reference_forward(x, params, drop, sel)
    assert jnp.allclose(out, ro, atol=1e-3, rtol=1e-3)
    assert jnp.allclose(dra, rd, atol=1e-3, rtol=1e-3)
    for a, b in zip(feats, rf):
        assert jnp.allclose(a, b, atol=1e-3, rtol=1e-3)

    print("KERNEL_OK")
</pallas_src>

<mosaic_0001>
module attributes {stable_mosaic.version = 11 : i64} {
  func.func @pool_adaptor_kernel(%arg0: i32, %arg1: memref<1x128x64xf32, #tpu.memory_space<vmem>>, %arg2: memref<1x8x1xf32, #tpu.memory_space<vmem>>, %arg3: memref<8x128xf32, #tpu.memory_space<vmem>>, %arg4: memref<8x1xf32, #tpu.memory_space<vmem>>, %arg5: memref<128x512xf32, #tpu.memory_space<vmem>>, %arg6: memref<1x512xf32, #tpu.memory_space<vmem>>, %arg7: memref<1x512xf32, #tpu.memory_space<vmem>>, %arg8: memref<1x512xf32, #tpu.memory_space<vmem>>, %arg9: memref<512x8xf32, #tpu.memory_space<vmem>>, %arg10: memref<8x512xf32, #tpu.memory_space<vmem>>, %arg11: memref<512x128xf32, #tpu.memory_space<vmem>>, %arg12: memref<1x1024xf32, #tpu.memory_space<vmem>>, %arg13: memref<1x1024xf32, #tpu.memory_space<vmem>>, %arg14: memref<1x1024xf32, #tpu.memory_space<vmem>>, %arg15: memref<1024x8xf32, #tpu.memory_space<vmem>>, %arg16: memref<8x1024xf32, #tpu.memory_space<vmem>>, %arg17: memref<4x8xf32, #tpu.memory_space<vmem>>, %arg18: memref<4x1xf32, #tpu.memory_space<vmem>>, %arg19: memref<8x4xf32, #tpu.memory_space<vmem>>, %arg20: memref<8x1xf32, #tpu.memory_space<vmem>>, %arg21: memref<1x128x8xf32, #tpu.memory_space<vmem>>) attributes {dimension_semantics = [#tpu.dimension_semantics<parallel>], iteration_bounds = array<i64: 2>, scalar_prefetch = 0 : i64, scratch_operands = 0 : i64, tpu.core_type = #tpu.core_type<tc>, window_params = [{transform_indices = @transform_0, window_bounds = array<i64: 1, 128, 64>}, {transform_indices = @transform_1, window_bounds = array<i64: 1, 8, 1>}, {pipeline_mode = #tpu.pipeline_mode<synchronous>, transform_indices = @transform_2, window_bounds = array<i64: 8, 128>}, {pipeline_mode = #tpu.pipeline_mode<synchronous>, transform_indices = @transform_3, window_bounds = array<i64: 8, 1>}, {pipeline_mode = #tpu.pipeline_mode<synchronous>, transform_indices = @transform_4, window_bounds = array<i64: 128, 512>}, {pipeline_mode = #tpu.pipeline_mode<synchronous>, transform_indices = @transform_5, window_bounds = array<i64: 1, 512>}, {pipeline_mode = #tpu.pipeline_mode<synchronous>, transform_indices = @transform_6, window_bounds = array<i64: 1, 512>}, {pipeline_mode = #tpu.pipeline_mode<synchronous>, transform_indices = @transform_7, window_bounds = array<i64: 1, 512>}, {pipeline_mode = #tpu.pipeline_mode<synchronous>, transform_indices = @transform_8, window_bounds = array<i64: 512, 8>}, {pipeline_mode = #tpu.pipeline_mode<synchronous>, transform_indices = @transform_9, window_bounds = array<i64: 8, 512>}, {pipeline_mode = #tpu.pipeline_mode<synchronous>, transform_indices = @transform_10, window_bounds = array<i64: 512, 128>}, {pipeline_mode = #tpu.pipeline_mode<synchronous>, transform_indices = @transform_11, window_bounds = array<i64: 1, 1024>}, {pipeline_mode = #tpu.pipeline_mode<synchronous>, transform_indices = @transform_12, window_bounds = array<i64: 1, 1024>}, {pipeline_mode = #tpu.pipeline_mode<synchronous>, transform_indices = @transform_13, window_bounds = array<i64: 1, 1024>}, {pipeline_mode = #tpu.pipeline_mode<synchronous>, transform_indices = @transform_14, window_bounds = array<i64: 1024, 8>}, {pipeline_mode = #tpu.pipeline_mode<synchronous>, transform_indices = @transform_15, window_bounds = array<i64: 8, 1024>}, {pipeline_mode = #tpu.pipeline_mode<synchronous>, transform_indices = @transform_16, window_bounds = array<i64: 4, 8>}, {pipeline_mode = #tpu.pipeline_mode<synchronous>, transform_indices = @transform_17, window_bounds = array<i64: 4, 1>}, {pipeline_mode = #tpu.pipeline_mode<synchronous>, transform_indices = @transform_18, window_bounds = array<i64: 8, 4>}, {pipeline_mode = #tpu.pipeline_mode<synchronous>, transform_indices = @transform_19, window_bounds = array<i64: 8, 1>}, {transform_indices = @transform_20, window_bounds = array<i64: 1, 128, 8>}]} {
    %c0 = arith.constant 0 : index
    %c0_0 = arith.constant 0 : index
    %c0_1 = arith.constant 0 : index
    %0 = vector.load %arg1[%c0, %c0_0, %c0_1] : memref<1x128x64xf32, #tpu.memory_space<vmem>>, vector<1x128x64xf32>
    %1 = vector.shape_cast %0 : vector<1x128x64xf32> to vector<128x64xf32>
    %cst = arith.constant dense<0.000000e+00> : vector<128xf32>
    %2 = vector.multi_reduction <add>, %1, %cst [1] : vector<128x64xf32> to vector<128xf32>
    %3 = vector.shape_cast %2 : vector<128xf32> to vector<128x1xf32>
    %cst_2 = arith.constant 6.400000e+01 : f32
    %4 = vector.broadcast %cst_2 : f32 to vector<128x1xf32>
    %5 = arith.divf %3, %4 : vector<128x1xf32>
    %cst_3 = arith.constant dense<0xFF800000> : vector<128xf32>
    %6 = vector.multi_reduction <maximumf>, %1, %cst_3 [1] : vector<128x64xf32> to vector<128xf32>
    %7 = vector.shape_cast %6 : vector<128xf32> to vector<128x1xf32>
    %c0_4 = arith.constant 0 : index
    %c0_5 = arith.constant 0 : index
    %8 = vector.load %arg3[%c0_4, %c0_5] : memref<8x128xf32, #tpu.memory_space<vmem>>, vector<8x128xf32>
    %cst_6 = arith.constant dense<0.000000e+00> : vector<8x64xf32>
    %9 = tpu.matmul %8, %1, %cst_6 {dimension_numbers = #tpu.dot_dimension_numbers<[1], [0], [0], [1], [0, 0, 1, 1], [], []>} : vector<8x128xf32>, vector<128x64xf32>, vector<8x64xf32> -> vector<8x64xf32>
    %cst_7 = arith.constant dense<0xFF800000> : vector<8xf32>
    %10 = vector.multi_reduction <maximumf>, %9, %cst_7 [1] : vector<8x64xf32> to vector<8xf32>
    %11 = vector.shape_cast %10 : vector<8xf32> to vector<8x1xf32>
    %c0_8 = arith.constant 0 : index
    %c0_9 = arith.constant 0 : index
    %12 = vector.load %arg4[%c0_8, %c0_9] : memref<8x1xf32, #tpu.memory_space<vmem>>, vector<8x1xf32>
    %13 = arith.addf %11, %12 : vector<8x1xf32>
    %c0_10 = arith.constant 0 : index
    %c0_11 = arith.constant 0 : index
    %14 = vector.load %arg3[%c0_10, %c0_11] : memref<8x128xf32, #tpu.memory_space<vmem>>, vector<8x128xf32>
    %cst_12 = arith.constant dense<0.000000e+00> : vector<8x1xf32>
    %15 = tpu.matmul %14, %5, %cst_12 {dimension_numbers = #tpu.dot_dimension_numbers<[1], [0], [0], [1], [0, 0, 1, 1], [], []>} : vector<8x128xf32>, vector<128x1xf32>, vector<8x1xf32> -> vector<8x1xf32>
    %c0_13 = arith.constant 0 : index
    %c0_14 = arith.constant 0 : index
    %16 = vector.load %arg4[%c0_13, %c0_14] : memref<8x1xf32, #tpu.memory_space<vmem>>, vector<8x1xf32>
    %17 = arith.addf %15, %16 : vector<8x1xf32>
    %18 = tpu.concatenate %17, %13 in 1 : vector<8x1xf32>, vector<8x1xf32> -> vector<8x2xf32>
    %c0_15 = arith.constant 0 : index
    %c0_16 = arith.constant 0 : index
    %19 = vector.load %arg17[%c0_15, %c0_16] : memref<4x8xf32, #tpu.memory_space<vmem>>, vector<4x8xf32>
    %cst_17 = arith.constant dense<0.000000e+00> : vector<4x2xf32>
    %20 = tpu.matmul %19, %18, %cst_17 {dimension_numbers = #tpu.dot_dimension_numbers<[1], [0], [0], [1], [0, 0, 1, 1], [], []>} : vector<4x8xf32>, vector<8x2xf32>, vector<4x2xf32> -> vector<4x2xf32>
    %c0_18 = arith.constant 0 : index
    %c0_19 = arith.constant 0 : index
    %21 = vector.load %arg18[%c0_18, %c0_19] : memref<4x1xf32, #tpu.memory_space<vmem>>, vector<4x1xf32>
    %22 = vector.broadcast %21 : vector<4x1xf32> to vector<4x2xf32>
    %23 = arith.addf %20, %22 : vector<4x2xf32>
    %cst_20 = arith.constant 0.000000e+00 : f32
    %24 = vector.broadcast %cst_20 : f32 to vector<4x2xf32>
    %25 = arith.maximumf %23, %24 : vector<4x2xf32>
    %c0_21 = arith.constant 0 : index
    %c0_22 = arith.constant 0 : index
    %26 = vector.load %arg19[%c0_21, %c0_22] : memref<8x4xf32, #tpu.memory_space<vmem>>, vector<8x4xf32>
    %cst_23 = arith.constant dense<0.000000e+00> : vector<8x2xf32>
    %27 = tpu.matmul %26, %25, %cst_23 {dimension_numbers = #tpu.dot_dimension_numbers<[1], [0], [0], [1], [0, 0, 1, 1], [], []>} : vector<8x4xf32>, vector<4x2xf32>, vector<8x2xf32> -> vector<8x2xf32>
    %c0_24 = arith.constant 0 : index
    %c0_25 = arith.constant 0 : index
    %28 = vector.load %arg20[%c0_24, %c0_25] : memref<8x1xf32, #tpu.memory_space<vmem>>, vector<8x1xf32>
    %29 = vector.broadcast %28 : vector<8x1xf32> to vector<8x2xf32>
    %30 = arith.addf %27, %29 : vector<8x2xf32>
    %cst_26 = arith.constant dense<0xFF800000> : vector<2xf32>
    %31 = vector.multi_reduction <maximumf>, %30, %cst_26 [0] : vector<8x2xf32> to vector<2xf32>
    %32 = vector.shape_cast %31 : vector<2xf32> to vector<1x2xf32>
    %33 = vector.broadcast %32 : vector<1x2xf32> to vector<8x2xf32>
    %34 = arith.subf %30, %33 : vector<8x2xf32>
    %35 = math.exp %34 : vector<8x2xf32>
    %cst_27 = arith.constant dense<0.000000e+00> : vector<2xf32>
    %36 = vector.multi_reduction <add>, %35, %cst_27 [0] : vector<8x2xf32> to vector<2xf32>
    %37 = vector.shape_cast %36 : vector<2xf32> to vector<1x2xf32>
    %38 = vector.broadcast %37 : vector<1x2xf32> to vector<8x2xf32>
    %39 = arith.divf %35, %38 : vector<8x2xf32>
    %40 = vector.extract_strided_slice %39 {offsets = [0, 0], sizes = [8, 1], strides = [1, 1]} : vector<8x2xf32> to vector<8x1xf32>
    %41 = vector.extract_strided_slice %39 {offsets = [0, 1], sizes = [8, 1], strides = [1, 1]} : vector<8x2xf32> to vector<8x1xf32>
    %42 = arith.addf %40, %41 : vector<8x1xf32>
    %c0_28 = arith.constant 0 : index
    %c0_29 = arith.constant 0 : index
    %c0_30 = arith.constant 0 : index
    %43 = vector.load %arg2[%c0_28, %c0_29, %c0_30] : memref<1x8x1xf32, #tpu.memory_space<vmem>>, vector<1x8x1xf32>
    %44 = vector.shape_cast %43 : vector<1x8x1xf32> to vector<8x1xf32>
    %45 = arith.mulf %42, %44 : vector<8x1xf32>
    %cst_31 = arith.constant 0.000000e+00 : f32
    %46 = vector.broadcast %cst_31 : f32 to vector<128x6xf32>
    %47 = tpu.concatenate %5, %7, %46 in 1 : vector<128x1xf32>, vector<128x1xf32>, vector<128x6xf32> -> vector<128x8xf32>
    %48 = tpu.transpose %47, [1, 0] : vector<128x8xf32> -> vector<8x128xf32>
    %49 = vector.extract_strided_slice %48 {offsets = [0, 0], sizes = [2, 128], strides = [1, 1]} : vector<8x128xf32> to vector<2x128xf32>
    %c0_32 = arith.constant 0 : index
    %c0_33 = arith.constant 0 : index
    %50 = vector.load %arg5[%c0_32, %c0_33] : memref<128x512xf32, #tpu.memory_space<vmem>>, vector<128x512xf32>
    %cst_34 = arith.constant dense<0.000000e+00> : vector<2x512xf32>
    %51 = tpu.matmul %49, %50, %cst_34 {dimension_numbers = #tpu.dot_dimension_numbers<[1], [0], [0], [1], [0, 0, 1, 1], [], []>} : vector<2x128xf32>, vector<128x512xf32>, vector<2x512xf32> -> vector<2x512xf32>
    %c0_35 = arith.constant 0 : index
    %c0_36 = arith.constant 0 : index
    %52 = vector.load %arg6[%c0_35, %c0_36] : memref<1x512xf32, #tpu.memory_space<vmem>>, vector<1x512xf32>
    %53 = vector.broadcast %52 : vector<1x512xf32> to vector<2x512xf32>
    %54 = arith.addf %51, %53 : vector<2x512xf32>
    %c0_37 = arith.constant 0 : index
    %c0_38 = arith.constant 0 : index
    %55 = vector.load %arg9[%c0_37, %c0_38] : memref<512x8xf32, #tpu.memory_space<vmem>>, vector<512x8xf32>
    %cst_39 = arith.constant dense<0.000000e+00> : vector<2x8xf32>
    %56 = tpu.matmul %54, %55, %cst_39 {dimension_numbers = #tpu.dot_dimension_numbers<[1], [0], [0], [1], [0, 0, 1, 1], [], []>} : vector<2x512xf32>, vector<512x8xf32>, vector<2x8xf32> -> vector<2x8xf32>
    %c0_40 = arith.constant 0 : index
    %c0_41 = arith.constant 0 : index
    %57 = vector.load %arg10[%c0_40, %c0_41] : memref<8x512xf32, #tpu.memory_space<vmem>>, vector<8x512xf32>
    %cst_42 = arith.constant dense<0.000000e+00> : vector<2x512xf32>
    %58 = tpu.matmul %56, %57, %cst_42 {dimension_numbers = #tpu.dot_dimension_numbers<[1], [0], [0], [1], [0, 0, 1, 1], [], []>} : vector<2x8xf32>, vector<8x512xf32>, vector<2x512xf32> -> vector<2x512xf32>
    %59 = arith.subf %54, %58 : vector<2x512xf32>
    %60 = arith.mulf %59, %59 : vector<2x512xf32>
    %c0_43 = arith.constant 0 : index
    %c0_44 = arith.constant 0 : index
    %61 = vector.load %arg9[%c0_43, %c0_44] : memref<512x8xf32, #tpu.memory_space<vmem>>, vector<512x8xf32>
    %cst_45 = arith.constant dense<0.000000e+00> : vector<2x8xf32>
    %62 = tpu.matmul %60, %61, %cst_45 {dimension_numbers = #tpu.dot_dimension_numbers<[1], [0], [0], [1], [0, 0, 1, 1], [], []>} : vector<2x512xf32>, vector<512x8xf32>, vector<2x8xf32> -> vector<2x8xf32>
    %cst_46 = arith.constant 9.99999974E-6 : f32
    %63 = vector.broadcast %cst_46 : f32 to vector<2x8xf32>
    %64 = arith.addf %62, %63 : vector<2x8xf32>
    %65 = math.rsqrt %64 : vector<2x8xf32>
    %c0_47 = arith.constant 0 : index
    %c0_48 = arith.constant 0 : index
    %66 = vector.load %arg10[%c0_47, %c0_48] : memref<8x512xf32, #tpu.memory_space<vmem>>, vector<8x512xf32>
    %cst_49 = arith.constant dense<0.000000e+00> : vector<2x512xf32>
    %67 = tpu.matmul %65, %66, %cst_49 {dimension_numbers = #tpu.dot_dimension_numbers<[1], [0], [0], [1], [0, 0, 1, 1], [], []>} : vector<2x8xf32>, vector<8x512xf32>, vector<2x512xf32> -> vector<2x512xf32>
    %68 = arith.mulf %59, %67 : vector<2x512xf32>
    %c0_50 = arith.constant 0 : index
    %c0_51 = arith.constant 0 : index
    %69 = vector.load %arg7[%c0_50, %c0_51] : memref<1x512xf32, #tpu.memory_space<vmem>>, vector<1x512xf32>
    %70 = vector.broadcast %69 : vector<1x512xf32> to vector<2x512xf32>
    %71 = arith.mulf %68, %70 : vector<2x512xf32>
    %c0_52 = arith.constant 0 : index
    %c0_53 = arith.constant 0 : index
    %72 = vector.load %arg8[%c0_52, %c0_53] : memref<1x512xf32, #tpu.memory_space<vmem>>, vector<1x512xf32>
    %73 = vector.broadcast %72 : vector<1x512xf32> to vector<2x512xf32>
    %74 = arith.addf %71, %73 : vector<2x512xf32>
    %cst_54 = arith.constant 0.000000e+00 : f32
    %75 = vector.broadcast %cst_54 : f32 to vector<2x512xf32>
    %76 = arith.cmpf oge, %74, %75 : vector<2x512xf32>
    %cst_55 = arith.constant 0.00999999977 : f32
    %77 = vector.broadcast %cst_55 : f32 to vector<2x512xf32>
    %78 = arith.mulf %77, %74 : vector<2x512xf32>
    %79 = arith.select %76, %74, %78 : vector<2x512xi1>, vector<2x512xf32>
    %80 = vector.extract_strided_slice %79 {offsets = [0, 0], sizes = [2, 64], strides = [1, 1]} : vector<2x512xf32> to vector<2x64xf32>
    %c0_56 = arith.constant 0 : index
    %c0_57 = arith.constant 0 : index
    %81 = vector.load %arg11[%c0_56, %c0_57] : memref<512x128xf32, #tpu.memory_space<vmem>>, vector<64x128xf32>
    %cst_58 = arith.constant dense<0.000000e+00> : vector<2x128xf32>
    %82 = tpu.matmul %80, %81, %cst_58 {dimension_numbers = #tpu.dot_dimension_numbers<[1], [0], [0], [1], [0, 0, 1, 1], [], []>} : vector<2x64xf32>, vector<64x128xf32>, vector<2x128xf32> -> vector<2x128xf32>
    %83 = vector.extract_strided_slice %79 {offsets = [0, 64], sizes = [2, 64], strides = [1, 1]} : vector<2x512xf32> to vector<2x64xf32>
    %c64 = arith.constant 64 : index
    %c0_59 = arith.constant 0 : index
    %84 = vector.load %arg11[%c64, %c0_59] : memref<512x128xf32, #tpu.memory_space<vmem>>, vector<64x128xf32>
    %cst_60 = arith.constant dense<0.000000e+00> : vector<2x128xf32>
    %85 = tpu.matmul %83, %84, %cst_60 {dimension_numbers = #tpu.dot_dimension_numbers<[1], [0], [0], [1], [0, 0, 1, 1], [], []>} : vector<2x64xf32>, vector<64x128xf32>, vector<2x128xf32> -> vector<2x128xf32>
    %86 = vector.extract_strided_slice %79 {offsets = [0, 128], sizes = [2, 64], strides = [1, 1]} : vector<2x512xf32> to vector<2x64xf32>
    %c128 = arith.constant 128 : index
    %c0_61 = arith.constant 0 : index
    %87 = vector.load %arg11[%c128, %c0_61] : memref<512x128xf32, #tpu.memory_space<vmem>>, vector<64x128xf32>
    %cst_62 = arith.constant dense<0.000000e+00> : vector<2x128xf32>
    %88 = tpu.matmul %86, %87, %cst_62 {dimension_numbers = #tpu.dot_dimension_numbers<[1], [0], [0], [1], [0, 0, 1, 1], [], []>} : vector<2x64xf32>, vector<64x128xf32>, vector<2x128xf32> -> vector<2x128xf32>
    %89 = vector.extract_strided_slice %79 {offsets = [0, 192], sizes = [2, 64], strides = [1, 1]} : vector<2x512xf32> to vector<2x64xf32>
    %c192 = arith.constant 192 : index
    %c0_63 = arith.constant 0 : index
    %90 = vector.load %arg11[%c192, %c0_63] : memref<512x128xf32, #tpu.memory_space<vmem>>, vector<64x128xf32>
    %cst_64 = arith.constant dense<0.000000e+00> : vector<2x128xf32>
    %91 = tpu.matmul %89, %90, %cst_64 {dimension_numbers = #tpu.dot_dimension_numbers<[1], [0], [0], [1], [0, 0, 1, 1], [], []>} : vector<2x64xf32>, vector<64x128xf32>, vector<2x128xf32> -> vector<2x128xf32>
    %92 = vector.extract_strided_slice %79 {offsets = [0, 256], sizes = [2, 64], strides = [1, 1]} : vector<2x512xf32> to vector<2x64xf32>
    %c256 = arith.constant 256 : index
    %c0_65 = arith.constant 0 : index
    %93 = vector.load %arg11[%c256, %c0_65] : memref<512x128xf32, #tpu.memory_space<vmem>>, vector<64x128xf32>
    %cst_66 = arith.constant dense<0.000000e+00> : vector<2x128xf32>
    %94 = tpu.matmul %92, %93, %cst_66 {dimension_numbers = #tpu.dot_dimension_numbers<[1], [0], [0], [1], [0, 0, 1, 1], [], []>} : vector<2x64xf32>, vector<64x128xf32>, vector<2x128xf32> -> vector<2x128xf32>
    %95 = vector.extract_strided_slice %79 {offsets = [0, 320], sizes = [2, 64], strides = [1, 1]} : vector<2x512xf32> to vector<2x64xf32>
    %c320 = arith.constant 320 : index
    %c0_67 = arith.constant 0 : index
    %96 = vector.load %arg11[%c320, %c0_67] : memref<512x128xf32, #tpu.memory_space<vmem>>, vector<64x128xf32>
    %cst_68 = arith.constant dense<0.000000e+00> : vector<2x128xf32>
    %97 = tpu.matmul %95, %96, %cst_68 {dimension_numbers = #tpu.dot_dimension_numbers<[1], [0], [0], [1], [0, 0, 1, 1], [], []>} : vector<2x64xf32>, vector<64x128xf32>, vector<2x128xf32> -> vector<2x128xf32>
    %98 = vector.extract_strided_slice %79 {offsets = [0, 384], sizes = [2, 64], strides = [1, 1]} : vector<2x512xf32> to vector<2x64xf32>
    %c384 = arith.constant 384 : index
    %c0_69 = arith.constant 0 : index
    %99 = vector.load %arg11[%c384, %c0_69] : memref<512x128xf32, #tpu.memory_space<vmem>>, vector<64x128xf32>
    %cst_70 = arith.constant dense<0.000000e+00> : vector<2x128xf32>
    %100 = tpu.matmul %98, %99, %cst_70 {dimension_numbers = #tpu.dot_dimension_numbers<[1], [0], [0], [1], [0, 0, 1, 1], [], []>} : vector<2x64xf32>, vector<64x128xf32>, vector<2x128xf32> -> vector<2x128xf32>
    %101 = vector.extract_strided_slice %79 {offsets = [0, 448], sizes = [2, 64], strides = [1, 1]} : vector<2x512xf32> to vector<2x64xf32>
    %c448 = arith.constant 448 : index
    %c0_71 = arith.constant 0 : index
    %102 = vector.load %arg11[%c448, %c0_71] : memref<512x128xf32, #tpu.memory_space<vmem>>, vector<64x128xf32>
    %cst_72 = arith.constant dense<0.000000e+00> : vector<2x128xf32>
    %103 = tpu.matmul %101, %102, %cst_72 {dimension_numbers = #tpu.dot_dimension_numbers<[1], [0], [0], [1], [0, 0, 1, 1], [], []>} : vector<2x64xf32>, vector<64x128xf32>, vector<2x128xf32> -> vector<2x128xf32>
    %104 = tpu.concatenate %82, %85, %88, %91, %94, %97, %100, %103 in 1 : vector<2x128xf32>, vector<2x128xf32>, vector<2x128xf32>, vector<2x128xf32>, vector<2x128xf32>, vector<2x128xf32>, vector<2x128xf32>, vector<2x128xf32> -> vector<2x1024xf32>
    %c0_73 = arith.constant 0 : index
    %c0_74 = arith.constant 0 : index
    %105 = vector.load %arg12[%c0_73, %c0_74] : memref<1x1024xf32, #tpu.memory_space<vmem>>, vector<1x1024xf32>
    %106 = vector.broadcast %105 : vector<1x1024xf32> to vector<2x1024xf32>
    %107 = arith.addf %104, %106 : vector<2x1024xf32>
    %c0_75 = arith.constant 0 : index
    %c0_76 = arith.constant 0 : index
    %108 = vector.load %arg15[%c0_75, %c0_76] : memref<1024x8xf32, #tpu.memory_space<vmem>>, vector<1024x8xf32>
    %cst_77 = arith.constant dense<0.000000e+00> : vector<2x8xf32>
    %109 = tpu.matmul %107, %108, %cst_77 {dimension_numbers = #tpu.dot_dimension_numbers<[1], [0], [0], [1], [0, 0, 1, 1], [], []>} : vector<2x1024xf32>, vector<1024x8xf32>, vector<2x8xf32> -> vector<2x8xf32>
    %c0_78 = arith.constant 0 : index
    %c0_79 = arith.constant 0 : index
    %110 = vector.load %arg16[%c0_78, %c0_79] : memref<8x1024xf32, #tpu.memory_space<vmem>>, vector<8x1024xf32>
    %cst_80 = arith.constant dense<0.000000e+00> : vector<2x1024xf32>
    %111 = tpu.matmul %109, %110, %cst_80 {dimension_numbers = #tpu.dot_dimension_numbers<[1], [0], [0], [1], [0, 0, 1, 1], [], []>} : vector<2x8xf32>, vector<8x1024xf32>, vector<2x1024xf32> -> vector<2x1024xf32>
    %112 = arith.subf %107, %111 : vector<2x1024xf32>
    %113 = arith.mulf %112, %112 : vector<2x1024xf32>
    %c0_81 = arith.constant 0 : index
    %c0_82 = arith.constant 0 : index
    %114 = vector.load %arg15[%c0_81, %c0_82] : memref<1024x8xf32, #tpu.memory_space<vmem>>, vector<1024x8xf32>
    %cst_83 = arith.constant dense<0.000000e+00> : vector<2x8xf32>
    %115 = tpu.matmul %113, %114, %cst_83 {dimension_numbers = #tpu.dot_dimension_numbers<[1], [0], [0], [1], [0, 0, 1, 1], [], []>} : vector<2x1024xf32>, vector<1024x8xf32>, vector<2x8xf32> -> vector<2x8xf32>
    %cst_84 = arith.constant 9.99999974E-6 : f32
    %116 = vector.broadcast %cst_84 : f32 to vector<2x8xf32>
    %117 = arith.addf %115, %116 : vector<2x8xf32>
    %118 = math.rsqrt %117 : vector<2x8xf32>
    %c0_85 = arith.constant 0 : index
    %c0_86 = arith.constant 0 : index
    %119 = vector.load %arg16[%c0_85, %c0_86] : memref<8x1024xf32, #tpu.memory_space<vmem>>, vector<8x1024xf32>
    %cst_87 = arith.constant dense<0.000000e+00> : vector<2x1024xf32>
    %120 = tpu.matmul %118, %119, %cst_87 {dimension_numbers = #tpu.dot_dimension_numbers<[1], [0], [0], [1], [0, 0, 1, 1], [], []>} : vector<2x8xf32>, vector<8x1024xf32>, vector<2x1024xf32> -> vector<2x1024xf32>
    %121 = arith.mulf %112, %120 : vector<2x1024xf32>
    %c0_88 = arith.constant 0 : index
    %c0_89 = arith.constant 0 : index
    %122 = vector.load %arg13[%c0_88, %c0_89] : memref<1x1024xf32, #tpu.memory_space<vmem>>, vector<1x1024xf32>
    %123 = vector.broadcast %122 : vector<1x1024xf32> to vector<2x1024xf32>
    %124 = arith.mulf %121, %123 : vector<2x1024xf32>
    %c0_90 = arith.constant 0 : index
    %c0_91 = arith.constant 0 : index
    %125 = vector.load %arg14[%c0_90, %c0_91] : memref<1x1024xf32, #tpu.memory_space<vmem>>, vector<1x1024xf32>
    %126 = vector.broadcast %125 : vector<1x1024xf32> to vector<2x1024xf32>
    %127 = arith.addf %124, %126 : vector<2x1024xf32>
    %128 = arith.negf %127 : vector<2x1024xf32>
    %129 = math.exp %128 : vector<2x1024xf32>
    %cst_92 = arith.constant 1.000000e+00 : f32
    %130 = vector.broadcast %cst_92 : f32 to vector<2x1024xf32>
    %131 = arith.addf %130, %129 : vector<2x1024xf32>
    %132 = arith.divf %130, %131 : vector<2x1024xf32>
    %133 = vector.extract_strided_slice %132 {offsets = [0, 0], sizes = [1, 1024], strides = [1, 1]} : vector<2x1024xf32> to vector<1x1024xf32>
    %134 = vector.extract_strided_slice %132 {offsets = [1, 0], sizes = [1, 1024], strides = [1, 1]} : vector<2x1024xf32> to vector<1x1024xf32>
    %135 = arith.addf %133, %134 : vector<1x1024xf32>
    %136 = vector.extract_strided_slice %135 {offsets = [0, 0], sizes = [1, 128], strides = [1, 1]} : vector<1x1024xf32> to vector<1x128xf32>
    %137 = vector.extract_strided_slice %135 {offsets = [0, 128], sizes = [1, 128], strides = [1, 1]} : vector<1x1024xf32> to vector<1x128xf32>
    %138 = vector.extract_strided_slice %135 {offsets = [0, 256], sizes = [1, 128], strides = [1, 1]} : vector<1x1024xf32> to vector<1x128xf32>
    %139 = vector.extract_strided_slice %135 {offsets = [0, 384], sizes = [1, 128], strides = [1, 1]} : vector<1x1024xf32> to vector<1x128xf32>
    %140 = vector.extract_strided_slice %135 {offsets = [0, 512], sizes = [1, 128], strides = [1, 1]} : vector<1x1024xf32> to vector<1x128xf32>
    %141 = vector.extract_strided_slice %135 {offsets = [0, 640], sizes = [1, 128], strides = [1, 1]} : vector<1x1024xf32> to vector<1x128xf32>
    %142 = vector.extract_strided_slice %135 {offsets = [0, 768], sizes = [1, 128], strides = [1, 1]} : vector<1x1024xf32> to vector<1x128xf32>
    %143 = vector.extract_strided_slice %135 {offsets = [0, 896], sizes = [1, 128], strides = [1, 1]} : vector<1x1024xf32> to vector<1x128xf32>
    %144 = tpu.concatenate %136, %137, %138, %139, %140, %141, %142, %143 in 0 : vector<1x128xf32>, vector<1x128xf32>, vector<1x128xf32>, vector<1x128xf32>, vector<1x128xf32>, vector<1x128xf32>, vector<1x128xf32>, vector<1x128xf32> -> vector<8x128xf32>
    %145 = vector.broadcast %45 : vector<8x1xf32> to vector<8x128xf32>
    %146 = arith.mulf %144, %145 : vector<8x128xf32>
    %cst_93 = arith.constant dense<0.000000e+00> : vector<128xf32>
    %147 = vector.multi_reduction <add>, %146, %cst_93 [0] : vector<8x128xf32> to vector<128xf32>
    %148 = vector.shape_cast %147 : vector<128xf32> to vector<1x128xf32>
    %149 = arith.negf %148 : vector<1x128xf32>
    %150 = math.exp %149 : vector<1x128xf32>
    %cst_94 = arith.constant 1.000000e+00 : f32
    %151 = vector.broadcast %cst_94 : f32 to vector<1x128xf32>
    %152 = arith.addf %151, %150 : vector<1x128xf32>
    %153 = arith.divf %151, %152 : vector<1x128xf32>
    %154 = vector.extract_strided_slice %144 {offsets = [6, 0], sizes = [1, 128], strides = [1, 1]} : vector<8x128xf32> to vector<1x128xf32>
    %155 = vector.extract_strided_slice %144 {offsets = [7, 0], sizes = [1, 128], strides = [1, 1]} : vector<8x128xf32> to vector<1x128xf32>
    %156 = vector.extract_strided_slice %144 {offsets = [3, 0], sizes = [1, 128], strides = [1, 1]} : vector<8x128xf32> to vector<1x128xf32>
    %cst_95 = arith.constant 0.000000e+00 : f32
    %157 = vector.broadcast %cst_95 : f32 to vector<4x128xf32>
    %158 = tpu.concatenate %153, %154, %155, %156, %157 in 0 : vector<1x128xf32>, vector<1x128xf32>, vector<1x128xf32>, vector<1x128xf32>, vector<4x128xf32> -> vector<8x128xf32>
    %159 = tpu.transpose %158, [1, 0] : vector<8x128xf32> -> vector<128x8xf32>
    %c0_96 = arith.constant 0 : index
    %c0_97 = arith.constant 0 : index
    %c0_98 = arith.constant 0 : index
    %160 = vector.load %arg21[%c0_96, %c0_97, %c0_98] : memref<1x128x8xf32, #tpu.memory_space<vmem>>, vector<1x128x8xf32>
    %161 = vector.shape_cast %160 : vector<1x128x8xf32> to vector<128x8xf32>
    %162 = vector.shape_cast %159 : vector<128x8xf32> to vector<1x128x8xf32>
    tpu.vector_store %arg21[%c0_96, %c0_97, %c0_98], %162 {strides = array<i32>} : memref<1x128x8xf32, #tpu.memory_space<vmem>>, vector<1x128x8xf32>,
    return
  }
  func.func @transform_0(%arg0: i32) -> (i32, i32, i32) {
    %c0_i32 = arith.constant 0 : i32
    %c0_i32_0 = arith.constant 0 : i32
    %c0_i32_1 = arith.constant 0 : i32
    return %arg0, %c0_i32, %c0_i32_0 : i32, i32, i32
  }
  func.func @transform_1(%arg0: i32) -> (i32, i32, i32) {
    %c0_i32 = arith.constant 0 : i32
    %c0_i32_0 = arith.constant 0 : i32
    %c0_i32_1 = arith.constant 0 : i32
    return %arg0, %c0_i32, %c0_i32_0 : i32, i32, i32
  }
  func.func @transform_2(%arg0: i32) -> (i32, i32) {
    %c0_i32 = arith.constant 0 : i32
    %c0_i32_0 = arith.constant 0 : i32
    %c0_i32_1 = arith.constant 0 : i32
    return %c0_i32, %c0_i32_0 : i32, i32
  }
  func.func @transform_3(%arg0: i32) -> (i32, i32) {
    %c0_i32 = arith.constant 0 : i32
    %c0_i32_0 = arith.constant 0 : i32
    %c0_i32_1 = arith.constant 0 : i32
    return %c0_i32, %c0_i32_0 : i32, i32
  }
  func.func @transform_4(%arg0: i32) -> (i32, i32) {
    %c0_i32 = arith.constant 0 : i32
    %c0_i32_0 = arith.constant 0 : i32
    %c0_i32_1 = arith.constant 0 : i32
    return %c0_i32, %c0_i32_0 : i32, i32
  }
  func.func @transform_5(%arg0: i32) -> (i32, i32) {
    %c0_i32 = arith.constant 0 : i32
    %c0_i32_0 = arith.constant 0 : i32
    %c0_i32_1 = arith.constant 0 : i32
    return %c0_i32, %c0_i32_0 : i32, i32
  }
  func.func @transform_6(%arg0: i32) -> (i32, i32) {
    %c0_i32 = arith.constant 0 : i32
    %c0_i32_0 = arith.constant 0 : i32
    %c0_i32_1 = arith.constant 0 : i32
    return %c0_i32, %c0_i32_0 : i32, i32
  }
  func.func @transform_7(%arg0: i32) -> (i32, i32) {
    %c0_i32 = arith.constant 0 : i32
    %c0_i32_0 = arith.constant 0 : i32
    %c0_i32_1 = arith.constant 0 : i32
    return %c0_i32, %c0_i32_0 : i32, i32
  }
  func.func @transform_8(%arg0: i32) -> (i32, i32) {
    %c0_i32 = arith.constant 0 : i32
    %c0_i32_0 = arith.constant 0 : i32
    %c0_i32_1 = arith.constant 0 : i32
    return %c0_i32, %c0_i32_0 : i32, i32
  }
  func.func @transform_9(%arg0: i32) -> (i32, i32) {
    %c0_i32 = arith.constant 0 : i32
    %c0_i32_0 = arith.constant 0 : i32
    %c0_i32_1 = arith.constant 0 : i32
    return %c0_i32, %c0_i32_0 : i32, i32
  }
  func.func @transform_10(%arg0: i32) -> (i32, i32) {
    %c0_i32 = arith.constant 0 : i32
    %c0_i32_0 = arith.constant 0 : i32
    %c0_i32_1 = arith.constant 0 : i32
    return %c0_i32, %c0_i32_0 : i32, i32
  }
  func.func @transform_11(%arg0: i32) -> (i32, i32) {
    %c0_i32 = arith.constant 0 : i32
    %c0_i32_0 = arith.constant 0 : i32
    %c0_i32_1 = arith.constant 0 : i32
    return %c0_i32, %c0_i32_0 : i32, i32
  }
  func.func @transform_12(%arg0: i32) -> (i32, i32) {
    %c0_i32 = arith.constant 0 : i32
    %c0_i32_0 = arith.constant 0 : i32
    %c0_i32_1 = arith.constant 0 : i32
    return %c0_i32, %c0_i32_0 : i32, i32
  }
  func.func @transform_13(%arg0: i32) -> (i32, i32) {
    %c0_i32 = arith.constant 0 : i32
    %c0_i32_0 = arith.constant 0 : i32
    %c0_i32_1 = arith.constant 0 : i32
    return %c0_i32, %c0_i32_0 : i32, i32
  }
  func.func @transform_14(%arg0: i32) -> (i32, i32) {
    %c0_i32 = arith.constant 0 : i32
    %c0_i32_0 = arith.constant 0 : i32
    %c0_i32_1 = arith.constant 0 : i32
    return %c0_i32, %c0_i32_0 : i32, i32
  }
  func.func @transform_15(%arg0: i32) -> (i32, i32) {
    %c0_i32 = arith.constant 0 : i32
    %c0_i32_0 = arith.constant 0 : i32
    %c0_i32_1 = arith.constant 0 : i32
    return %c0_i32, %c0_i32_0 : i32, i32
  }
  func.func @transform_16(%arg0: i32) -> (i32, i32) {
    %c0_i32 = arith.constant 0 : i32
    %c0_i32_0 = arith.constant 0 : i32
    %c0_i32_1 = arith.constant 0 : i32
    return %c0_i32, %c0_i32_0 : i32, i32
  }
  func.func @transform_17(%arg0: i32) -> (i32, i32) {
    %c0_i32 = arith.constant 0 : i32
    %c0_i32_0 = arith.constant 0 : i32
    %c0_i32_1 = arith.constant 0 : i32
    return %c0_i32, %c0_i32_0 : i32, i32
  }
  func.func @transform_18(%arg0: i32) -> (i32, i32) {
    %c0_i32 = arith.constant 0 : i32
    %c0_i32_0 = arith.constant 0 : i32
    %c0_i32_1 = arith.constant 0 : i32
    return %c0_i32, %c0_i32_0 : i32, i32
  }
  func.func @transform_19(%arg0: i32) -> (i32, i32) {
    %c0_i32 = arith.constant 0 : i32
    %c0_i32_0 = arith.constant 0 : i32
    %c0_i32_1 = arith.constant 0 : i32
    return %c0_i32, %c0_i32_0 : i32, i32
  }
  func.func @transform_20(%arg0: i32) -> (i32, i32, i32) {
    %c0_i32 = arith.constant 0 : i32
    %c0_i32_0 = arith.constant 0 : i32
    %c0_i32_1 = arith.constant 0 : i32
    return %arg0, %c0_i32, %c0_i32_0 : i32, i32, i32
  }
}

</mosaic_0001>

<llo_original>
// kernel: tpu_custom_call.1
$region0: #{tpu_custom_call.1}
  #allocation0 [shape = 'u32[]', space=smem, size = 0x4, offset = 0x4, fixed_abs, tag = 'smem constant byte address 0x4 - core index']
  #allocation1 [shape = 'u32[72,128]{1,0:T(1,128)}', space=vmem, size = 0x9000, scoped, tag = 'internal scratch']
  %s0 = inlined_call_operand.vmem [shape: f32[2,128,64], index: 0, kind: input, shape index: {}]
  %s1 = inlined_call_operand.vmem [shape: f32[2,8,1], index: 1, kind: input, shape index: {}]
  %s2 = inlined_call_operand.vmem [shape: f32[8,128], index: 2, kind: input, shape index: {}]
  %s3 = inlined_call_operand.vmem [shape: f32[8,1], index: 3, kind: input, shape index: {}]
  %s4 = inlined_call_operand.vmem [shape: f32[128,512], index: 4, kind: input, shape index: {}]
  %s5 = inlined_call_operand.vmem [shape: f32[1,512], index: 5, kind: input, shape index: {}]
  %s6 = inlined_call_operand.vmem [shape: f32[1,512], index: 6, kind: input, shape index: {}]
  %s7 = inlined_call_operand.vmem [shape: f32[1,512], index: 7, kind: input, shape index: {}]
  %s8 = inlined_call_operand.vmem [shape: f32[512,8], index: 8, kind: input, shape index: {}]
  %s9 = inlined_call_operand.vmem [shape: f32[8,512], index: 9, kind: input, shape index: {}]
  %s10 = inlined_call_operand.vmem [shape: f32[512,128], index: 10, kind: input, shape index: {}]
  %s11 = inlined_call_operand.vmem [shape: f32[1,1024], index: 11, kind: input, shape index: {}]
  %s12 = inlined_call_operand.vmem [shape: f32[1,1024], index: 12, kind: input, shape index: {}]
  %s13 = inlined_call_operand.vmem [shape: f32[1,1024], index: 13, kind: input, shape index: {}]
  %s14 = inlined_call_operand.vmem [shape: f32[1024,8], index: 14, kind: input, shape index: {}]
  %s15 = inlined_call_operand.vmem [shape: f32[8,1024], index: 15, kind: input, shape index: {}]
  %s16 = inlined_call_operand.vmem [shape: f32[4,8], index: 16, kind: input, shape index: {}]
  %s17 = inlined_call_operand.vmem [shape: f32[4,1], index: 17, kind: input, shape index: {}]
  %s18 = inlined_call_operand.vmem [shape: f32[8,4], index: 18, kind: input, shape index: {}]
  %s19 = inlined_call_operand.vmem [shape: f32[8,1], index: 19, kind: input, shape index: {}]
  %s20 = inlined_call_operand.vmem [shape: f32[2,128,8], index: 20, kind: output, shape index: {}]
  %s21 = sld [smem:[#allocation0]]
  $region113: #{tpu_custom_call.1} parent=0
    _
  %s23 = ssub.s32 1, %s21
  %s24 = scalar_select 0, %s23, %s21
  loop: start=0, step=1, limit=4
  $region2: #{tpu_custom_call.1} parent=0 // loop_pre_header
    _
  $region3: #{tpu_custom_call.1} parent=0 // loop_header
    %s26 = sphi 0, %s30
    %p27 = scmp.ge.s32.totalorder %s26, 4
    %s36 = sphi 0, %s38
    %s39 = sphi 0, %s36
    %s40 = sphi 0, %s39
    %s56 = sphi 0, %s40
    %s62 = sphi 0, %s64
    %s65 = sphi 0, %s62
    %s66 = sphi 0, %s65
    %s82 = sphi 0, %s66
    %s86 = sphi 0, %s86
    %s88 = sphi 0, %s86
    %s89 = sphi 0, %s88
    %s103 = sphi 0, %s89
    %s107 = sphi 0, %s107
    %s109 = sphi 0, %s107
    %s110 = sphi 0, %s109
    %s124 = sphi 0, %s110
    %s128 = sphi 0, %s128
    %s130 = sphi 0, %s128
    %s131 = sphi 0, %s130
    %s145 = sphi 0, %s131
    %s149 = sphi 0, %s149
    %s151 = sphi 0, %s149
    %s152 = sphi 0, %s151
    %s166 = sphi 0, %s152
    %s170 = sphi 0, %s170
    %s172 = sphi 0, %s170
    %s173 = sphi 0, %s172
    %s187 = sphi 0, %s173
    %s191 = sphi 0, %s191
    %s193 = sphi 0, %s191
    %s194 = sphi 0, %s193
    %s208 = sphi 0, %s194
    %s212 = sphi 0, %s212
    %s214 = sphi 0, %s212
    %s215 = sphi 0, %s214
    %s229 = sphi 0, %s215
    %s233 = sphi 0, %s233
    %s235 = sphi 0, %s233
    %s236 = sphi 0, %s235
    %s250 = sphi 0, %s236
    %s254 = sphi 0, %s254
    %s256 = sphi 0, %s254
    %s257 = sphi 0, %s256
    %s271 = sphi 0, %s257
    %s275 = sphi 0, %s275
    %s277 = sphi 0, %s275
    %s278 = sphi 0, %s277
    %s292 = sphi 0, %s278
    %s296 = sphi 0, %s296
    %s298 = sphi 0, %s296
    %s299 = sphi 0, %s298
    %s313 = sphi 0, %s299
    %s317 = sphi 0, %s317
    %s319 = sphi 0, %s317
    %s320 = sphi 0, %s319
    %s334 = sphi 0, %s320
    %s338 = sphi 0, %s338
    %s340 = sphi 0, %s338
    %s341 = sphi 0, %s340
    %s355 = sphi 0, %s341
    %s359 = sphi 0, %s359
    %s361 = sphi 0, %s359
    %s362 = sphi 0, %s361
    %s376 = sphi 0, %s362
    %s380 = sphi 0, %s380
    %s382 = sphi 0, %s380
    %s383 = sphi 0, %s382
    %s397 = sphi 0, %s383
    %s401 = sphi 0, %s401
    %s403 = sphi 0, %s401
    %s404 = sphi 0, %s403
    %s418 = sphi 0, %s404
    %s422 = sphi 0, %s422
    %s424 = sphi 0, %s422
    %s425 = sphi 0, %s424
    %s439 = sphi 0, %s425
    %s443 = sphi 0, %s443
    %s445 = sphi 0, %s443
    %s446 = sphi 0, %s445
    %s460 = sphi 0, %s446
    %s466 = sphi 0, %s468
    %s469 = sphi 0, %s466
    %s470 = sphi 0, %s469
    %s486 = sphi 0, %s470
  $region4: #{tpu_custom_call.1} parent=0 // loop_header_branch
    %29 = sbr.rel (%p27) target = $region8
  $region5: #{tpu_custom_call.1} parent=0 // loop_body
    %s31 = ssub.s32 %s26, 1
    %s32 = ssub.s32 %s26, 2
    %s33 = sadd.s32 %s26, 1
    %s34 = ssub.s32 %s26, %s33
    %p35 = scmp.eq.s32.totalorder %s34, 0
    %s37 = sadd.s32 %s36, 1
    %s38 = scalar_select %p35, %s36, %s37
    %p41 = pneg %p35
    %p42 = scmp.eq.s32.totalorder %s26, 1
    %p43 = por %p41, %p42
    %p44 = scmp.ne.s32.totalorder %s36, %s39
    %p45 = scmp.eq.s32.totalorder %s26, 0
    %p46 = por %p44, %p45
    %p47 = scmp.ne.s32.totalorder %s36, %s39
    %p48 = scmp.eq.s32.totalorder %s31, 1
    %p49 = por %p47, %p48
    %p50 = scmp.ne.s32.totalorder %s39, %s40
    %p51 = scmp.eq.s32.totalorder %s31, 0
    %p52 = por %p50, %p51
    %p53 = scmp.ne.s32.totalorder %s39, %s40
    %p54 = scmp.eq.s32.totalorder %s32, 1
    %p55 = por %p53, %p54
    %p57 = scmp.ne.s32.totalorder %s40, %s56
    %p58 = scmp.eq.s32.totalorder %s32, 0
    %p59 = por %p57, %p58
    %s60 = ssub.s32 %s26, %s33
    %p61 = scmp.eq.s32.totalorder %s60, 0
    %s63 = sadd.s32 %s62, 1
    %s64 = scalar_select %p61, %s62, %s63
    %p67 = pneg %p61
    %p68 = scmp.eq.s32.totalorder %s26, 1
    %p69 = por %p67, %p68
    %p70 = scmp.ne.s32.totalorder %s62, %s65
    %p71 = scmp.eq.s32.totalorder %s26, 0
    %p72 = por %p70, %p71
    %p73 = scmp.ne.s32.totalorder %s62, %s65
    %p74 = scmp.eq.s32.totalorder %s31, 1
    %p75 = por %p73, %p74
    %p76 = scmp.ne.s32.totalorder %s65, %s66
    %p77 = scmp.eq.s32.totalorder %s31, 0
    %p78 = por %p76, %p77
    %p79 = scmp.ne.s32.totalorder %s65, %s66
    %p80 = scmp.eq.s32.totalorder %s32, 1
    %p81 = por %p79, %p80
    %p83 = scmp.ne.s32.totalorder %s66, %s82
    %p84 = scmp.eq.s32.totalorder %s32, 0
    %p85 = por %p83, %p84
    %s87 = sadd.s32 %s86, 1
    %p90 = scmp.eq.s32.totalorder %s26, 1
    %p91 = scmp.ne.s32.totalorder %s86, %s88
    %p92 = scmp.eq.s32.totalorder %s26, 0
    %p93 = por %p91, %p92
    %p94 = scmp.ne.s32.totalorder %s86, %s88
    %p95 = scmp.eq.s32.totalorder %s31, 1
    %p96 = por %p94, %p95
    %p97 = scmp.ne.s32.totalorder %s88, %s89
    %p98 = scmp.eq.s32.totalorder %s31, 0
    %p99 = por %p97, %p98
    %p100 = scmp.ne.s32.totalorder %s88, %s89
    %p101 = scmp.eq.s32.totalorder %s32, 1
    %p102 = por %p100, %p101
    %p104 = scmp.ne.s32.totalorder %s89, %s103
    %p105 = scmp.eq.s32.totalorder %s32, 0
    %p106 = por %p104, %p105
    %s108 = sadd.s32 %s107, 1
    %p111 = scmp.eq.s32.totalorder %s26, 1
    %p112 = scmp.ne.s32.totalorder %s107, %s109
    %p113 = scmp.eq.s32.totalorder %s26, 0
    %p114 = por %p112, %p113
    %p115 = scmp.ne.s32.totalorder %s107, %s109
    %p116 = scmp.eq.s32.totalorder %s31, 1
    %p117 = por %p115, %p116
    %p118 = scmp.ne.s32.totalorder %s109, %s110
    %p119 = scmp.eq.s32.totalorder %s31, 0
    %p120 = por %p118, %p119
    %p121 = scmp.ne.s32.totalorder %s109, %s110
    %p122 = scmp.eq.s32.totalorder %s32, 1
    %p123 = por %p121, %p122
    %p125 = scmp.ne.s32.totalorder %s110, %s124
    %p126 = scmp.eq.s32.totalorder %s32, 0
    %p127 = por %p125, %p126
    %s129 = sadd.s32 %s128, 1
    %p132 = scmp.eq.s32.totalorder %s26, 1
    %p133 = scmp.ne.s32.totalorder %s128, %s130
    %p134 = scmp.eq.s32.totalorder %s26, 0
    %p135 = por %p133, %p134
    %p136 = scmp.ne.s32.totalorder %s128, %s130
    %p137 = scmp.eq.s32.totalorder %s31, 1
    %p138 = por %p136, %p137
    %p139 = scmp.ne.s32.totalorder %s130, %s131
    %p140 = scmp.eq.s32.totalorder %s31, 0
    %p141 = por %p139, %p140
    %p142 = scmp.ne.s32.totalorder %s130, %s131
    %p143 = scmp.eq.s32.totalorder %s32, 1
    %p144 = por %p142, %p143
    %p146 = scmp.ne.s32.totalorder %s131, %s145
    %p147 = scmp.eq.s32.totalorder %s32, 0
    %p148 = por %p146, %p147
    %s150 = sadd.s32 %s149, 1
    %p153 = scmp.eq.s32.totalorder %s26, 1
    %p154 = scmp.ne.s32.totalorder %s149, %s151
    %p155 = scmp.eq.s32.totalorder %s26, 0
    %p156 = por %p154, %p155
    %p157 = scmp.ne.s32.totalorder %s149, %s151
    %p158 = scmp.eq.s32.totalorder %s31, 1
    %p159 = por %p157, %p158
    %p160 = scmp.ne.s32.totalorder %s151, %s152
    %p161 = scmp.eq.s32.totalorder %s31, 0
    %p162 = por %p160, %p161
    %p163 = scmp.ne.s32.totalorder %s151, %s152
    %p164 = scmp.eq.s32.totalorder %s32, 1
    %p165 = por %p163, %p164
    %p167 = scmp.ne.s32.totalorder %s152, %s166
    %p168 = scmp.eq.s32.totalorder %s32, 0
    %p169 = por %p167, %p168
    %s171 = sadd.s32 %s170, 1
    %p174 = scmp.eq.s32.totalorder %s26, 1
    %p175 = scmp.ne.s32.totalorder %s170, %s172
    %p176 = scmp.eq.s32.totalorder %s26, 0
    %p177 = por %p175, %p176
    %p178 = scmp.ne.s32.totalorder %s170, %s172
    %p179 = scmp.eq.s32.totalorder %s31, 1
    %p180 = por %p178, %p179
    %p181 = scmp.ne.s32.totalorder %s172, %s173
    %p182 = scmp.eq.s32.totalorder %s31, 0
    %p183 = por %p181, %p182
    %p184 = scmp.ne.s32.totalorder %s172, %s173
    %p185 = scmp.eq.s32.totalorder %s32, 1
    %p186 = por %p184, %p185
    %p188 = scmp.ne.s32.totalorder %s173, %s187
    %p189 = scmp.eq.s32.totalorder %s32, 0
    %p190 = por %p188, %p189
    %s192 = sadd.s32 %s191, 1
    %p195 = scmp.eq.s32.totalorder %s26, 1
    %p196 = scmp.ne.s32.totalorder %s191, %s193
    %p197 = scmp.eq.s32.totalorder %s26, 0
    %p198 = por %p196, %p197
    %p199 = scmp.ne.s32.totalorder %s191, %s193
    %p200 = scmp.eq.s32.totalorder %s31, 1
    %p201 = por %p199, %p200
    %p202 = scmp.ne.s32.totalorder %s193, %s194
    %p203 = scmp.eq.s32.totalorder %s31, 0
    %p204 = por %p202, %p203
    %p205 = scmp.ne.s32.totalorder %s193, %s194
    %p206 = scmp.eq.s32.totalorder %s32, 1
    %p207 = por %p205, %p206
    %p209 = scmp.ne.s32.totalorder %s194, %s208
    %p210 = scmp.eq.s32.totalorder %s32, 0
    %p211 = por %p209, %p210
    %s213 = sadd.s32 %s212, 1
    %p216 = scmp.eq.s32.totalorder %s26, 1
    %p217 = scmp.ne.s32.totalorder %s212, %s214
    %p218 = scmp.eq.s32.totalorder %s26, 0
    %p219 = por %p217, %p218
    %p220 = scmp.ne.s32.totalorder %s212, %s214
    %p221 = scmp.eq.s32.totalorder %s31, 1
    %p222 = por %p220, %p221
    %p223 = scmp.ne.s32.totalorder %s214, %s215
    %p224 = scmp.eq.s32.totalorder %s31, 0
    %p225 = por %p223, %p224
    %p226 = scmp.ne.s32.totalorder %s214, %s215
    %p227 = scmp.eq.s32.totalorder %s32, 1
    %p228 = por %p226, %p227
    %p230 = scmp.ne.s32.totalorder %s215, %s229
    %p231 = scmp.eq.s32.totalorder %s32, 0
    %p232 = por %p230, %p231
    %s234 = sadd.s32 %s233, 1
    %p237 = scmp.eq.s32.totalorder %s26, 1
    %p238 = scmp.ne.s32.totalorder %s233, %s235
    %p239 = scmp.eq.s32.totalorder %s26, 0
    %p240 = por %p238, %p239
    %p241 = scmp.ne.s32.totalorder %s233, %s235
    %p242 = scmp.eq.s32.totalorder %s31, 1
    %p243 = por %p241, %p242
    %p244 = scmp.ne.s32.totalorder %s235, %s236
    %p245 = scmp.eq.s32.totalorder %s31, 0
    %p246 = por %p244, %p245
    %p247 = scmp.ne.s32.totalorder %s235, %s236
    %p248 = scmp.eq.s32.totalorder %s32, 1
    %p249 = por %p247, %p248
    %p251 = scmp.ne.s32.totalorder %s236, %s250
    %p252 = scmp.eq.s32.totalorder %s32, 0
    %p253 = por %p251, %p252
    %s255 = sadd.s32 %s254, 1
    %p258 = scmp.eq.s32.totalorder %s26, 1
    %p259 = scmp.ne.s32.totalorder %s254, %s256
    %p260 = scmp.eq.s32.totalorder %s26, 0
    %p261 = por %p259, %p260
    %p262 = scmp.ne.s32.totalorder %s254, %s256
    %p263 = scmp.eq.s32.totalorder %s31, 1
    %p264 = por %p262, %p263
    %p265 = scmp.ne.s32.totalorder %s256, %s257
    %p266 = scmp.eq.s32.totalorder %s31, 0
    %p267 = por %p265, %p266
    %p268 = scmp.ne.s32.totalorder %s256, %s257
    %p269 = scmp.eq.s32.totalorder %s32, 1
    %p270 = por %p268, %p269
    %p272 = scmp.ne.s32.totalorder %s257, %s271
    %p273 = scmp.eq.s32.totalorder %s32, 0
    %p274 = por %p272, %p273
    %s276 = sadd.s32 %s275, 1
    %p279 = scmp.eq.s32.totalorder %s26, 1
    %p280 = scmp.ne.s32.totalorder %s275, %s277
    %p281 = scmp.eq.s32.totalorder %s26, 0
    %p282 = por %p280, %p281
    %p283 = scmp.ne.s32.totalorder %s275, %s277
    %p284 = scmp.eq.s32.totalorder %s31, 1
    %p285 = por %p283, %p284
    %p286 = scmp.ne.s32.totalorder %s277, %s278
    %p287 = scmp.eq.s32.totalorder %s31, 0
    %p288 = por %p286, %p287
    %p289 = scmp.ne.s32.totalorder %s277, %s278
    %p290 = scmp.eq.s32.totalorder %s32, 1
    %p291 = por %p289, %p290
    %p293 = scmp.ne.s32.totalorder %s278, %s292
    %p294 = scmp.eq.s32.totalorder %s32, 0
    %p295 = por %p293, %p294
    %s297 = sadd.s32 %s296, 1
    %p300 = scmp.eq.s32.totalorder %s26, 1
    %p301 = scmp.ne.s32.totalorder %s296, %s298
    %p302 = scmp.eq.s32.totalorder %s26, 0
    %p303 = por %p301, %p302
    %p304 = scmp.ne.s32.totalorder %s296, %s298
    %p305 = scmp.eq.s32.totalorder %s31, 1
    %p306 = por %p304, %p305
    %p307 = scmp.ne.s32.totalorder %s298, %s299
    %p308 = scmp.eq.s32.totalorder %s31, 0
    %p309 = por %p307, %p308
    %p310 = scmp.ne.s32.totalorder %s298, %s299
    %p311 = scmp.eq.s32.totalorder %s32, 1
    %p312 = por %p310, %p311
    %p314 = scmp.ne.s32.totalorder %s299, %s313
    %p315 = scmp.eq.s32.totalorder %s32, 0
    %p316 = por %p314, %p315
    %s318 = sadd.s32 %s317, 1
    %p321 = scmp.eq.s32.totalorder %s26, 1
    %p322 = scmp.ne.s32.totalorder %s317, %s319
    %p323 = scmp.eq.s32.totalorder %s26, 0
    %p324 = por %p322, %p323
    %p325 = scmp.ne.s32.totalorder %s317, %s319
    %p326 = scmp.eq.s32.totalorder %s31, 1
    %p327 = por %p325, %p326
    %p328 = scmp.ne.s32.totalorder %s319, %s320
    %p329 = scmp.eq.s32.totalorder %s31, 0
    %p330 = por %p328, %p329
    %p331 = scmp.ne.s32.totalorder %s319, %s320
    %p332 = scmp.eq.s32.totalorder %s32, 1
    %p333 = por %p331, %p332
    %p335 = scmp.ne.s32.totalorder %s320, %s334
    %p336 = scmp.eq.s32.totalorder %s32, 0
    %p337 = por %p335, %p336
    %s339 = sadd.s32 %s338, 1
    %p342 = scmp.eq.s32.totalorder %s26, 1
    %p343 = scmp.ne.s32.totalorder %s338, %s340
    %p344 = scmp.eq.s32.totalorder %s26, 0
    %p345 = por %p343, %p344
    %p346 = scmp.ne.s32.totalorder %s338, %s340
    %p347 = scmp.eq.s32.totalorder %s31, 1
    %p348 = por %p346, %p347
    %p349 = scmp.ne.s32.totalorder %s340, %s341
    %p350 = scmp.eq.s32.totalorder %s31, 0
    %p351 = por %p349, %p350
    %p352 = scmp.ne.s32.totalorder %s340, %s341
    %p353 = scmp.eq.s32.totalorder %s32, 1
    %p354 = por %p352, %p353
    %p356 = scmp.ne.s32.totalorder %s341, %s355
    %p357 = scmp.eq.s32.totalorder %s32, 0
    %p358 = por %p356, %p357
    %s360 = sadd.s32 %s359, 1
    %p363 = scmp.eq.s32.totalorder %s26, 1
    %p364 = scmp.ne.s32.totalorder %s359, %s361
    %p365 = scmp.eq.s32.totalorder %s26, 0
    %p366 = por %p364, %p365
    %p367 = scmp.ne.s32.totalorder %s359, %s361
    %p368 = scmp.eq.s32.totalorder %s31, 1
    %p369 = por %p367, %p368
    %p370 = scmp.ne.s32.totalorder %s361, %s362
    %p371 = scmp.eq.s32.totalorder %s31, 0
    %p372 = por %p370, %p371
    %p373 = scmp.ne.s32.totalorder %s361, %s362
    %p374 = scmp.eq.s32.totalorder %s32, 1
    %p375 = por %p373, %p374
    %p377 = scmp.ne.s32.totalorder %s362, %s376
    %p378 = scmp.eq.s32.totalorder %s32, 0
    %p379 = por %p377, %p378
    %s381 = sadd.s32 %s380, 1
    %p384 = scmp.eq.s32.totalorder %s26, 1
    %p385 = scmp.ne.s32.totalorder %s380, %s382
    %p386 = scmp.eq.s32.totalorder %s26, 0
    %p387 = por %p385, %p386
    %p388 = scmp.ne.s32.totalorder %s380, %s382
    %p389 = scmp.eq.s32.totalorder %s31, 1
    %p390 = por %p388, %p389
    %p391 = scmp.ne.s32.totalorder %s382, %s383
    %p392 = scmp.eq.s32.totalorder %s31, 0
    %p393 = por %p391, %p392
    %p394 = scmp.ne.s32.totalorder %s382, %s383
    %p395 = scmp.eq.s32.totalorder %s32, 1
    %p396 = por %p394, %p395
    %p398 = scmp.ne.s32.totalorder %s383, %s397
    %p399 = scmp.eq.s32.totalorder %s32, 0
    %p400 = por %p398, %p399
    %s402 = sadd.s32 %s401, 1
    %p405 = scmp.eq.s32.totalorder %s26, 1
    %p406 = scmp.ne.s32.totalorder %s401, %s403
    %p407 = scmp.eq.s32.totalorder %s26, 0
    %p408 = por %p406, %p407
    %p409 = scmp.ne.s32.totalorder %s401, %s403
    %p410 = scmp.eq.s32.totalorder %s31, 1
    %p411 = por %p409, %p410
    %p412 = scmp.ne.s32.totalorder %s403, %s404
    %p413 = scmp.eq.s32.totalorder %s31, 0
    %p414 = por %p412, %p413
    %p415 = scmp.ne.s32.totalorder %s403, %s404
    %p416 = scmp.eq.s32.totalorder %s32, 1
    %p417 = por %p415, %p416
    %p419 = scmp.ne.s32.totalorder %s404, %s418
    %p420 = scmp.eq.s32.totalorder %s32, 0
    %p421 = por %p419, %p420
    %s423 = sadd.s32 %s422, 1
    %p426 = scmp.eq.s32.totalorder %s26, 1
    %p427 = scmp.ne.s32.totalorder %s422, %s424
    %p428 = scmp.eq.s32.totalorder %s26, 0
    %p429 = por %p427, %p428
    %p430 = scmp.ne.s32.totalorder %s422, %s424
    %p431 = scmp.eq.s32.totalorder %s31, 1
    %p432 = por %p430, %p431
    %p433 = scmp.ne.s32.totalorder %s424, %s425
    %p434 = scmp.eq.s32.totalorder %s31, 0
    %p435 = por %p433, %p434
    %p436 = scmp.ne.s32.totalorder %s424, %s425
    %p437 = scmp.eq.s32.totalorder %s32, 1
    %p438 = por %p436, %p437
    %p440 = scmp.ne.s32.totalorder %s425, %s439
    %p441 = scmp.eq.s32.totalorder %s32, 0
    %p442 = por %p440, %p441
    %s444 = sadd.s32 %s443, 1
    %p447 = scmp.eq.s32.totalorder %s26, 1
    %p448 = scmp.ne.s32.totalorder %s443, %s445
    %p449 = scmp.eq.s32.totalorder %s26, 0
    %p450 = por %p448, %p449
    %p451 = scmp.ne.s32.totalorder %s443, %s445
    %p452 = scmp.eq.s32.totalorder %s31, 1
    %p453 = por %p451, %p452
    %p454 = scmp.ne.s32.totalorder %s445, %s446
    %p455 = scmp.eq.s32.totalorder %s31, 0
    %p456 = por %p454, %p455
    %p457 = scmp.ne.s32.totalorder %s445, %s446
    %p458 = scmp.eq.s32.totalorder %s32, 1
    %p459 = por %p457, %p458
    %p461 = scmp.ne.s32.totalorder %s446, %s460
    %p462 = scmp.eq.s32.totalorder %s32, 0
    %p463 = por %p461, %p462
    %s464 = ssub.s32 %s26, %s33
    %p465 = scmp.eq.s32.totalorder %s464, 0
    %s467 = sadd.s32 %s466, 1
    %s468 = scalar_select %p465, %s466, %s467
    %p471 = pneg %p465
    %p472 = scmp.eq.s32.totalorder %s26, 1
    %p473 = por %p471, %p472
    %p474 = scmp.ne.s32.totalorder %s466, %s469
    %p475 = scmp.eq.s32.totalorder %s26, 0
    %p476 = por %p474, %p475
    %p477 = scmp.ne.s32.totalorder %s466, %s469
    %p478 = scmp.eq.s32.totalorder %s31, 1
    %p479 = por %p477, %p478
    %p480 = scmp.ne.s32.totalorder %s469, %s470
    %p481 = scmp.eq.s32.totalorder %s31, 0
    %p482 = por %p480, %p481
    %p483 = scmp.ne.s32.totalorder %s469, %s470
    %p484 = scmp.eq.s32.totalorder %s32, 1
    %p485 = por %p483, %p484
    %p487 = scmp.ne.s32.totalorder %s470, %s486
    %p488 = scmp.eq.s32.totalorder %s32, 0
    %p489 = por %p487, %p488
    %p490 = scmp.le.s32.totalorder 1, %s26
    %p491 = scmp.lt.s32.totalorder %s26, 3
    %p492 = pnand %p490, %p491
    %p493 = pneg %p492
    // Predicated region
    $region9: #{tpu_custom_call.1} parent=5 // pred_check
      _
    $region10: #{tpu_custom_call.1} parent=5 // pred_check_branch
      %495 = sbr.rel (%p492) target = $region12
    $region11: #{tpu_custom_call.1} parent=5 // pred_region
      %s496 = ssub.s32 %s26, 1
      // Predicated region
      $region13: #{tpu_custom_call.1} parent=11 // pred_check
        %p497 = pneg %p99
      $region14: #{tpu_custom_call.1} parent=11 // pred_check_branch
        %499 = sbr.rel (%p497) target = $region16
      $region15: #{tpu_custom_call.1} parent=11 // pred_region
        _
      $region16: #{tpu_custom_call.1} parent=11 // pred_fallthru
        _
      // Predicated region
      $region17: #{tpu_custom_call.1} parent=11 // pred_check
        %p500 = pneg %p120
      $region18: #{tpu_custom_call.1} parent=11 // pred_check_branch
        %502 = sbr.rel (%p500) target = $region20
      $region19: #{tpu_custom_call.1} parent=11 // pred_region
        _
      $region20: #{tpu_custom_call.1} parent=11 // pred_fallthru
        _
      // Predicated region
      $region21: #{tpu_custom_call.1} parent=11 // pred_check
        %p503 = pneg %p141
      $region22: #{tpu_custom_call.1} parent=11 // pred_check_branch
        %505 = sbr.rel (%p503) target = $region24
      $region23: #{tpu_custom_call.1} parent=11 // pred_region
        _
      $region24: #{tpu_custom_call.1} parent=11 // pred_fallthru
        _
      // Predicated region
      $region25: #{tpu_custom_call.1} parent=11 // pred_check
        %p506 = pneg %p162
      $region26: #{tpu_custom_call.1} parent=11 // pred_check_branch
        %508 = sbr.rel (%p506) target = $region28
      $region27: #{tpu_custom_call.1} parent=11 // pred_region
        _
      $region28: #{tpu_custom_call.1} parent=11 // pred_fallthru
        _
      // Predicated region
      $region29: #{tpu_custom_call.1} parent=11 // pred_check
        %p509 = pneg %p183
      $region30: #{tpu_custom_call.1} parent=11 // pred_check_branch
        %511 = sbr.rel (%p509) target = $region32
      $region31: #{tpu_custom_call.1} parent=11 // pred_region
        _
      $region32: #{tpu_custom_call.1} parent=11 // pred_fallthru
        _
      // Predicated region
      $region33: #{tpu_custom_call.1} parent=11 // pred_check
        %p512 = pneg %p204
      $region34: #{tpu_custom_call.1} parent=11 // pred_check_branch
        %514 = sbr.rel (%p512) target = $region36
      $region35: #{tpu_custom_call.1} parent=11 // pred_region
        _
      $region36: #{tpu_custom_call.1} parent=11 // pred_fallthru
        _
      // Predicated region
      $region37: #{tpu_custom_call.1} parent=11 // pred_check
        %p515 = pneg %p225
      $region38: #{tpu_custom_call.1} parent=11 // pred_check_branch
        %517 = sbr.rel (%p515) target = $region40
      $region39: #{tpu_custom_call.1} parent=11 // pred_region
        _
      $region40: #{tpu_custom_call.1} parent=11 // pred_fallthru
        _
      // Predicated region
      $region41: #{tpu_custom_call.1} parent=11 // pred_check
        %p518 = pneg %p246
      $region42: #{tpu_custom_call.1} parent=11 // pred_check_branch
        %520 = sbr.rel (%p518) target = $region44
      $region43: #{tpu_custom_call.1} parent=11 // pred_region
        _
      $region44: #{tpu_custom_call.1} parent=11 // pred_fallthru
        _
      // Predicated region
      $region45: #{tpu_custom_call.1} parent=11 // pred_check
        %p521 = pneg %p267
      $region46: #{tpu_custom_call.1} parent=11 // pred_check_branch
        %523 = sbr.rel (%p521) target = $region48
      $region47: #{tpu_custom_call.1} parent=11 // pred_region
        _
      $region48: #{tpu_custom_call.1} parent=11 // pred_fallthru
        _
      // Predicated region
      $region49: #{tpu_custom_call.1} parent=11 // pred_check
        %p524 = pneg %p288
      $region50: #{tpu_custom_call.1} parent=11 // pred_check_branch
        %526 = sbr.rel (%p524) target = $region52
      $region51: #{tpu_custom_call.1} parent=11 // pred_region
        _
      $region52: #{tpu_custom_call.1} parent=11 // pred_fallthru
        _
      // Predicated region
      $region53: #{tpu_custom_call.1} parent=11 // pred_check
        %p527 = pneg %p309
      $region54: #{tpu_custom_call.1} parent=11 // pred_check_branch
        %529 = sbr.rel (%p527) target = $region56
      $region55: #{tpu_custom_call.1} parent=11 // pred_region
        _
      $region56: #{tpu_custom_call.1} parent=11 // pred_fallthru
        _
      // Predicated region
      $region57: #{tpu_custom_call.1} parent=11 // pred_check
        %p530 = pneg %p330
      $region58: #{tpu_custom_call.1} parent=11 // pred_check_branch
        %532 = sbr.rel (%p530) target = $region60
      $region59: #{tpu_custom_call.1} parent=11 // pred_region
        _
      $region60: #{tpu_custom_call.1} parent=11 // pred_fallthru
        _
      // Predicated region
      $region61: #{tpu_custom_call.1} parent=11 // pred_check
        %p533 = pneg %p351
      $region62: #{tpu_custom_call.1} parent=11 // pred_check_branch
        %535 = sbr.rel (%p533) target = $region64
      $region63: #{tpu_custom_call.1} parent=11 // pred_region
        _
      $region64: #{tpu_custom_call.1} parent=11 // pred_fallthru
        _
      // Predicated region
      $region65: #{tpu_custom_call.1} parent=11 // pred_check
        %p536 = pneg %p372
      $region66: #{tpu_custom_call.1} parent=11 // pred_check_branch
        %538 = sbr.rel (%p536) target = $region68
      $region67: #{tpu_custom_call.1} parent=11 // pred_region
        _
      $region68: #{tpu_custom_call.1} parent=11 // pred_fallthru
        _
      // Predicated region
      $region69: #{tpu_custom_call.1} parent=11 // pred_check
        %p539 = pneg %p393
      $region70: #{tpu_custom_call.1} parent=11 // pred_check_branch
        %541 = sbr.rel (%p539) target = $region72
      $region71: #{tpu_custom_call.1} parent=11 // pred_region
        _
      $region72: #{tpu_custom_call.1} parent=11 // pred_fallthru
        _
      // Predicated region
      $region73: #{tpu_custom_call.1} parent=11 // pred_check
        %p542 = pneg %p414
      $region74: #{tpu_custom_call.1} parent=11 // pred_check_branch
        %544 = sbr.rel (%p542) target = $region76
      $region75: #{tpu_custom_call.1} parent=11 // pred_region
        _
      $region76: #{tpu_custom_call.1} parent=11 // pred_fallthru
        _
      // Predicated region
      $region77: #{tpu_custom_call.1} parent=11 // pred_check
        %p545 = pneg %p435
      $region78: #{tpu_custom_call.1} parent=11 // pred_check_branch
        %547 = sbr.rel (%p545) target = $region80
      $region79: #{tpu_custom_call.1} parent=11 // pred_region
        _
      $region80: #{tpu_custom_call.1} parent=11 // pred_fallthru
        _
      // Predicated region
      $region81: #{tpu_custom_call.1} parent=11 // pred_check
        %p548 = pneg %p456
      $region82: #{tpu_custom_call.1} parent=11 // pred_check_branch
        %550 = sbr.rel (%p548) target = $region84
      $region83: #{tpu_custom_call.1} parent=11 // pred_region
        _
      $region84: #{tpu_custom_call.1} parent=11 // pred_fallthru
        _
    $region12: #{tpu_custom_call.1} parent=5 // pred_fallthru
      _
    %p551 = scmp.lt.s32.totalorder %s26, 2
    // Predicated region
    $region85: #{tpu_custom_call.1} parent=5 // pred_check
      %p552 = pneg %p551
    $region86: #{tpu_custom_call.1} parent=5 // pred_check_branch
      %554 = sbr.rel (%p552) target = $region88
    $region87: #{tpu_custom_call.1} parent=5 // pred_region
      // Predicated region
      $region89: #{tpu_custom_call.1} parent=87 // pred_check
        %p555 = pneg %p46
      $region90: #{tpu_custom_call.1} parent=87 // pred_check_branch
        %557 = sbr.rel (%p555) target = $region92
      $region91: #{tpu_custom_call.1} parent=87 // pred_region
        %p558 = scmp.lt.s32.totalorder %s26, 1
        %s559 = scalar_select %p558, %s26, 1
        %s560 = smul.addr %s559, 16
        %s561 = smul.addr %s560, 8
        %s562 = scalar_lea.vmem %s0, %s561
      $region92: #{tpu_custom_call.1} parent=87 // pred_fallthru
        _
      // Predicated region
      $region93: #{tpu_custom_call.1} parent=87 // pred_check
        %p563 = pneg %p72
      $region94: #{tpu_custom_call.1} parent=87 // pred_check_branch
        %565 = sbr.rel (%p563) target = $region96
      $region95: #{tpu_custom_call.1} parent=87 // pred_region
        %p566 = scmp.lt.s32.totalorder %s26, 1
        %s567 = scalar_select %p566, %s26, 1
        %s568 = smul.addr %s567, 8
        %s569 = scalar_lea.vmem %s1, %s568
      $region96: #{tpu_custom_call.1} parent=87 // pred_fallthru
        _
    $region88: #{tpu_custom_call.1} parent=5 // pred_fallthru
      _
    %p570 = scmp.le.s32.totalorder 1, %s26
    %p571 = scmp.lt.s32.totalorder %s26, 3
    %p572 = pnand %p570, %p571
    %p573 = pneg %p572
    // Predicated region
    $region97: #{tpu_custom_call.1} parent=5 // pred_check
      _
    $region98: #{tpu_custom_call.1} parent=5 // pred_check_branch
      %575 = sbr.rel (%p572) target = $region100
    $region99: #{tpu_custom_call.1} parent=5 // pred_region
      %s576 = ssub.s32 %s26, 1
      %p577 = scmp.lt.s32.totalorder %s31, 1
      %s578 = scalar_select %p577, %s31, 1
      %s579 = smul.addr %s578, 16
      %s580 = smul.addr %s579, 8
      %s581 = scalar_lea.vmem %s0, %s580
      %p582 = pneg %p52
      %p583 = pneg %p49
      %p584 = scmp.lt.s32.totalorder %s31, 1
      %s585 = scalar_select %p584, %s31, 1
      %s586 = smul.addr %s585, 8
      %s587 = scalar_lea.vmem %s1, %s586
      %p588 = pneg %p78
      %p589 = pneg %p75
      %p590 = pneg %p99
      %p591 = pneg %p96
      %p592 = pneg %p120
      %p593 = pneg %p117
      %p594 = pneg %p141
      %p595 = pneg %p138
      %p596 = pneg %p162
      %p597 = pneg %p159
      %p598 = pneg %p183
      %p599 = pneg %p180
      %p600 = pneg %p204
      %p601 = pneg %p201
      %p602 = pneg %p225
      %p603 = pneg %p222
      %p604 = pneg %p246
      %p605 = pneg %p243
      %p606 = pneg %p267
      %p607 = pneg %p264
      %p608 = pneg %p288
      %p609 = pneg %p285
      %p610 = pneg %p309
      %p611 = pneg %p306
      %p612 = pneg %p330
      %p613 = pneg %p327
      %p614 = pneg %p351
      %p615 = pneg %p348
      %p616 = pneg %p372
      %p617 = pneg %p369
      %p618 = pneg %p393
      %p619 = pneg %p390
      %p620 = pneg %p414
      %p621 = pneg %p411
      %p622 = pneg %p435
      %p623 = pneg %p432
      %p624 = pneg %p456
      %p625 = pneg %p453
      %p626 = pneg %p482
      %p627 = pneg %p479
      %p628 = scmp.lt.s32.totalorder %s31, 1
      %s629 = scalar_select %p628, %s31, 1
      %s630 = smul.addr %s629, 16
      %s631 = smul.addr %s630, 8
      %s632 = scalar_lea.vmem %s20, %s631
      %p633 = scmp.lt.s32.totalorder %s31, 1
      %s634 = scalar_select %p633, %s31, 1
      %s635 = smul.addr %s634, 16
      %s636 = smul.addr %s635, 8
      %s637 = scalar_lea.vmem %s0, %s636
      %p638 = scmp.lt.s32.totalorder %s31, 1
      %s639 = scalar_select %p638, %s31, 1
      %s640 = smul.addr %s639, 8
      %s641 = scalar_lea.vmem %s1, %s640
      %p642 = scmp.lt.s32.totalorder %s31, 1
      %s643 = scalar_select %p642, %s31, 1
      %s644 = smul.addr %s643, 16
      %s645 = smul.addr %s644, 8
      %s646 = scalar_lea.vmem %s20, %s645
      %v647 = vld [vmem:[%s637] sm:$0xff]
      %v648 = vld [vmem:[%s637 + $0x8] sm:$0xff]
      %v649 = vld [vmem:[%s637 + $0x10] sm:$0xff]
      %v650 = vld [vmem:[%s637 + $0x18] sm:$0xff]
      %v651 = vld [vmem:[%s637 + $0x20] sm:$0xff]
      %v652 = vld [vmem:[%s637 + $0x28] sm:$0xff]
      %v653 = vld [vmem:[%s637 + $0x30] sm:$0xff]
      %v654 = vld [vmem:[%s637 + $0x38] sm:$0xff]
      %v655 = vld [vmem:[%s637 + $0x40] sm:$0xff]
      %v656 = vld [vmem:[%s637 + $0x48] sm:$0xff]
      %v657 = vld [vmem:[%s637 + $0x50] sm:$0xff]
      %v658 = vld [vmem:[%s637 + $0x58] sm:$0xff]
      %v659 = vld [vmem:[%s637 + $0x60] sm:$0xff]
      %v660 = vld [vmem:[%s637 + $0x68] sm:$0xff]
      %v661 = vld [vmem:[%s637 + $0x70] sm:$0xff]
      %v662 = vld [vmem:[%s637 + $0x78] sm:$0xff]
      %vm663 = vcmask 523264
      %v664 = vsel %vm663, %v647, 0.0
      %665 = vadd.xlane.f32.xlu0 %v664
      %v666 = vpop.xlane.xlu0 %665
      %v667 = vsel %vm663, %v648, 0.0
      %668 = vadd.xlane.f32.xlu0 %v667
      %v669 = vpop.xlane.xlu0 %668
      %v670 = vsel %vm663, %v649, 0.0
      %671 = vadd.xlane.f32.xlu0 %v670
      %v672 = vpop.xlane.xlu0 %671
      %v673 = vsel %vm663, %v650, 0.0
      %674 = vadd.xlane.f32.xlu0 %v673
      %v675 = vpop.xlane.xlu0 %674
      %v676 = vsel %vm663, %v651, 0.0
      %677 = vadd.xlane.f32.xlu0 %v676
      %v678 = vpop.xlane.xlu0 %677
      %v679 = vsel %vm663, %v652, 0.0
      %680 = vadd.xlane.f32.xlu0 %v679
      %v681 = vpop.xlane.xlu0 %680
      %v682 = vsel %vm663, %v653, 0.0
      %683 = vadd.xlane.f32.xlu0 %v682
      %v684 = vpop.xlane.xlu0 %683
      %v685 = vsel %vm663, %v654, 0.0
      %686 = vadd.xlane.f32.xlu0 %v685
      %v687 = vpop.xlane.xlu0 %686
      %v688 = vsel %vm663, %v655, 0.0
      %689 = vadd.xlane.f32.xlu0 %v688
      %v690 = vpop.xlane.xlu0 %689
      %v691 = vsel %vm663, %v656, 0.0
      %692 = vadd.xlane.f32.xlu0 %v691
      %v693 = vpop.xlane.xlu0 %692
      %v694 = vsel %vm663, %v657, 0.0
      %695 = vadd.xlane.f32.xlu0 %v694
      %v696 = vpop.xlane.xlu0 %695
      %v697 = vsel %vm663, %v658, 0.0
      %698 = vadd.xlane.f32.xlu0 %v697
      %v699 = vpop.xlane.xlu0 %698
      %v700 = vsel %vm663, %v659, 0.0
      %701 = vadd.xlane.f32.xlu0 %v700
      %v702 = vpop.xlane.xlu0 %701
      %v703 = vsel %vm663, %v660, 0.0
      %704 = vadd.xlane.f32.xlu0 %v703
      %v705 = vpop.xlane.xlu0 %704
      %v706 = vsel %vm663, %v661, 0.0
      %707 = vadd.xlane.f32.xlu0 %v706
      %v708 = vpop.xlane.xlu0 %707
      %v709 = vsel %vm663, %v662, 0.0
      %710 = vadd.xlane.f32.xlu0 %v709
      %v711 = vpop.xlane.xlu0 %710
      %v712 = vrcp.pop 64.0
      %v713 = vmul.f32 64.0, %v712
      %v714 = vsub.f32 1.0, %v713
      %v715 = vmul.f32 %v712, %v714
      %v716 = vadd.f32 %v712, %v715
      %vm717 = vweird.f32 %v712
      %v718 = vsel %vm717, %v712, %v716
      %v719 = vmul.f32 %v666, %v718
      %v720 = vmul.f32 %v669, %v718
      %v721 = vmul.f32 %v672, %v718
      %v722 = vmul.f32 %v675, %v718
      %v723 = vmul.f32 %v678, %v718
      %v724 = vmul.f32 %v681, %v718
      %v725 = vmul.f32 %v684, %v718
      %v726 = vmul.f32 %v687, %v718
      %v727 = vmul.f32 %v690, %v718
      %v728 = vmul.f32 %v693, %v718
      %v729 = vmul.f32 %v696, %v718
      %v730 = vmul.f32 %v699, %v718
      %v731 = vmul.f32 %v702, %v718
      %v732 = vmul.f32 %v705, %v718
      %v733 = vmul.f32 %v708, %v718
      %v734 = vmul.f32 %v711, %v718
      %v735 = vsel %vm663, %v647, -inf
      %736 = vmax.xlane.f32.xlu0 %v735
      %v737 = vpop.xlane.xlu0 %736
      %v738 = vsel %vm663, %v648, -inf
      %739 = vmax.xlane.f32.xlu0 %v738
      %v740 = vpop.xlane.xlu0 %739
      %v741 = vsel %vm663, %v649, -inf
      %742 = vmax.xlane.f32.xlu0 %v741
      %v743 = vpop.xlane.xlu0 %742
      %v744 = vsel %vm663, %v650, -inf
      %745 = vmax.xlane.f32.xlu0 %v744
      %v746 = vpop.xlane.xlu0 %745
      %v747 = vsel %vm663, %v651, -inf
      %748 = vmax.xlane.f32.xlu0 %v747
      %v749 = vpop.xlane.xlu0 %748
      %v750 = vsel %vm663, %v652, -inf
      %751 = vmax.xlane.f32.xlu0 %v750
      %v752 = vpop.xlane.xlu0 %751
      %v753 = vsel %vm663, %v653, -inf
      %754 = vmax.xlane.f32.xlu0 %v753
      %v755 = vpop.xlane.xlu0 %754
      %v756 = vsel %vm663, %v654, -inf
      %757 = vmax.xlane.f32.xlu0 %v756
      %v758 = vpop.xlane.xlu0 %757
      %v759 = vsel %vm663, %v655, -inf
      %760 = vmax.xlane.f32.xlu0 %v759
      %v761 = vpop.xlane.xlu0 %760
      %v762 = vsel %vm663, %v656, -inf
      %763 = vmax.xlane.f32.xlu0 %v762
      %v764 = vpop.xlane.xlu0 %763
      %v765 = vsel %vm663, %v657, -inf
      %766 = vmax.xlane.f32.xlu0 %v765
      %v767 = vpop.xlane.xlu0 %766
      %v768 = vsel %vm663, %v658, -inf
      %769 = vmax.xlane.f32.xlu0 %v768
      %v770 = vpop.xlane.xlu0 %769
      %v771 = vsel %vm663, %v659, -inf
      %772 = vmax.xlane.f32.xlu0 %v771
      %v773 = vpop.xlane.xlu0 %772
      %v774 = vsel %vm663, %v660, -inf
      %775 = vmax.xlane.f32.xlu0 %v774
      %v776 = vpop.xlane.xlu0 %775
      %v777 = vsel %vm663, %v661, -inf
      %778 = vmax.xlane.f32.xlu0 %v777
      %v779 = vpop.xlane.xlu0 %778
      %v780 = vsel %vm663, %v662, -inf
      %781 = vmax.xlane.f32.xlu0 %v780
      %v782 = vpop.xlane.xlu0 %781
      %v783 = vld [vmem:[%s2] sm:$0xff]
      %784 = vmatpush.msra.mxu0 %v662
      %785 = vmatpush.msra.mxu0 %v661
      %786 = vmatpush.msra.mxu0 %v660
      %787 = vmatpush.msra.mxu0 %v659
      %788 = vmatpush.msra.mxu0 %v658
      %789 = vmatpush.msra.mxu0 %v657
      %790 = vmatpush.msra.mxu0 %v656
      %791 = vmatpush.msra.mxu0 %v655
      %792 = vmatpush.msra.mxu0 %v654
      %793 = vmatpush.msra.mxu0 %v653
      %794 = vmatpush.msra.mxu0 %v652
      %795 = vmatpush.msra.mxu0 %v651
      %796 = vmatpush.msra.mxu0 %v650
      %797 = vmatpush.msra.mxu0 %v649
      %798 = vmatpush.msra.mxu0 %v648
      %799 = vmatpush.msra.mxu0 %v647
      %800 = vmatmul.f32.gmra.mxu0 %v783
      %v801 = vpop.f32.mrf.mxu0
      %v802 = vadd.f32 0.0, %v801
      %803 = vdwg.mxu0
      %v804 = vsel %vm663, %v802, -inf
      %805 = vmax.xlane.f32.xlu0 %v804
      %v806 = vpop.xlane.xlu0 %805
      %v807 = vld [vmem:[%s3] sm:$0xff]
      %v808 = vadd.f32 %v806, %v807
      %809 = vmatpush.msra.mxu0 %v734
      %810 = vmatpush.msra.mxu0 %v733
      %811 = vmatpush.msra.mxu0 %v732
      %812 = vmatpush.msra.mxu0 %v731
      %813 = vmatpush.msra.mxu0 %v730
      %814 = vmatpush.msra.mxu0 %v729
      %815 = vmatpush.msra.mxu0 %v728
      %816 = vmatpush.msra.mxu0 %v727
      %817 = vmatpush.msra.mxu0 %v726
      %818 = vmatpush.msra.mxu0 %v725
      %819 = vmatpush.msra.mxu0 %v724
      %820 = vmatpush.msra.mxu0 %v723
      %821 = vmatpush.msra.mxu0 %v722
      %822 = vmatpush.msra.mxu0 %v721
      %823 = vmatpush.msra.mxu0 %v720
      %824 = vmatpush.msra.mxu0 %v719
      %825 = vmatmul.f32.gmra.mxu0 %v783
      %v826 = vpop.f32.mrf.mxu0
      %v827 = vadd.f32 %v807, %v826
      %828 = vdwg.mxu0
      %830 = vrot.lane.b32.xlu0 %v808, 1
      %v831 = vpop.permute.xlu0 %830
      %vm833 = vcmask 7168
      %v834 = vsel %vm833, %v827, %v831
      %v835 = vld [vmem:[%s16] sm:$0xf]
      %v836 = vld [vmem:[%s17] sm:$0xf]
      %838 = vset.pattern.permute.xlu0 0
      %839 = vperm.xlu0 %838, %v836
      %v840 = vpop.permute.xlu0 %839
      %vm842 = vcmask 64512
      %v844 = vsel %vm842, %v835, 0
      %846 = vmatpush.msra.mxu0 0.0
      %847 = vmatpush.msra.mxu0 0.0
      %848 = vmatpush.msra.mxu0 0.0
      %849 = vmatpush.msra.mxu0 0.0
      %850 = vmatpush.msra.mxu0 0.0
      %851 = vmatpush.msra.mxu0 0.0
      %852 = vmatpush.msra.mxu0 0.0
      %853 = vmatpush.msra.mxu0 0.0
      %854 = vmatpush.msra.mxu0 0.0
      %855 = vmatpush.msra.mxu0 0.0
      %856 = vmatpush.msra.mxu0 0.0
      %857 = vmatpush.msra.mxu0 0.0
      %858 = vmatpush.msra.mxu0 0.0
      %859 = vmatpush.msra.mxu0 0.0
      %860 = vmatpush.msra.mxu0 0.0
      %861 = vmatpush.msra.mxu0 %v834
      %862 = vmatmul.f32.gmra.mxu0 %v844
      %v863 = vpop.f32.mrf.mxu0
      %v864 = vadd.f32 %v840, %v863
      %865 = vdwg.mxu0
      %v866 = vmax.f32 %v864, 0.0
      %v867 = vld [vmem:[%s18] sm:$0xff]
      %v868 = vld [vmem:[%s19] sm:$0xff]
      %870 = vset.pattern.permute.xlu0 0
      %871 = vperm.xlu0 %870, %v868
      %v872 = vpop.permute.xlu0 %871
      %vm874 = vcmask 31744
      %v876 = vsel %vm874, %v867, 0
      %vm878 = vcmask 1043456
      %v880 = vsel %vm878, %v866, 0
      %882 = vmatpush.msra.mxu0 0.0
      %883 = vmatpush.msra.mxu0 0.0
      %884 = vmatpush.msra.mxu0 0.0
      %885 = vmatpush.msra.mxu0 0.0
      %886 = vmatpush.msra.mxu0 0.0
      %887 = vmatpush.msra.mxu0 0.0
      %888 = vmatpush.msra.mxu0 0.0
      %889 = vmatpush.msra.mxu0 0.0
      %890 = vmatpush.msra.mxu0 0.0
      %891 = vmatpush.msra.mxu0 0.0
      %892 = vmatpush.msra.mxu0 0.0
      %893 = vmatpush.msra.mxu0 0.0
      %894 = vmatpush.msra.mxu0 0.0
      %895 = vmatpush.msra.mxu0 0.0
      %896 = vmatpush.msra.mxu0 0.0
      %897 = vmatpush.msra.mxu0 %v880
      %898 = vmatmul.f32.gmra.mxu0 %v876
      %v899 = vpop.f32.mrf.mxu0
      %v900 = vadd.f32 %v872, %v899
      %901 = vdwg.mxu0
      %vm902 = vcmask 15360
      %v903 = vsel %vm902, %v900, -inf
      %v904 = vrot.slane %v903, 4
      %v905 = vmax.f32 %v903, %v904
      %v906 = vrot.slane %v905, 2
      %v907 = vmax.f32 %v905, %v906
      %v908 = vrot.slane %v907, 1
      %v909 = vmax.f32 %v907, %v908
      %v910 = vsub.f32 %v900, %v909
      %v911 = vmul.f32 %v910, 1.442695
      %v912 = vpow.pop %v911
      %v913 = vsel %vm902, %v912, 0.0
      %v914 = vrot.slane %v913, 4
      %v915 = vadd.f32 %v913, %v914
      %v916 = vrot.slane %v915, 2
      %v917 = vadd.f32 %v915, %v916
      %v918 = vrot.slane %v917, 1
      %v919 = vadd.f32 %v917, %v918
      %v920 = vrcp.pop %v919
      %v921 = vmul.f32 %v919, %v920
      %v922 = vsub.f32 1.0, %v921
      %v923 = vmul.f32 %v920, %v922
      %v924 = vadd.f32 %v920, %v923
      %vm925 = vweird.f32 %v919
      %vm926 = vweird.f32 %v920
      %vm927 = vmor %vm925, %vm926
      %v928 = vsel %vm927, %v920, %v924
      %v929 = vand.u32 2147483647, %v919
      %vm930 = vcmp.eq.f32.partialorder %v929, 8.507059e+37
      %v931 = vand.u32 %v919, 2147483648
      %v932 = vor.u32 1.1754944e-38, %v931
      %v933 = vsel %vm930, %v932, %v928
      %v934 = vmul.f32 %v912, %v933
      %936 = vrot.lane.b32.xlu0 %v934, 127
      %v937 = vpop.permute.xlu0 %936
      %v939 = vadd.f32 %v934, %v937
      %v940 = vld [vmem:[%s641] sm:$0xff]
      %v941 = vmul.f32 %v939, %v940
      %v942 = vsel %vm833, %v719, %v737
      %v943 = vsel %vm833, %v720, %v740
      %v944 = vsel %vm833, %v721, %v743
      %v945 = vsel %vm833, %v722, %v746
      %v946 = vsel %vm833, %v723, %v749
      %v947 = vsel %vm833, %v724, %v752
      %v948 = vsel %vm833, %v725, %v755
      %v949 = vsel %vm833, %v726, %v758
      %v950 = vsel %vm833, %v727, %v761
      %v951 = vsel %vm833, %v728, %v764
      %v952 = vsel %vm833, %v729, %v767
      %v953 = vsel %vm833, %v730, %v770
      %v954 = vsel %vm833, %v731, %v773
      %v955 = vsel %vm833, %v732, %v776
      %v956 = vsel %vm833, %v733, %v779
      %v957 = vsel %vm833, %v734, %v782
      %v958 = vsel %vm902, %v942, 0.0
      %v959 = vsel %vm902, %v943, 0.0
      %v960 = vsel %vm902, %v944, 0.0
      %v961 = vsel %vm902, %v945, 0.0
      %v962 = vsel %vm902, %v946, 0.0
      %v963 = vsel %vm902, %v947, 0.0
      %v964 = vsel %vm902, %v948, 0.0
      %v965 = vsel %vm902, %v949, 0.0
      %v966 = vsel %vm902, %v950, 0.0
      %v967 = vsel %vm902, %v951, 0.0
      %v968 = vsel %vm902, %v952, 0.0
      %v969 = vsel %vm902, %v953, 0.0
      %v970 = vsel %vm902, %v954, 0.0
      %v971 = vsel %vm902, %v955, 0.0
      %v972 = vsel %vm902, %v956, 0.0
      %v973 = vsel %vm902, %v957, 0.0
      %974 = vxpose.xlu0.b32.start [1/16] %v958, 128
      %975 = vxpose.xlu0.b32.cont [2/16] %v959, 128
      %976 = vxpose.xlu0.b32.cont [3/16] %v960, 128
      %977 = vxpose.xlu0.b32.cont [4/16] %v961, 128
      %978 = vxpose.xlu0.b32.cont [5/16] %v962, 128
      %979 = vxpose.xlu0.b32.cont [6/16] %v963, 128
      %980 = vxpose.xlu0.b32.cont [7/16] %v964, 128
      %981 = vxpose.xlu0.b32.cont [8/16] %v965, 128
      %982 = vxpose.xlu0.b32.cont [9/16] %v966, 128
      %983 = vxpose.xlu0.b32.cont [10/16] %v967, 128
      %984 = vxpose.xlu0.b32.cont [11/16] %v968, 128
      %985 = vxpose.xlu0.b32.cont [12/16] %v969, 128
      %986 = vxpose.xlu0.b32.cont [13/16] %v970, 128
      %987 = vxpose.xlu0.b32.cont [14/16] %v971, 128
      %988 = vxpose.xlu0.b32.cont [15/16] %v972, 128
      %989 = vxpose.xlu0.b32.end [16/16] %v973, 128
      %v990 = vpop.trf.xlu0
      %v991 = vpop.trf.xlu0
      %v992 = vpop.trf.xlu0
      %v993 = vpop.trf.xlu0
      %v994 = vpop.trf.xlu0
      %v995 = vpop.trf.xlu0
      %v996 = vpop.trf.xlu0
      %v997 = vpop.trf.xlu0
      %v998 = vpop.trf.xlu0
      %v999 = vpop.trf.xlu0
      %v1000 = vpop.trf.xlu0
      %v1001 = vpop.trf.xlu0
      %v1002 = vpop.trf.xlu0
      %v1003 = vpop.trf.xlu0
      %v1004 = vpop.trf.xlu0
      %v1005 = vpop.trf.xlu0
      %v1006 = vld [vmem:[%s4] sm:$0xff]
      %v1007 = vld [vmem:[%s4 + $0x8] sm:$0xff]
      %v1008 = vld [vmem:[%s4 + $0x10] sm:$0xff]
      %v1009 = vld [vmem:[%s4 + $0x18] sm:$0xff]
      %v1010 = vld [vmem:[%s4 + $0x20] sm:$0xff]
      %v1011 = vld [vmem:[%s4 + $0x28] sm:$0xff]
      %v1012 = vld [vmem:[%s4 + $0x30] sm:$0xff]
      %v1013 = vld [vmem:[%s4 + $0x38] sm:$0xff]
      %v1014 = vld [vmem:[%s4 + $0x40] sm:$0xff]
      %v1015 = vld [vmem:[%s4 + $0x48] sm:$0xff]
      %v1016 = vld [vmem:[%s4 + $0x50] sm:$0xff]
      %v1017 = vld [vmem:[%s4 + $0x58] sm:$0xff]
      %v1018 = vld [vmem:[%s4 + $0x60] sm:$0xff]
      %v1019 = vld [vmem:[%s4 + $0x68] sm:$0xff]
      %v1020 = vld [vmem:[%s4 + $0x70] sm:$0xff]
      %v1021 = vld [vmem:[%s4 + $0x78] sm:$0xff]
      %v1022 = vld [vmem:[%s4 + $0x80] sm:$0xff]
      %v1023 = vld [vmem:[%s4 + $0x88] sm:$0xff]
      %v1024 = vld [vmem:[%s4 + $0x90] sm:$0xff]
      %v1025 = vld [vmem:[%s4 + $0x98] sm:$0xff]
      %v1026 = vld [vmem:[%s4 + $0xa0] sm:$0xff]
      %v1027 = vld [vmem:[%s4 + $0xa8] sm:$0xff]
      %v1028 = vld [vmem:[%s4 + $0xb0] sm:$0xff]
      %v1029 = vld [vmem:[%s4 + $0xb8] sm:$0xff]
      %v1030 = vld [vmem:[%s4 + $0xc0] sm:$0xff]
      %v1031 = vld [vmem:[%s4 + $0xc8] sm:$0xff]
      %v1032 = vld [vmem:[%s4 + $0xd0] sm:$0xff]
      %v1033 = vld [vmem:[%s4 + $0xd8] sm:$0xff]
      %v1034 = vld [vmem:[%s4 + $0xe0] sm:$0xff]
      %v1035 = vld [vmem:[%s4 + $0xe8] sm:$0xff]
      %v1036 = vld [vmem:[%s4 + $0xf0] sm:$0xff]
      %v1037 = vld [vmem:[%s4 + $0xf8] sm:$0xff]
      %v1038 = vld [vmem:[%s4 + $0x100] sm:$0xff]
      %v1039 = vld [vmem:[%s4 + $0x108] sm:$0xff]
      %v1040 = vld [vmem:[%s4 + $0x110] sm:$0xff]
      %v1041 = vld [vmem:[%s4 + $0x118] sm:$0xff]
      %v1042 = vld [vmem:[%s4 + $0x120] sm:$0xff]
      %v1043 = vld [vmem:[%s4 + $0x128] sm:$0xff]
      %v1044 = vld [vmem:[%s4 + $0x130] sm:$0xff]
      %v1045 = vld [vmem:[%s4 + $0x138] sm:$0xff]
      %v1046 = vld [vmem:[%s4 + $0x140] sm:$0xff]
      %v1047 = vld [vmem:[%s4 + $0x148] sm:$0xff]
      %v1048 = vld [vmem:[%s4 + $0x150] sm:$0xff]
      %v1049 = vld [vmem:[%s4 + $0x158] sm:$0xff]
      %v1050 = vld [vmem:[%s4 + $0x160] sm:$0xff]
      %v1051 = vld [vmem:[%s4 + $0x168] sm:$0xff]
      %v1052 = vld [vmem:[%s4 + $0x170] sm:$0xff]
      %v1053 = vld [vmem:[%s4 + $0x178] sm:$0xff]
      %v1054 = vld [vmem:[%s4 + $0x180] sm:$0xff]
      %v1055 = vld [vmem:[%s4 + $0x188] sm:$0xff]
      %v1056 = vld [vmem:[%s4 + $0x190] sm:$0xff]
      %v1057 = vld [vmem:[%s4 + $0x198] sm:$0xff]
      %v1058 = vld [vmem:[%s4 + $0x1a0] sm:$0xff]
      %v1059 = vld [vmem:[%s4 + $0x1a8] sm:$0xff]
      %v1060 = vld [vmem:[%s4 + $0x1b0] sm:$0xff]
      %v1061 = vld [vmem:[%s4 + $0x1b8] sm:$0xff]
      %v1062 = vld [vmem:[%s4 + $0x1c0] sm:$0xff]
      %v1063 = vld [vmem:[%s4 + $0x1c8] sm:$0xff]
      %v1064 = vld [vmem:[%s4 + $0x1d0] sm:$0xff]
      %v1065 = vld [vmem:[%s4 + $0x1d8] sm:$0xff]
      %v1066 = vld [vmem:[%s4 + $0x1e0] sm:$0xff]
      %v1067 = vld [vmem:[%s4 + $0x1e8] sm:$0xff]
      %v1068 = vld [vmem:[%s4 + $0x1f0] sm:$0xff]
      %v1069 = vld [vmem:[%s4 + $0x1f8] sm:$0xff]
      %v1070 = vld [vmem:[%s5] sm:$0xf]
      %v1072 = vperm.slane %v1070, 0
      %v1073 = vperm.slane %v1070, 1
      %v1074 = vperm.slane %v1070, 2
      %v1075 = vperm.slane %v1070, 3
      %1080 = vmatpush.msra.mxu0 %v1066
      %1081 = vmatpush.msra.mxu0 %v1062
      %1082 = vmatpush.msra.mxu0 %v1058
      %1083 = vmatpush.msra.mxu0 %v1054
      %1084 = vmatpush.msra.mxu0 %v1050
      %1085 = vmatpush.msra.mxu0 %v1046
      %1086 = vmatpush.msra.mxu0 %v1042
      %1087 = vmatpush.msra.mxu0 %v1038
      %1088 = vmatpush.msra.mxu0 %v1034
      %1089 = vmatpush.msra.mxu0 %v1030
      %1090 = vmatpush.msra.mxu0 %v1026
      %1091 = vmatpush.msra.mxu0 %v1022
      %1092 = vmatpush.msra.mxu0 %v1018
      %1093 = vmatpush.msra.mxu0 %v1014
      %1094 = vmatpush.msra.mxu0 %v1010
      %1095 = vmatpush.msra.mxu0 %v1006
      %1096 = vmatmul.f32.gmra.mxu0 %v990
      %v1097 = vpop.f32.mrf.mxu0
      %v1098 = vadd.f32 %v1072, %v1097
      %1099 = vdwg.mxu0
      %1100 = vmatpush.msra.mxu0 %v1067
      %1101 = vmatpush.msra.mxu0 %v1063
      %1102 = vmatpush.msra.mxu0 %v1059
      %1103 = vmatpush.msra.mxu0 %v1055
      %1104 = vmatpush.msra.mxu0 %v1051
      %1105 = vmatpush.msra.mxu0 %v1047
      %1106 = vmatpush.msra.mxu0 %v1043
      %1107 = vmatpush.msra.mxu0 %v1039
      %1108 = vmatpush.msra.mxu0 %v1035
      %1109 = vmatpush.msra.mxu0 %v1031
      %1110 = vmatpush.msra.mxu0 %v1027
      %1111 = vmatpush.msra.mxu0 %v1023
      %1112 = vmatpush.msra.mxu0 %v1019
      %1113 = vmatpush.msra.mxu0 %v1015
      %1114 = vmatpush.msra.mxu0 %v1011
      %1115 = vmatpush.msra.mxu0 %v1007
      %1116 = vmatmul.f32.gmra.mxu0 %v990
      %v1117 = vpop.f32.mrf.mxu0
      %v1118 = vadd.f32 %v1073, %v1117
      %1119 = vdwg.mxu0
      %1120 = vmatpush.msra.mxu0 %v1068
      %1121 = vmatpush.msra.mxu0 %v1064
      %1122 = vmatpush.msra.mxu0 %v1060
      %1123 = vmatpush.msra.mxu0 %v1056
      %1124 = vmatpush.msra.mxu0 %v1052
      %1125 = vmatpush.msra.mxu0 %v1048
      %1126 = vmatpush.msra.mxu0 %v1044
      %1127 = vmatpush.msra.mxu0 %v1040
      %1128 = vmatpush.msra.mxu0 %v1036
      %1129 = vmatpush.msra.mxu0 %v1032
      %1130 = vmatpush.msra.mxu0 %v1028
      %1131 = vmatpush.msra.mxu0 %v1024
      %1132 = vmatpush.msra.mxu0 %v1020
      %1133 = vmatpush.msra.mxu0 %v1016
      %1134 = vmatpush.msra.mxu0 %v1012
      %1135 = vmatpush.msra.mxu0 %v1008
      %1136 = vmatmul.f32.gmra.mxu0 %v990
      %v1137 = vpop.f32.mrf.mxu0
      %v1138 = vadd.f32 %v1074, %v1137
      %1139 = vdwg.mxu0
      %1140 = vmatpush.msra.mxu0 %v1069
      %1141 = vmatpush.msra.mxu0 %v1065
      %1142 = vmatpush.msra.mxu0 %v1061
      %1143 = vmatpush.msra.mxu0 %v1057
      %1144 = vmatpush.msra.mxu0 %v1053
      %1145 = vmatpush.msra.mxu0 %v1049
      %1146 = vmatpush.msra.mxu0 %v1045
      %1147 = vmatpush.msra.mxu0 %v1041
      %1148 = vmatpush.msra.mxu0 %v1037
      %1149 = vmatpush.msra.mxu0 %v1033
      %1150 = vmatpush.msra.mxu0 %v1029
      %1151 = vmatpush.msra.mxu0 %v1025
      %1152 = vmatpush.msra.mxu0 %v1021
      %1153 = vmatpush.msra.mxu0 %v1017
      %1154 = vmatpush.msra.mxu0 %v1013
      %1155 = vmatpush.msra.mxu0 %v1009
      %1156 = vmatmul.f32.gmra.mxu0 %v990
      %v1157 = vpop.f32.mrf.mxu0
      %v1158 = vadd.f32 %v1075, %v1157
      %1159 = vdwg.mxu0
      %v1160 = vld [vmem:[%s8] sm:$0xff]
      %v1161 = vld [vmem:[%s8 + $0x8] sm:$0xff]
      %v1162 = vld [vmem:[%s8 + $0x10] sm:$0xff]
      %v1163 = vld [vmem:[%s8 + $0x18] sm:$0xff]
      %v1164 = vld [vmem:[%s8 + $0x20] sm:$0xff]
      %v1165 = vld [vmem:[%s8 + $0x28] sm:$0xff]
      %v1166 = vld [vmem:[%s8 + $0x30] sm:$0xff]
      %v1167 = vld [vmem:[%s8 + $0x38] sm:$0xff]
      %v1168 = vld [vmem:[%s8 + $0x40] sm:$0xff]
      %v1169 = vld [vmem:[%s8 + $0x48] sm:$0xff]
      %v1170 = vld [vmem:[%s8 + $0x50] sm:$0xff]
      %v1171 = vld [vmem:[%s8 + $0x58] sm:$0xff]
      %v1172 = vld [vmem:[%s8 + $0x60] sm:$0xff]
      %v1173 = vld [vmem:[%s8 + $0x68] sm:$0xff]
      %v1174 = vld [vmem:[%s8 + $0x70] sm:$0xff]
      %v1175 = vld [vmem:[%s8 + $0x78] sm:$0xff]
      %v1176 = vld [vmem:[%s8 + $0x80] sm:$0xff]
      %v1177 = vld [vmem:[%s8 + $0x88] sm:$0xff]
      %v1178 = vld [vmem:[%s8 + $0x90] sm:$0xff]
      %v1179 = vld [vmem:[%s8 + $0x98] sm:$0xff]
      %v1180 = vld [vmem:[%s8 + $0xa0] sm:$0xff]
      %v1181 = vld [vmem:[%s8 + $0xa8] sm:$0xff]
      %v1182 = vld [vmem:[%s8 + $0xb0] sm:$0xff]
      %v1183 = vld [vmem:[%s8 + $0xb8] sm:$0xff]
      %v1184 = vld [vmem:[%s8 + $0xc0] sm:$0xff]
      %v1185 = vld [vmem:[%s8 + $0xc8] sm:$0xff]
      %v1186 = vld [vmem:[%s8 + $0xd0] sm:$0xff]
      %v1187 = vld [vmem:[%s8 + $0xd8] sm:$0xff]
      %v1188 = vld [vmem:[%s8 + $0xe0] sm:$0xff]
      %v1189 = vld [vmem:[%s8 + $0xe8] sm:$0xff]
      %v1190 = vld [vmem:[%s8 + $0xf0] sm:$0xff]
      %v1191 = vld [vmem:[%s8 + $0xf8] sm:$0xff]
      %v1192 = vld [vmem:[%s8 + $0x100] sm:$0xff]
      %v1193 = vld [vmem:[%s8 + $0x108] sm:$0xff]
      %v1194 = vld [vmem:[%s8 + $0x110] sm:$0xff]
      %v1195 = vld [vmem:[%s8 + $0x118] sm:$0xff]
      %v1196 = vld [vmem:[%s8 + $0x120] sm:$0xff]
      %v1197 = vld [vmem:[%s8 + $0x128] sm:$0xff]
      %v1198 = vld [vmem:[%s8 + $0x130] sm:$0xff]
      %v1199 = vld [vmem:[%s8 + $0x138] sm:$0xff]
      %v1200 = vld [vmem:[%s8 + $0x140] sm:$0xff]
      %v1201 = vld [vmem:[%s8 + $0x148] sm:$0xff]
      %v1202 = vld [vmem:[%s8 + $0x150] sm:$0xff]
      %v1203 = vld [vmem:[%s8 + $0x158] sm:$0xff]
      %v1204 = vld [vmem:[%s8 + $0x160] sm:$0xff]
      %v1205 = vld [vmem:[%s8 + $0x168] sm:$0xff]
      %v1206 = vld [vmem:[%s8 + $0x170] sm:$0xff]
      %v1207 = vld [vmem:[%s8 + $0x178] sm:$0xff]
      %v1208 = vld [vmem:[%s8 + $0x180] sm:$0xff]
      %v1209 = vld [vmem:[%s8 + $0x188] sm:$0xff]
      %v1210 = vld [vmem:[%s8 + $0x190] sm:$0xff]
      %v1211 = vld [vmem:[%s8 + $0x198] sm:$0xff]
      %v1212 = vld [vmem:[%s8 + $0x1a0] sm:$0xff]
      %v1213 = vld [vmem:[%s8 + $0x1a8] sm:$0xff]
      %v1214 = vld [vmem:[%s8 + $0x1b0] sm:$0xff]
      %v1215 = vld [vmem:[%s8 + $0x1b8] sm:$0xff]
      %v1216 = vld [vmem:[%s8 + $0x1c0] sm:$0xff]
      %v1217 = vld [vmem:[%s8 + $0x1c8] sm:$0xff]
      %v1218 = vld [vmem:[%s8 + $0x1d0] sm:$0xff]
      %v1219 = vld [vmem:[%s8 + $0x1d8] sm:$0xff]
      %v1220 = vld [vmem:[%s8 + $0x1e0] sm:$0xff]
      %v1221 = vld [vmem:[%s8 + $0x1e8] sm:$0xff]
      %v1222 = vld [vmem:[%s8 + $0x1f0] sm:$0xff]
      %v1223 = vld [vmem:[%s8 + $0x1f8] sm:$0xff]
      %1224 = vmatpush.msra.mxu0 %v1175
      %1225 = vmatpush.msra.mxu0 %v1174
      %1226 = vmatpush.msra.mxu0 %v1173
      %1227 = vmatpush.msra.mxu0 %v1172
      %1228 = vmatpush.msra.mxu0 %v1171
      %1229 = vmatpush.msra.mxu0 %v1170
      %1230 = vmatpush.msra.mxu0 %v1169
      %1231 = vmatpush.msra.mxu0 %v1168
      %1232 = vmatpush.msra.mxu0 %v1167
      %1233 = vmatpush.msra.mxu0 %v1166
      %1234 = vmatpush.msra.mxu0 %v1165
      %1235 = vmatpush.msra.mxu0 %v1164
      %1236 = vmatpush.msra.mxu0 %v1163
      %1237 = vmatpush.msra.mxu0 %v1162
      %1238 = vmatpush.msra.mxu0 %v1161
      %1239 = vmatpush.msra.mxu0 %v1160
      %1240 = vmatmul.f32.gmra.mxu0 %v1098
      %v1241 = vpop.f32.mrf.mxu0
      %v1242 = vadd.f32 0.0, %v1241
      %1243 = vdwg.mxu0
      %1244 = vmatpush.msra.mxu0 %v1191
      %1245 = vmatpush.msra.mxu0 %v1190
      %1246 = vmatpush.msra.mxu0 %v1189
      %1247 = vmatpush.msra.mxu0 %v1188
      %1248 = vmatpush.msra.mxu0 %v1187
      %1249 = vmatpush.msra.mxu0 %v1186
      %1250 = vmatpush.msra.mxu0 %v1185
      %1251 = vmatpush.msra.mxu0 %v1184
      %1252 = vmatpush.msra.mxu0 %v1183
      %1253 = vmatpush.msra.mxu0 %v1182
      %1254 = vmatpush.msra.mxu0 %v1181
      %1255 = vmatpush.msra.mxu0 %v1180
      %1256 = vmatpush.msra.mxu0 %v1179
      %1257 = vmatpush.msra.mxu0 %v1178
      %1258 = vmatpush.msra.mxu0 %v1177
      %1259 = vmatpush.msra.mxu0 %v1176
      %1260 = vmatmul.f32.gmra.mxu0 %v1118
      %v1261 = vpop.f32.mrf.mxu0
      %v1262 = vadd.f32 %v1242, %v1261
      %1263 = vdwg.mxu0
      %1264 = vmatpush.msra.mxu0 %v1207
      %1265 = vmatpush.msra.mxu0 %v1206
      %1266 = vmatpush.msra.mxu0 %v1205
      %1267 = vmatpush.msra.mxu0 %v1204
      %1268 = vmatpush.msra.mxu0 %v1203
      %1269 = vmatpush.msra.mxu0 %v1202
      %1270 = vmatpush.msra.mxu0 %v1201
      %1271 = vmatpush.msra.mxu0 %v1200
      %1272 = vmatpush.msra.mxu0 %v1199
      %1273 = vmatpush.msra.mxu0 %v1198
      %1274 = vmatpush.msra.mxu0 %v1197
      %1275 = vmatpush.msra.mxu0 %v1196
      %1276 = vmatpush.msra.mxu0 %v1195
      %1277 = vmatpush.msra.mxu0 %v1194
      %1278 = vmatpush.msra.mxu0 %v1193
      %1279 = vmatpush.msra.mxu0 %v1192
      %1280 = vmatmul.f32.gmra.mxu0 %v1138
      %v1281 = vpop.f32.mrf.mxu0
      %v1282 = vadd.f32 %v1262, %v1281
      %1283 = vdwg.mxu0
      %1284 = vmatpush.msra.mxu0 %v1223
      %1285 = vmatpush.msra.mxu0 %v1222
      %1286 = vmatpush.msra.mxu0 %v1221
      %1287 = vmatpush.msra.mxu0 %v1220
      %1288 = vmatpush.msra.mxu0 %v1219
      %1289 = vmatpush.msra.mxu0 %v1218
      %1290 = vmatpush.msra.mxu0 %v1217
      %1291 = vmatpush.msra.mxu0 %v1216
      %1292 = vmatpush.msra.mxu0 %v1215
      %1293 = vmatpush.msra.mxu0 %v1214
      %1294 = vmatpush.msra.mxu0 %v1213
      %1295 = vmatpush.msra.mxu0 %v1212
      %1296 = vmatpush.msra.mxu0 %v1211
      %1297 = vmatpush.msra.mxu0 %v1210
      %1298 = vmatpush.msra.mxu0 %v1209
      %1299 = vmatpush.msra.mxu0 %v1208
      %1300 = vmatmul.f32.gmra.mxu0 %v1158
      %v1301 = vpop.f32.mrf.mxu0
      %v1302 = vadd.f32 %v1282, %v1301
      %1303 = vdwg.mxu0
      %v1304 = vld [vmem:[%s9] sm:$0xff]
      %v1305 = vld [vmem:[%s9 + $0x8] sm:$0xff]
      %v1306 = vld [vmem:[%s9 + $0x10] sm:$0xff]
      %v1307 = vld [vmem:[%s9 + $0x18] sm:$0xff]
      %v1309 = vsel %vm842, %v1302, 0
      %1311 = vmatpush.msra.mxu0 0.0
      %1312 = vmatpush.msra.mxu0 0.0
      %1313 = vmatpush.msra.mxu0 0.0
      %1314 = vmatpush.msra.mxu0 0.0
      %1315 = vmatpush.msra.mxu0 0.0
      %1316 = vmatpush.msra.mxu0 0.0
      %1317 = vmatpush.msra.mxu0 0.0
      %1318 = vmatpush.msra.mxu0 0.0
      %1319 = vmatpush.msra.mxu0 0.0
      %1320 = vmatpush.msra.mxu0 0.0
      %1321 = vmatpush.msra.mxu0 0.0
      %1322 = vmatpush.msra.mxu0 0.0
      %1323 = vmatpush.msra.mxu0 0.0
      %1324 = vmatpush.msra.mxu0 0.0
      %1325 = vmatpush.msra.mxu0 0.0
      %1326 = vmatpush.msra.mxu0 %v1304
      %1327 = vmatmul.f32.gmra.mxu0 %v1309
      %v1328 = vpop.f32.mrf.mxu0
      %v1329 = vadd.f32 0.0, %v1328
      %1330 = vdwg.mxu0
      %1331 = vmatpush.msra.mxu0 0.0
      %1332 = vmatpush.msra.mxu0 0.0
      %1333 = vmatpush.msra.mxu0 0.0
      %1334 = vmatpush.msra.mxu0 0.0
      %1335 = vmatpush.msra.mxu0 0.0
      %1336 = vmatpush.msra.mxu0 0.0
      %1337 = vmatpush.msra.mxu0 0.0
      %1338 = vmatpush.msra.mxu0 0.0
      %1339 = vmatpush.msra.mxu0 0.0
      %1340 = vmatpush.msra.mxu0 0.0
      %1341 = vmatpush.msra.mxu0 0.0
      %1342 = vmatpush.msra.mxu0 0.0
      %1343 = vmatpush.msra.mxu0 0.0
      %1344 = vmatpush.msra.mxu0 0.0
      %1345 = vmatpush.msra.mxu0 0.0
      %1346 = vmatpush.msra.mxu0 %v1305
      %1347 = vmatmul.f32.gmra.mxu0 %v1309
      %v1348 = vpop.f32.mrf.mxu0
      %v1349 = vadd.f32 0.0, %v1348
      %1350 = vdwg.mxu0
      %1351 = vmatpush.msra.mxu0 0.0
      %1352 = vmatpush.msra.mxu0 0.0
      %1353 = vmatpush.msra.mxu0 0.0
      %1354 = vmatpush.msra.mxu0 0.0
      %1355 = vmatpush.msra.mxu0 0.0
      %1356 = vmatpush.msra.mxu0 0.0
      %1357 = vmatpush.msra.mxu0 0.0
      %1358 = vmatpush.msra.mxu0 0.0
      %1359 = vmatpush.msra.mxu0 0.0
      %1360 = vmatpush.msra.mxu0 0.0
      %1361 = vmatpush.msra.mxu0 0.0
      %1362 = vmatpush.msra.mxu0 0.0
      %1363 = vmatpush.msra.mxu0 0.0
      %1364 = vmatpush.msra.mxu0 0.0
      %1365 = vmatpush.msra.mxu0 0.0
      %1366 = vmatpush.msra.mxu0 %v1306
      %1367 = vmatmul.f32.gmra.mxu0 %v1309
      %v1368 = vpop.f32.mrf.mxu0
      %v1369 = vadd.f32 0.0, %v1368
      %1370 = vdwg.mxu0
      %1371 = vmatpush.msra.mxu0 0.0
      %1372 = vmatpush.msra.mxu0 0.0
      %1373 = vmatpush.msra.mxu0 0.0
      %1374 = vmatpush.msra.mxu0 0.0
      %1375 = vmatpush.msra.mxu0 0.0
      %1376 = vmatpush.msra.mxu0 0.0
      %1377 = vmatpush.msra.mxu0 0.0
      %1378 = vmatpush.msra.mxu0 0.0
      %1379 = vmatpush.msra.mxu0 0.0
      %1380 = vmatpush.msra.mxu0 0.0
      %1381 = vmatpush.msra.mxu0 0.0
      %1382 = vmatpush.msra.mxu0 0.0
      %1383 = vmatpush.msra.mxu0 0.0
      %1384 = vmatpush.msra.mxu0 0.0
      %1385 = vmatpush.msra.mxu0 0.0
      %1386 = vmatpush.msra.mxu0 %v1307
      %1387 = vmatmul.f32.gmra.mxu0 %v1309
      %v1388 = vpop.f32.mrf.mxu0
      %v1389 = vadd.f32 0.0, %v1388
      %1390 = vdwg.mxu0
      %v1391 = vsub.f32 %v1098, %v1329
      %v1392 = vsub.f32 %v1118, %v1349
      %v1393 = vsub.f32 %v1138, %v1369
      %v1394 = vsub.f32 %v1158, %v1389
      %v1395 = vmul.f32 %v1391, %v1391
      %v1396 = vmul.f32 %v1392, %v1392
      %v1397 = vmul.f32 %v1393, %v1393
      %v1398 = vmul.f32 %v1394, %v1394
      %1399 = vmatpush.msra.mxu0 %v1175
      %1400 = vmatpush.msra.mxu0 %v1174
      %1401 = vmatpush.msra.mxu0 %v1173
      %1402 = vmatpush.msra.mxu0 %v1172
      %1403 = vmatpush.msra.mxu0 %v1171
      %1404 = vmatpush.msra.mxu0 %v1170
      %1405 = vmatpush.msra.mxu0 %v1169
      %1406 = vmatpush.msra.mxu0 %v1168
      %1407 = vmatpush.msra.mxu0 %v1167
      %1408 = vmatpush.msra.mxu0 %v1166
      %1409 = vmatpush.msra.mxu0 %v1165
      %1410 = vmatpush.msra.mxu0 %v1164
      %1411 = vmatpush.msra.mxu0 %v1163
      %1412 = vmatpush.msra.mxu0 %v1162
      %1413 = vmatpush.msra.mxu0 %v1161
      %1414 = vmatpush.msra.mxu0 %v1160
      %1415 = vmatmul.f32.gmra.mxu0 %v1395
      %v1416 = vpop.f32.mrf.mxu0
      %v1417 = vadd.f32 1e-05, %v1416
      %1418 = vdwg.mxu0
      %1419 = vmatpush.msra.mxu0 %v1191
      %1420 = vmatpush.msra.mxu0 %v1190
      %1421 = vmatpush.msra.mxu0 %v1189
      %1422 = vmatpush.msra.mxu0 %v1188
      %1423 = vmatpush.msra.mxu0 %v1187
      %1424 = vmatpush.msra.mxu0 %v1186
      %1425 = vmatpush.msra.mxu0 %v1185
      %1426 = vmatpush.msra.mxu0 %v1184
      %1427 = vmatpush.msra.mxu0 %v1183
      %1428 = vmatpush.msra.mxu0 %v1182
      %1429 = vmatpush.msra.mxu0 %v1181
      %1430 = vmatpush.msra.mxu0 %v1180
      %1431 = vmatpush.msra.mxu0 %v1179
      %1432 = vmatpush.msra.mxu0 %v1178
      %1433 = vmatpush.msra.mxu0 %v1177
      %1434 = vmatpush.msra.mxu0 %v1176
      %1435 = vmatmul.f32.gmra.mxu0 %v1396
      %v1436 = vpop.f32.mrf.mxu0
      %v1437 = vadd.f32 %v1417, %v1436
      %1438 = vdwg.mxu0
      %1439 = vmatpush.msra.mxu0 %v1207
      %1440 = vmatpush.msra.mxu0 %v1206
      %1441 = vmatpush.msra.mxu0 %v1205
      %1442 = vmatpush.msra.mxu0 %v1204
      %1443 = vmatpush.msra.mxu0 %v1203
      %1444 = vmatpush.msra.mxu0 %v1202
      %1445 = vmatpush.msra.mxu0 %v1201
      %1446 = vmatpush.msra.mxu0 %v1200
      %1447 = vmatpush.msra.mxu0 %v1199
      %1448 = vmatpush.msra.mxu0 %v1198
      %1449 = vmatpush.msra.mxu0 %v1197
      %1450 = vmatpush.msra.mxu0 %v1196
      %1451 = vmatpush.msra.mxu0 %v1195
      %1452 = vmatpush.msra.mxu0 %v1194
      %1453 = vmatpush.msra.mxu0 %v1193
      %1454 = vmatpush.msra.mxu0 %v1192
      %1455 = vmatmul.f32.gmra.mxu0 %v1397
      %v1456 = vpop.f32.mrf.mxu0
      %v1457 = vadd.f32 %v1437, %v1456
      %1458 = vdwg.mxu0
      %1459 = vmatpush.msra.mxu0 %v1223
      %1460 = vmatpush.msra.mxu0 %v1222
      %1461 = vmatpush.msra.mxu0 %v1221
      %1462 = vmatpush.msra.mxu0 %v1220
      %1463 = vmatpush.msra.mxu0 %v1219
      %1464 = vmatpush.msra.mxu0 %v1218
      %1465 = vmatpush.msra.mxu0 %v1217
      %1466 = vmatpush.msra.mxu0 %v1216
      %1467 = vmatpush.msra.mxu0 %v1215
      %1468 = vmatpush.msra.mxu0 %v1214
      %1469 = vmatpush.msra.mxu0 %v1213
      %1470 = vmatpush.msra.mxu0 %v1212
      %1471 = vmatpush.msra.mxu0 %v1211
      %1472 = vmatpush.msra.mxu0 %v1210
      %1473 = vmatpush.msra.mxu0 %v1209
      %1474 = vmatpush.msra.mxu0 %v1208
      %1475 = vmatmul.f32.gmra.mxu0 %v1398
      %v1476 = vpop.f32.mrf.mxu0
      %v1477 = vadd.f32 %v1457, %v1476
      %1478 = vdwg.mxu0
      %v1479 = vrsqrt.pop %v1477
      %v1480 = vmul.f32 %v1479, %v1477
      %v1481 = vmul.f32 %v1480, %v1479
      %v1482 = vmul.f32 0.5, %v1481
      %v1483 = vsub.f32 1.5, %v1482
      %v1484 = vmul.f32 %v1479, %v1483
      %vm1485 = vweird.f32 %v1477
      %vm1486 = vweird.f32 %v1479
      %vm1487 = vmor %vm1485, %vm1486
      %v1488 = vsel %vm1487, %v1479, %v1484
      %v1490 = vsel %vm842, %v1488, 0
      %1492 = vmatpush.msra.mxu0 0.0
      %1493 = vmatpush.msra.mxu0 0.0
      %1494 = vmatpush.msra.mxu0 0.0
      %1495 = vmatpush.msra.mxu0 0.0
      %1496 = vmatpush.msra.mxu0 0.0
      %1497 = vmatpush.msra.mxu0 0.0
      %1498 = vmatpush.msra.mxu0 0.0
      %1499 = vmatpush.msra.mxu0 0.0
      %1500 = vmatpush.msra.mxu0 0.0
      %1501 = vmatpush.msra.mxu0 0.0
      %1502 = vmatpush.msra.mxu0 0.0
      %1503 = vmatpush.msra.mxu0 0.0
      %1504 = vmatpush.msra.mxu0 0.0
      %1505 = vmatpush.msra.mxu0 0.0
      %1506 = vmatpush.msra.mxu0 0.0
      %1507 = vmatpush.msra.mxu0 %v1304
      %1508 = vmatmul.f32.gmra.mxu0 %v1490
      %v1509 = vpop.f32.mrf.mxu0
      %v1510 = vadd.f32 0.0, %v1509
      %1511 = vdwg.mxu0
      %1512 = vmatpush.msra.mxu0 0.0
      %1513 = vmatpush.msra.mxu0 0.0
      %1514 = vmatpush.msra.mxu0 0.0
      %1515 = vmatpush.msra.mxu0 0.0
      %1516 = vmatpush.msra.mxu0 0.0
      %1517 = vmatpush.msra.mxu0 0.0
      %1518 = vmatpush.msra.mxu0 0.0
      %1519 = vmatpush.msra.mxu0 0.0
      %1520 = vmatpush.msra.mxu0 0.0
      %1521 = vmatpush.msra.mxu0 0.0
      %1522 = vmatpush.msra.mxu0 0.0
      %1523 = vmatpush.msra.mxu0 0.0
      %1524 = vmatpush.msra.mxu0 0.0
      %1525 = vmatpush.msra.mxu0 0.0
      %1526 = vmatpush.msra.mxu0 0.0
      %1527 = vmatpush.msra.mxu0 %v1305
      %1528 = vmatmul.f32.gmra.mxu0 %v1490
      %v1529 = vpop.f32.mrf.mxu0
      %v1530 = vadd.f32 0.0, %v1529
      %1531 = vdwg.mxu0
      %1532 = vmatpush.msra.mxu0 0.0
      %1533 = vmatpush.msra.mxu0 0.0
      %1534 = vmatpush.msra.mxu0 0.0
      %1535 = vmatpush.msra.mxu0 0.0
      %1536 = vmatpush.msra.mxu0 0.0
      %1537 = vmatpush.msra.mxu0 0.0
      %1538 = vmatpush.msra.mxu0 0.0
      %1539 = vmatpush.msra.mxu0 0.0
      %1540 = vmatpush.msra.mxu0 0.0
      %1541 = vmatpush.msra.mxu0 0.0
      %1542 = vmatpush.msra.mxu0 0.0
      %1543 = vmatpush.msra.mxu0 0.0
      %1544 = vmatpush.msra.mxu0 0.0
      %1545 = vmatpush.msra.mxu0 0.0
      %1546 = vmatpush.msra.mxu0 0.0
      %1547 = vmatpush.msra.mxu0 %v1306
      %1548 = vmatmul.f32.gmra.mxu0 %v1490
      %v1549 = vpop.f32.mrf.mxu0
      %v1550 = vadd.f32 0.0, %v1549
      %1551 = vdwg.mxu0
      %1552 = vmatpush.msra.mxu0 0.0
      %1553 = vmatpush.msra.mxu0 0.0
      %1554 = vmatpush.msra.mxu0 0.0
      %1555 = vmatpush.msra.mxu0 0.0
      %1556 = vmatpush.msra.mxu0 0.0
      %1557 = vmatpush.msra.mxu0 0.0
      %1558 = vmatpush.msra.mxu0 0.0
      %1559 = vmatpush.msra.mxu0 0.0
      %1560 = vmatpush.msra.mxu0 0.0
      %1561 = vmatpush.msra.mxu0 0.0
      %1562 = vmatpush.msra.mxu0 0.0
      %1563 = vmatpush.msra.mxu0 0.0
      %1564 = vmatpush.msra.mxu0 0.0
      %1565 = vmatpush.msra.mxu0 0.0
      %1566 = vmatpush.msra.mxu0 0.0
      %1567 = vmatpush.msra.mxu0 %v1307
      %1568 = vmatmul.f32.gmra.mxu0 %v1490
      %v1569 = vpop.f32.mrf.mxu0
      %v1570 = vadd.f32 0.0, %v1569
      %1571 = vdwg.mxu0
      %v1572 = vmul.f32 %v1391, %v1510
      %v1573 = vmul.f32 %v1392, %v1530
      %v1574 = vmul.f32 %v1393, %v1550
      %v1575 = vmul.f32 %v1394, %v1570
      %v1576 = vld [vmem:[%s6] sm:$0xf]
      %v1578 = vperm.slane %v1576, 0
      %v1579 = vperm.slane %v1576, 1
      %v1580 = vperm.slane %v1576, 2
      %v1581 = vperm.slane %v1576, 3
      %v1586 = vmul.f32 %v1572, %v1578
      %v1587 = vmul.f32 %v1573, %v1579
      %v1588 = vmul.f32 %v1574, %v1580
      %v1589 = vmul.f32 %v1575, %v1581
      %v1590 = vld [vmem:[%s7] sm:$0xf]
      %v1592 = vperm.slane %v1590, 0
      %v1593 = vperm.slane %v1590, 1
      %v1594 = vperm.slane %v1590, 2
      %v1595 = vperm.slane %v1590, 3
      %v1600 = vadd.f32 %v1586, %v1592
      %v1601 = vadd.f32 %v1587, %v1593
      %v1602 = vadd.f32 %v1588, %v1594
      %v1603 = vadd.f32 %v1589, %v1595
      %vm1604 = vcmp.ge.f32.partialorder %v1600, 0.0
      %vm1605 = vcmp.ge.f32.partialorder %v1601, 0.0
      %vm1606 = vcmp.ge.f32.partialorder %v1602, 0.0
      %vm1607 = vcmp.ge.f32.partialorder %v1603, 0.0
      %v1608 = vmul.f32 %v1600, 0.01
      %v1609 = vmul.f32 %v1601, 0.01
      %v1610 = vmul.f32 %v1602, 0.01
      %v1611 = vmul.f32 %v1603, 0.01
      %v1612 = vsel %vm1604, %v1600, %v1608
      %v1613 = vsel %vm1605, %v1601, %v1609
      %v1614 = vsel %vm1606, %v1602, %v1610
      %v1615 = vsel %vm1607, %v1603, %v1611
      %v1616 = vld [vmem:[%s10] sm:$0xff]
      %v1617 = vld [vmem:[%s10 + $0x8] sm:$0xff]
      %v1618 = vld [vmem:[%s10 + $0x10] sm:$0xff]
      %v1619 = vld [vmem:[%s10 + $0x18] sm:$0xff]
      %v1620 = vld [vmem:[%s10 + $0x20] sm:$0xff]
      %v1621 = vld [vmem:[%s10 + $0x28] sm:$0xff]
      %v1622 = vld [vmem:[%s10 + $0x30] sm:$0xff]
      %v1623 = vld [vmem:[%s10 + $0x38] sm:$0xff]
      %v1625 = vsel %vm663, %v1612, 0
      %1627 = vmatpush.msra.mxu0 0.0
      %1628 = vmatpush.msra.mxu0 0.0
      %1629 = vmatpush.msra.mxu0 0.0
      %1630 = vmatpush.msra.mxu0 0.0
      %1631 = vmatpush.msra.mxu0 0.0
      %1632 = vmatpush.msra.mxu0 0.0
      %1633 = vmatpush.msra.mxu0 0.0
      %1634 = vmatpush.msra.mxu0 0.0
      %1635 = vmatpush.msra.mxu0 %v1623
      %1636 = vmatpush.msra.mxu0 %v1622
      %1637 = vmatpush.msra.mxu0 %v1621
      %1638 = vmatpush.msra.mxu0 %v1620
      %1639 = vmatpush.msra.mxu0 %v1619
      %1640 = vmatpush.msra.mxu0 %v1618
      %1641 = vmatpush.msra.mxu0 %v1617
      %1642 = vmatpush.msra.mxu0 %v1616
      %1643 = vmatmul.f32.gmra.mxu0 %v1625
      %v1644 = vpop.f32.mrf.mxu0
      %v1645 = vadd.f32 0.0, %v1644
      %1646 = vdwg.mxu0
      %v1647 = vld [vmem:[%s10 + $0x40] sm:$0xff]
      %v1648 = vld [vmem:[%s10 + $0x48] sm:$0xff]
      %v1649 = vld [vmem:[%s10 + $0x50] sm:$0xff]
      %v1650 = vld [vmem:[%s10 + $0x58] sm:$0xff]
      %v1651 = vld [vmem:[%s10 + $0x60] sm:$0xff]
      %v1652 = vld [vmem:[%s10 + $0x68] sm:$0xff]
      %v1653 = vld [vmem:[%s10 + $0x70] sm:$0xff]
      %v1654 = vld [vmem:[%s10 + $0x78] sm:$0xff]
      %1655 = vrot.lane.b32.xlu0 %v1612, 64
      %v1656 = vpop.permute.xlu0 %1655
      %v1657 = vsel %vm663, %v1656, 0
      %1659 = vmatpush.msra.mxu0 0.0
      %1660 = vmatpush.msra.mxu0 0.0
      %1661 = vmatpush.msra.mxu0 0.0
      %1662 = vmatpush.msra.mxu0 0.0
      %1663 = vmatpush.msra.mxu0 0.0
      %1664 = vmatpush.msra.mxu0 0.0
      %1665 = vmatpush.msra.mxu0 0.0
      %1666 = vmatpush.msra.mxu0 0.0
      %1667 = vmatpush.msra.mxu0 %v1654
      %1668 = vmatpush.msra.mxu0 %v1653
      %1669 = vmatpush.msra.mxu0 %v1652
      %1670 = vmatpush.msra.mxu0 %v1651
      %1671 = vmatpush.msra.mxu0 %v1650
      %1672 = vmatpush.msra.mxu0 %v1649
      %1673 = vmatpush.msra.mxu0 %v1648
      %1674 = vmatpush.msra.mxu0 %v1647
      %1675 = vmatmul.f32.gmra.mxu0 %v1657
      %v1676 = vpop.f32.mrf.mxu0
      %v1677 = vadd.f32 0.0, %v1676
      %1678 = vdwg.mxu0
      %v1679 = vld [vmem:[%s10 + $0x80] sm:$0xff]
      %v1680 = vld [vmem:[%s10 + $0x88] sm:$0xff]
      %v1681 = vld [vmem:[%s10 + $0x90] sm:$0xff]
      %v1682 = vld [vmem:[%s10 + $0x98] sm:$0xff]
      %v1683 = vld [vmem:[%s10 + $0xa0] sm:$0xff]
      %v1684 = vld [vmem:[%s10 + $0xa8] sm:$0xff]
      %v1685 = vld [vmem:[%s10 + $0xb0] sm:$0xff]
      %v1686 = vld [vmem:[%s10 + $0xb8] sm:$0xff]
      %v1688 = vsel %vm663, %v1613, 0
      %1690 = vmatpush.msra.mxu0 0.0
      %1691 = vmatpush.msra.mxu0 0.0
      %1692 = vmatpush.msra.mxu0 0.0
      %1693 = vmatpush.msra.mxu0 0.0
      %1694 = vmatpush.msra.mxu0 0.0
      %1695 = vmatpush.msra.mxu0 0.0
      %1696 = vmatpush.msra.mxu0 0.0
      %1697 = vmatpush.msra.mxu0 0.0
      %1698 = vmatpush.msra.mxu0 %v1686
      %1699 = vmatpush.msra.mxu0 %v1685
      %1700 = vmatpush.msra.mxu0 %v1684
      %1701 = vmatpush.msra.mxu0 %v1683
      %1702 = vmatpush.msra.mxu0 %v1682
      %1703 = vmatpush.msra.mxu0 %v1681
      %1704 = vmatpush.msra.mxu0 %v1680
      %1705 = vmatpush.msra.mxu0 %v1679
      %1706 = vmatmul.f32.gmra.mxu0 %v1688
      %v1707 = vpop.f32.mrf.mxu0
      %v1708 = vadd.f32 0.0, %v1707
      %1709 = vdwg.mxu0
      %v1710 = vld [vmem:[%s10 + $0xc0] sm:$0xff]
      %v1711 = vld [vmem:[%s10 + $0xc8] sm:$0xff]
      %v1712 = vld [vmem:[%s10 + $0xd0] sm:$0xff]
      %v1713 = vld [vmem:[%s10 + $0xd8] sm:$0xff]
      %v1714 = vld [vmem:[%s10 + $0xe0] sm:$0xff]
      %v1715 = vld [vmem:[%s10 + $0xe8] sm:$0xff]
      %v1716 = vld [vmem:[%s10 + $0xf0] sm:$0xff]
      %v1717 = vld [vmem:[%s10 + $0xf8] sm:$0xff]
      %1718 = vrot.lane.b32.xlu0 %v1613, 64
      %v1719 = vpop.permute.xlu0 %1718
      %v1720 = vsel %vm663, %v1719, 0
      %1722 = vmatpush.msra.mxu0 0.0
      %1723 = vmatpush.msra.mxu0 0.0
      %1724 = vmatpush.msra.mxu0 0.0
      %1725 = vmatpush.msra.mxu0 0.0
      %1726 = vmatpush.msra.mxu0 0.0
      %1727 = vmatpush.msra.mxu0 0.0
      %1728 = vmatpush.msra.mxu0 0.0
      %1729 = vmatpush.msra.mxu0 0.0
      %1730 = vmatpush.msra.mxu0 %v1717
      %1731 = vmatpush.msra.mxu0 %v1716
      %1732 = vmatpush.msra.mxu0 %v1715
      %1733 = vmatpush.msra.mxu0 %v1714
      %1734 = vmatpush.msra.mxu0 %v1713
      %1735 = vmatpush.msra.mxu0 %v1712
      %1736 = vmatpush.msra.mxu0 %v1711
      %1737 = vmatpush.msra.mxu0 %v1710
      %1738 = vmatmul.f32.gmra.mxu0 %v1720
      %v1739 = vpop.f32.mrf.mxu0
      %v1740 = vadd.f32 0.0, %v1739
      %1741 = vdwg.mxu0
      %v1742 = vld [vmem:[%s10 + $0x100] sm:$0xff]
      %v1743 = vld [vmem:[%s10 + $0x108] sm:$0xff]
      %v1744 = vld [vmem:[%s10 + $0x110] sm:$0xff]
      %v1745 = vld [vmem:[%s10 + $0x118] sm:$0xff]
      %v1746 = vld [vmem:[%s10 + $0x120] sm:$0xff]
      %v1747 = vld [vmem:[%s10 + $0x128] sm:$0xff]
      %v1748 = vld [vmem:[%s10 + $0x130] sm:$0xff]
      %v1749 = vld [vmem:[%s10 + $0x138] sm:$0xff]
      %v1751 = vsel %vm663, %v1614, 0
      %1753 = vmatpush.msra.mxu0 0.0
      %1754 = vmatpush.msra.mxu0 0.0
      %1755 = vmatpush.msra.mxu0 0.0
      %1756 = vmatpush.msra.mxu0 0.0
      %1757 = vmatpush.msra.mxu0 0.0
      %1758 = vmatpush.msra.mxu0 0.0
      %1759 = vmatpush.msra.mxu0 0.0
      %1760 = vmatpush.msra.mxu0 0.0
      %1761 = vmatpush.msra.mxu0 %v1749
      %1762 = vmatpush.msra.mxu0 %v1748
      %1763 = vmatpush.msra.mxu0 %v1747
      %1764 = vmatpush.msra.mxu0 %v1746
      %1765 = vmatpush.msra.mxu0 %v1745
      %1766 = vmatpush.msra.mxu0 %v1744
      %1767 = vmatpush.msra.mxu0 %v1743
      %1768 = vmatpush.msra.mxu0 %v1742
      %1769 = vmatmul.f32.gmra.mxu0 %v1751
      %v1770 = vpop.f32.mrf.mxu0
      %v1771 = vadd.f32 0.0, %v1770
      %1772 = vdwg.mxu0
      %v1773 = vld [vmem:[%s10 + $0x140] sm:$0xff]
      %v1774 = vld [vmem:[%s10 + $0x148] sm:$0xff]
      %v1775 = vld [vmem:[%s10 + $0x150] sm:$0xff]
      %v1776 = vld [vmem:[%s10 + $0x158] sm:$0xff]
      %v1777 = vld [vmem:[%s10 + $0x160] sm:$0xff]
      %v1778 = vld [vmem:[%s10 + $0x168] sm:$0xff]
      %v1779 = vld [vmem:[%s10 + $0x170] sm:$0xff]
      %v1780 = vld [vmem:[%s10 + $0x178] sm:$0xff]
      %1781 = vrot.lane.b32.xlu0 %v1614, 64
      %v1782 = vpop.permute.xlu0 %1781
      %v1783 = vsel %vm663, %v1782, 0
      %1785 = vmatpush.msra.mxu0 0.0
      %1786 = vmatpush.msra.mxu0 0.0
      %1787 = vmatpush.msra.mxu0 0.0
      %1788 = vmatpush.msra.mxu0 0.0
      %1789 = vmatpush.msra.mxu0 0.0
      %1790 = vmatpush.msra.mxu0 0.0
      %1791 = vmatpush.msra.mxu0 0.0
      %1792 = vmatpush.msra.mxu0 0.0
      %1793 = vmatpush.msra.mxu0 %v1780
      %1794 = vmatpush.msra.mxu0 %v1779
      %1795 = vmatpush.msra.mxu0 %v1778
      %1796 = vmatpush.msra.mxu0 %v1777
      %1797 = vmatpush.msra.mxu0 %v1776
      %1798 = vmatpush.msra.mxu0 %v1775
      %1799 = vmatpush.msra.mxu0 %v1774
      %1800 = vmatpush.msra.mxu0 %v1773
      %1801 = vmatmul.f32.gmra.mxu0 %v1783
      %v1802 = vpop.f32.mrf.mxu0
      %v1803 = vadd.f32 0.0, %v1802
      %1804 = vdwg.mxu0
      %v1805 = vld [vmem:[%s10 + $0x180] sm:$0xff]
      %v1806 = vld [vmem:[%s10 + $0x188] sm:$0xff]
      %v1807 = vld [vmem:[%s10 + $0x190] sm:$0xff]
      %v1808 = vld [vmem:[%s10 + $0x198] sm:$0xff]
      %v1809 = vld [vmem:[%s10 + $0x1a0] sm:$0xff]
      %v1810 = vld [vmem:[%s10 + $0x1a8] sm:$0xff]
      %v1811 = vld [vmem:[%s10 + $0x1b0] sm:$0xff]
      %v1812 = vld [vmem:[%s10 + $0x1b8] sm:$0xff]
      %v1814 = vsel %vm663, %v1615, 0
      %1816 = vmatpush.msra.mxu0 0.0
      %1817 = vmatpush.msra.mxu0 0.0
      %1818 = vmatpush.msra.mxu0 0.0
      %1819 = vmatpush.msra.mxu0 0.0
      %1820 = vmatpush.msra.mxu0 0.0
      %1821 = vmatpush.msra.mxu0 0.0
      %1822 = vmatpush.msra.mxu0 0.0
      %1823 = vmatpush.msra.mxu0 0.0
      %1824 = vmatpush.msra.mxu0 %v1812
      %1825 = vmatpush.msra.mxu0 %v1811
      %1826 = vmatpush.msra.mxu0 %v1810
      %1827 = vmatpush.msra.mxu0 %v1809
      %1828 = vmatpush.msra.mxu0 %v1808
      %1829 = vmatpush.msra.mxu0 %v1807
      %1830 = vmatpush.msra.mxu0 %v1806
      %1831 = vmatpush.msra.mxu0 %v1805
      %1832 = vmatmul.f32.gmra.mxu0 %v1814
      %v1833 = vpop.f32.mrf.mxu0
      %v1834 = vadd.f32 0.0, %v1833
      %1835 = vdwg.mxu0
      %v1836 = vld [vmem:[%s10 + $0x1c0] sm:$0xff]
      %v1837 = vld [vmem:[%s10 + $0x1c8] sm:$0xff]
      %v1838 = vld [vmem:[%s10 + $0x1d0] sm:$0xff]
      %v1839 = vld [vmem:[%s10 + $0x1d8] sm:$0xff]
      %v1840 = vld [vmem:[%s10 + $0x1e0] sm:$0xff]
      %v1841 = vld [vmem:[%s10 + $0x1e8] sm:$0xff]
      %v1842 = vld [vmem:[%s10 + $0x1f0] sm:$0xff]
      %v1843 = vld [vmem:[%s10 + $0x1f8] sm:$0xff]
      %1844 = vrot.lane.b32.xlu0 %v1615, 64
      %v1845 = vpop.permute.xlu0 %1844
      %v1846 = vsel %vm663, %v1845, 0
      %1848 = vmatpush.msra.mxu0 0.0
      %1849 = vmatpush.msra.mxu0 0.0
      %1850 = vmatpush.msra.mxu0 0.0
      %1851 = vmatpush.msra.mxu0 0.0
      %1852 = vmatpush.msra.mxu0 0.0
      %1853 = vmatpush.msra.mxu0 0.0
      %1854 = vmatpush.msra.mxu0 0.0
      %1855 = vmatpush.msra.mxu0 0.0
      %1856 = vmatpush.msra.mxu0 %v1843
      %1857 = vmatpush.msra.mxu0 %v1842
      %1858 = vmatpush.msra.mxu0 %v1841
      %1859 = vmatpush.msra.mxu0 %v1840
      %1860 = vmatpush.msra.mxu0 %v1839
      %1861 = vmatpush.msra.mxu0 %v1838
      %1862 = vmatpush.msra.mxu0 %v1837
      %1863 = vmatpush.msra.mxu0 %v1836
      %1864 = vmatmul.f32.gmra.mxu0 %v1846
      %v1865 = vpop.f32.mrf.mxu0
      %v1866 = vadd.f32 0.0, %v1865
      %1867 = vdwg.mxu0
      %v1868 = vld [vmem:[%s11] sm:$0xff]
      %v1870 = vperm.slane %v1868, 0
      %v1871 = vperm.slane %v1868, 1
      %v1872 = vperm.slane %v1868, 2
      %v1873 = vperm.slane %v1868, 3
      %v1874 = vperm.slane %v1868, 4
      %v1875 = vperm.slane %v1868, 5
      %v1876 = vperm.slane %v1868, 6
      %v1877 = vperm.slane %v1868, 7
      %v1886 = vadd.f32 %v1645, %v1870
      %v1887 = vadd.f32 %v1677, %v1871
      %v1888 = vadd.f32 %v1708, %v1872
      %v1889 = vadd.f32 %v1740, %v1873
      %v1890 = vadd.f32 %v1771, %v1874
      %v1891 = vadd.f32 %v1803, %v1875
      %v1892 = vadd.f32 %v1834, %v1876
      %v1893 = vadd.f32 %v1866, %v1877
      %v1894 = vld [vmem:[%s14] sm:$0xff]
      %v1895 = vld [vmem:[%s14 + $0x8] sm:$0xff]
      %v1896 = vld [vmem:[%s14 + $0x10] sm:$0xff]
      %v1897 = vld [vmem:[%s14 + $0x18] sm:$0xff]
      %v1898 = vld [vmem:[%s14 + $0x20] sm:$0xff]
      %v1899 = vld [vmem:[%s14 + $0x28] sm:$0xff]
      %v1900 = vld [vmem:[%s14 + $0x30] sm:$0xff]
      %v1901 = vld [vmem:[%s14 + $0x38] sm:$0xff]
      %v1902 = vld [vmem:[%s14 + $0x40] sm:$0xff]
      %v1903 = vld [vmem:[%s14 + $0x48] sm:$0xff]
      %v1904 = vld [vmem:[%s14 + $0x50] sm:$0xff]
      %v1905 = vld [vmem:[%s14 + $0x58] sm:$0xff]
      %v1906 = vld [vmem:[%s14 + $0x60] sm:$0xff]
      %v1907 = vld [vmem:[%s14 + $0x68] sm:$0xff]
      %v1908 = vld [vmem:[%s14 + $0x70] sm:$0xff]
      %v1909 = vld [vmem:[%s14 + $0x78] sm:$0xff]
      %v1910 = vld [vmem:[%s14 + $0x80] sm:$0xff]
      %v1911 = vld [vmem:[%s14 + $0x88] sm:$0xff]
      %v1912 = vld [vmem:[%s14 + $0x90] sm:$0xff]
      %v1913 = vld [vmem:[%s14 + $0x98] sm:$0xff]
      %v1914 = vld [vmem:[%s14 + $0xa0] sm:$0xff]
      %v1915 = vld [vmem:[%s14 + $0xa8] sm:$0xff]
      %v1916 = vld [vmem:[%s14 + $0xb0] sm:$0xff]
      %v1917 = vld [vmem:[%s14 + $0xb8] sm:$0xff]
      %v1918 = vld [vmem:[%s14 + $0xc0] sm:$0xff]
      %v1919 = vld [vmem:[%s14 + $0xc8] sm:$0xff]
      %v1920 = vld [vmem:[%s14 + $0xd0] sm:$0xff]
      %v1921 = vld [vmem:[%s14 + $0xd8] sm:$0xff]
      %v1922 = vld [vmem:[%s14 + $0xe0] sm:$0xff]
      %v1923 = vld [vmem:[%s14 + $0xe8] sm:$0xff]
      %v1924 = vld [vmem:[%s14 + $0xf0] sm:$0xff]
      %v1925 = vld [vmem:[%s14 + $0xf8] sm:$0xff]
      %v1926 = vld [vmem:[%s14 + $0x100] sm:$0xff]
      %v1927 = vld [vmem:[%s14 + $0x108] sm:$0xff]
      %v1928 = vld [vmem:[%s14 + $0x110] sm:$0xff]
      %v1929 = vld [vmem:[%s14 + $0x118] sm:$0xff]
      %v1930 = vld [vmem:[%s14 + $0x120] sm:$0xff]
      %v1931 = vld [vmem:[%s14 + $0x128] sm:$0xff]
      %v1932 = vld [vmem:[%s14 + $0x130] sm:$0xff]
      %v1933 = vld [vmem:[%s14 + $0x138] sm:$0xff]
      %v1934 = vld [vmem:[%s14 + $0x140] sm:$0xff]
      %v1935 = vld [vmem:[%s14 + $0x148] sm:$0xff]
      %v1936 = vld [vmem:[%s14 + $0x150] sm:$0xff]
      %v1937 = vld [vmem:[%s14 + $0x158] sm:$0xff]
      %v1938 = vld [vmem:[%s14 + $0x160] sm:$0xff]
      %v1939 = vld [vmem:[%s14 + $0x168] sm:$0xff]
      %v1940 = vld [vmem:[%s14 + $0x170] sm:$0xff]
      %v1941 = vld [vmem:[%s14 + $0x178] sm:$0xff]
      %v1942 = vld [vmem:[%s14 + $0x180] sm:$0xff]
      %v1943 = vld [vmem:[%s14 + $0x188] sm:$0xff]
      %v1944 = vld [vmem:[%s14 + $0x190] sm:$0xff]
      %v1945 = vld [vmem:[%s14 + $0x198] sm:$0xff]
      %v1946 = vld [vmem:[%s14 + $0x1a0] sm:$0xff]
      %v1947 = vld [vmem:[%s14 + $0x1a8] sm:$0xff]
      %v1948 = vld [vmem:[%s14 + $0x1b0] sm:$0xff]
      %v1949 = vld [vmem:[%s14 + $0x1b8] sm:$0xff]
      %v1950 = vld [vmem:[%s14 + $0x1c0] sm:$0xff]
      %v1951 = vld [vmem:[%s14 + $0x1c8] sm:$0xff]
      %v1952 = vld [vmem:[%s14 + $0x1d0] sm:$0xff]
      %v1953 = vld [vmem:[%s14 + $0x1d8] sm:$0xff]
      %v1954 = vld [vmem:[%s14 + $0x1e0] sm:$0xff]
      %v1955 = vld [vmem:[%s14 + $0x1e8] sm:$0xff]
      %v1956 = vld [vmem:[%s14 + $0x1f0] sm:$0xff]
      %v1957 = vld [vmem:[%s14 + $0x1f8] sm:$0xff]
      %v1958 = vld [vmem:[%s14 + $0x200] sm:$0xff]
      %v1959 = vld [vmem:[%s14 + $0x208] sm:$0xff]
      %v1960 = vld [vmem:[%s14 + $0x210] sm:$0xff]
      %v1961 = vld [vmem:[%s14 + $0x218] sm:$0xff]
      %v1962 = vld [vmem:[%s14 + $0x220] sm:$0xff]
      %v1963 = vld [vmem:[%s14 + $0x228] sm:$0xff]
      %v1964 = vld [vmem:[%s14 + $0x230] sm:$0xff]
      %v1965 = vld [vmem:[%s14 + $0x238] sm:$0xff]
      %v1966 = vld [vmem:[%s14 + $0x240] sm:$0xff]
      %v1967 = vld [vmem:[%s14 + $0x248] sm:$0xff]
      %v1968 = vld [vmem:[%s14 + $0x250] sm:$0xff]
      %v1969 = vld [vmem:[%s14 + $0x258] sm:$0xff]
      %v1970 = vld [vmem:[%s14 + $0x260] sm:$0xff]
      %v1971 = vld [vmem:[%s14 + $0x268] sm:$0xff]
      %v1972 = vld [vmem:[%s14 + $0x270] sm:$0xff]
      %v1973 = vld [vmem:[%s14 + $0x278] sm:$0xff]
      %v1974 = vld [vmem:[%s14 + $0x280] sm:$0xff]
      %v1975 = vld [vmem:[%s14 + $0x288] sm:$0xff]
      %v1976 = vld [vmem:[%s14 + $0x290] sm:$0xff]
      %v1977 = vld [vmem:[%s14 + $0x298] sm:$0xff]
      %v1978 = vld [vmem:[%s14 + $0x2a0] sm:$0xff]
      %v1979 = vld [vmem:[%s14 + $0x2a8] sm:$0xff]
      %v1980 = vld [vmem:[%s14 + $0x2b0] sm:$0xff]
      %v1981 = vld [vmem:[%s14 + $0x2b8] sm:$0xff]
      %v1982 = vld [vmem:[%s14 + $0x2c0] sm:$0xff]
      %v1983 = vld [vmem:[%s14 + $0x2c8] sm:$0xff]
      %v1984 = vld [vmem:[%s14 + $0x2d0] sm:$0xff]
      %v1985 = vld [vmem:[%s14 + $0x2d8] sm:$0xff]
      %v1986 = vld [vmem:[%s14 + $0x2e0] sm:$0xff]
      %v1987 = vld [vmem:[%s14 + $0x2e8] sm:$0xff]
      %v1988 = vld [vmem:[%s14 + $0x2f0] sm:$0xff]
      %v1989 = vld [vmem:[%s14 + $0x2f8] sm:$0xff]
      %v1990 = vld [vmem:[%s14 + $0x300] sm:$0xff]
      %v1991 = vld [vmem:[%s14 + $0x308] sm:$0xff]
      %v1992 = vld [vmem:[%s14 + $0x310] sm:$0xff]
      %v1993 = vld [vmem:[%s14 + $0x318] sm:$0xff]
      %v1994 = vld [vmem:[%s14 + $0x320] sm:$0xff]
      %v1995 = vld [vmem:[%s14 + $0x328] sm:$0xff]
      %v1996 = vld [vmem:[%s14 + $0x330] sm:$0xff]
      %v1997 = vld [vmem:[%s14 + $0x338] sm:$0xff]
      %v1998 = vld [vmem:[%s14 + $0x340] sm:$0xff]
      %v1999 = vld [vmem:[%s14 + $0x348] sm:$0xff]
      %v2000 = vld [vmem:[%s14 + $0x350] sm:$0xff]
      %v2001 = vld [vmem:[%s14 + $0x358] sm:$0xff]
      %v2002 = vld [vmem:[%s14 + $0x360] sm:$0xff]
      %v2003 = vld [vmem:[%s14 + $0x368] sm:$0xff]
      %v2004 = vld [vmem:[%s14 + $0x370] sm:$0xff]
      %v2005 = vld [vmem:[%s14 + $0x378] sm:$0xff]
      %v2006 = vld [vmem:[%s14 + $0x380] sm:$0xff]
      %v2007 = vld [vmem:[%s14 + $0x388] sm:$0xff]
      %v2008 = vld [vmem:[%s14 + $0x390] sm:$0xff]
      %v2009 = vld [vmem:[%s14 + $0x398] sm:$0xff]
      %v2010 = vld [vmem:[%s14 + $0x3a0] sm:$0xff]
      %v2011 = vld [vmem:[%s14 + $0x3a8] sm:$0xff]
      %v2012 = vld [vmem:[%s14 + $0x3b0] sm:$0xff]
      %v2013 = vld [vmem:[%s14 + $0x3b8] sm:$0xff]
      %v2014 = vld [vmem:[%s14 + $0x3c0] sm:$0xff]
      %v2015 = vld [vmem:[%s14 + $0x3c8] sm:$0xff]
      %v2016 = vld [vmem:[%s14 + $0x3d0] sm:$0xff]
      %v2017 = vld [vmem:[%s14 + $0x3d8] sm:$0xff]
      %v2018 = vld [vmem:[%s14 + $0x3e0] sm:$0xff]
      %v2019 = vld [vmem:[%s14 + $0x3e8] sm:$0xff]
      %v2020 = vld [vmem:[%s14 + $0x3f0] sm:$0xff]
      %v2021 = vld [vmem:[%s14 + $0x3f8] sm:$0xff]
      %2022 = vmatpush.msra.mxu0 %v1909
      %2023 = vmatpush.msra.mxu0 %v1908
      %2024 = vmatpush.msra.mxu0 %v1907
      %2025 = vmatpush.msra.mxu0 %v1906
      %2026 = vmatpush.msra.mxu0 %v1905
      %2027 = vmatpush.msra.mxu0 %v1904
      %2028 = vmatpush.msra.mxu0 %v1903
      %2029 = vmatpush.msra.mxu0 %v1902
      %2030 = vmatpush.msra.mxu0 %v1901
      %2031 = vmatpush.msra.mxu0 %v1900
      %2032 = vmatpush.msra.mxu0 %v1899
      %2033 = vmatpush.msra.mxu0 %v1898
      %2034 = vmatpush.msra.mxu0 %v1897
      %2035 = vmatpush.msra.mxu0 %v1896
      %2036 = vmatpush.msra.mxu0 %v1895
      %2037 = vmatpush.msra.mxu0 %v1894
      %2038 = vmatmul.f32.gmra.mxu0 %v1886
      %v2039 = vpop.f32.mrf.mxu0
      %v2040 = vadd.f32 0.0, %v2039
      %2041 = vdwg.mxu0
      %2042 = vmatpush.msra.mxu0 %v1925
      %2043 = vmatpush.msra.mxu0 %v1924
      %2044 = vmatpush.msra.mxu0 %v1923
      %2045 = vmatpush.msra.mxu0 %v1922
      %2046 = vmatpush.msra.mxu0 %v1921
      %2047 = vmatpush.msra.mxu0 %v1920
      %2048 = vmatpush.msra.mxu0 %v1919
      %2049 = vmatpush.msra.mxu0 %v1918
      %2050 = vmatpush.msra.mxu0 %v1917
      %2051 = vmatpush.msra.mxu0 %v1916
      %2052 = vmatpush.msra.mxu0 %v1915
      %2053 = vmatpush.msra.mxu0 %v1914
      %2054 = vmatpush.msra.mxu0 %v1913
      %2055 = vmatpush.msra.mxu0 %v1912
      %2056 = vmatpush.msra.mxu0 %v1911
      %2057 = vmatpush.msra.mxu0 %v1910
      %2058 = vmatmul.f32.gmra.mxu0 %v1887
      %v2059 = vpop.f32.mrf.mxu0
      %v2060 = vadd.f32 %v2040, %v2059
      %2061 = vdwg.mxu0
      %2062 = vmatpush.msra.mxu0 %v1941
      %2063 = vmatpush.msra.mxu0 %v1940
      %2064 = vmatpush.msra.mxu0 %v1939
      %2065 = vmatpush.msra.mxu0 %v1938
      %2066 = vmatpush.msra.mxu0 %v1937
      %2067 = vmatpush.msra.mxu0 %v1936
      %2068 = vmatpush.msra.mxu0 %v1935
      %2069 = vmatpush.msra.mxu0 %v1934
      %2070 = vmatpush.msra.mxu0 %v1933
      %2071 = vmatpush.msra.mxu0 %v1932
      %2072 = vmatpush.msra.mxu0 %v1931
      %2073 = vmatpush.msra.mxu0 %v1930
      %2074 = vmatpush.msra.mxu0 %v1929
      %2075 = vmatpush.msra.mxu0 %v1928
      %2076 = vmatpush.msra.mxu0 %v1927
      %2077 = vmatpush.msra.mxu0 %v1926
      %2078 = vmatmul.f32.gmra.mxu0 %v1888
      %v2079 = vpop.f32.mrf.mxu0
      %v2080 = vadd.f32 %v2060, %v2079
      %2081 = vdwg.mxu0
      %2082 = vmatpush.msra.mxu0 %v1957
      %2083 = vmatpush.msra.mxu0 %v1956
      %2084 = vmatpush.msra.mxu0 %v1955
      %2085 = vmatpush.msra.mxu0 %v1954
      %2086 = vmatpush.msra.mxu0 %v1953
      %2087 = vmatpush.msra.mxu0 %v1952
      %2088 = vmatpush.msra.mxu0 %v1951
      %2089 = vmatpush.msra.mxu0 %v1950
      %2090 = vmatpush.msra.mxu0 %v1949
      %2091 = vmatpush.msra.mxu0 %v1948
      %2092 = vmatpush.msra.mxu0 %v1947
      %2093 = vmatpush.msra.mxu0 %v1946
      %2094 = vmatpush.msra.mxu0 %v1945
      %2095 = vmatpush.msra.mxu0 %v1944
      %2096 = vmatpush.msra.mxu0 %v1943
      %2097 = vmatpush.msra.mxu0 %v1942
      %2098 = vmatmul.f32.gmra.mxu0 %v1889
      %v2099 = vpop.f32.mrf.mxu0
      %v2100 = vadd.f32 %v2080, %v2099
      %2101 = vdwg.mxu0
      %2102 = vmatpush.msra.mxu0 %v1973
      %2103 = vmatpush.msra.mxu0 %v1972
      %2104 = vmatpush.msra.mxu0 %v1971
      %2105 = vmatpush.msra.mxu0 %v1970
      %2106 = vmatpush.msra.mxu0 %v1969
      %2107 = vmatpush.msra.mxu0 %v1968
      %2108 = vmatpush.msra.mxu0 %v1967
      %2109 = vmatpush.msra.mxu0 %v1966
      %2110 = vmatpush.msra.mxu0 %v1965
      %2111 = vmatpush.msra.mxu0 %v1964
      %2112 = vmatpush.msra.mxu0 %v1963
      %2113 = vmatpush.msra.mxu0 %v1962
      %2114 = vmatpush.msra.mxu0 %v1961
      %2115 = vmatpush.msra.mxu0 %v1960
      %2116 = vmatpush.msra.mxu0 %v1959
      %2117 = vmatpush.msra.mxu0 %v1958
      %2118 = vmatmul.f32.gmra.mxu0 %v1890
      %v2119 = vpop.f32.mrf.mxu0
      %v2120 = vadd.f32 %v2100, %v2119
      %2121 = vdwg.mxu0
      %2122 = vmatpush.msra.mxu0 %v1989
      %2123 = vmatpush.msra.mxu0 %v1988
      %2124 = vmatpush.msra.mxu0 %v1987
      %2125 = vmatpush.msra.mxu0 %v1986
      %2126 = vmatpush.msra.mxu0 %v1985
      %2127 = vmatpush.msra.mxu0 %v1984
      %2128 = vmatpush.msra.mxu0 %v1983
      %2129 = vmatpush.msra.mxu0 %v1982
      %2130 = vmatpush.msra.mxu0 %v1981
      %2131 = vmatpush.msra.mxu0 %v1980
      %2132 = vmatpush.msra.mxu0 %v1979
      %2133 = vmatpush.msra.mxu0 %v1978
      %2134 = vmatpush.msra.mxu0 %v1977
      %2135 = vmatpush.msra.mxu0 %v1976
      %2136 = vmatpush.msra.mxu0 %v1975
      %2137 = vmatpush.msra.mxu0 %v1974
      %2138 = vmatmul.f32.gmra.mxu0 %v1891
      %v2139 = vpop.f32.mrf.mxu0
      %v2140 = vadd.f32 %v2120, %v2139
      %2141 = vdwg.mxu0
      %2142 = vmatpush.msra.mxu0 %v2005
      %2143 = vmatpush.msra.mxu0 %v2004
      %2144 = vmatpush.msra.mxu0 %v2003
      %2145 = vmatpush.msra.mxu0 %v2002
      %2146 = vmatpush.msra.mxu0 %v2001
      %2147 = vmatpush.msra.mxu0 %v2000
      %2148 = vmatpush.msra.mxu0 %v1999
      %2149 = vmatpush.msra.mxu0 %v1998
      %2150 = vmatpush.msra.mxu0 %v1997
      %2151 = vmatpush.msra.mxu0 %v1996
      %2152 = vmatpush.msra.mxu0 %v1995
      %2153 = vmatpush.msra.mxu0 %v1994
      %2154 = vmatpush.msra.mxu0 %v1993
      %2155 = vmatpush.msra.mxu0 %v1992
      %2156 = vmatpush.msra.mxu0 %v1991
      %2157 = vmatpush.msra.mxu0 %v1990
      %2158 = vmatmul.f32.gmra.mxu0 %v1892
      %v2159 = vpop.f32.mrf.mxu0
      %v2160 = vadd.f32 %v2140, %v2159
      %2161 = vdwg.mxu0
      %2162 = vmatpush.msra.mxu0 %v2021
      %2163 = vmatpush.msra.mxu0 %v2020
      %2164 = vmatpush.msra.mxu0 %v2019
      %2165 = vmatpush.msra.mxu0 %v2018
      %2166 = vmatpush.msra.mxu0 %v2017
      %2167 = vmatpush.msra.mxu0 %v2016
      %2168 = vmatpush.msra.mxu0 %v2015
      %2169 = vmatpush.msra.mxu0 %v2014
      %2170 = vmatpush.msra.mxu0 %v2013
      %2171 = vmatpush.msra.mxu0 %v2012
      %2172 = vmatpush.msra.mxu0 %v2011
      %2173 = vmatpush.msra.mxu0 %v2010
      %2174 = vmatpush.msra.mxu0 %v2009
      %2175 = vmatpush.msra.mxu0 %v2008
      %2176 = vmatpush.msra.mxu0 %v2007
      %2177 = vmatpush.msra.mxu0 %v2006
      %2178 = vmatmul.f32.gmra.mxu0 %v1893
      %v2179 = vpop.f32.mrf.mxu0
      %v2180 = vadd.f32 %v2160, %v2179
      %2181 = vdwg.mxu0
      %v2182 = vld [vmem:[%s15] sm:$0xff]
      %v2183 = vld [vmem:[%s15 + $0x8] sm:$0xff]
      %v2184 = vld [vmem:[%s15 + $0x10] sm:$0xff]
      %v2185 = vld [vmem:[%s15 + $0x18] sm:$0xff]
      %v2186 = vld [vmem:[%s15 + $0x20] sm:$0xff]
      %v2187 = vld [vmem:[%s15 + $0x28] sm:$0xff]
      %v2188 = vld [vmem:[%s15 + $0x30] sm:$0xff]
      %v2189 = vld [vmem:[%s15 + $0x38] sm:$0xff]
      %v2191 = vsel %vm842, %v2180, 0
      %2193 = vmatpush.msra.mxu0 0.0
      %2194 = vmatpush.msra.mxu0 0.0
      %2195 = vmatpush.msra.mxu0 0.0
      %2196 = vmatpush.msra.mxu0 0.0
      %2197 = vmatpush.msra.mxu0 0.0
      %2198 = vmatpush.msra.mxu0 0.0
      %2199 = vmatpush.msra.mxu0 0.0
      %2200 = vmatpush.msra.mxu0 0.0
      %2201 = vmatpush.msra.mxu0 0.0
      %2202 = vmatpush.msra.mxu0 0.0
      %2203 = vmatpush.msra.mxu0 0.0
      %2204 = vmatpush.msra.mxu0 0.0
      %2205 = vmatpush.msra.mxu0 0.0
      %2206 = vmatpush.msra.mxu0 0.0
      %2207 = vmatpush.msra.mxu0 0.0
      %2208 = vmatpush.msra.mxu0 %v2182
      %2209 = vmatmul.f32.gmra.mxu0 %v2191
      %v2210 = vpop.f32.mrf.mxu0
      %v2211 = vadd.f32 0.0, %v2210
      %2212 = vdwg.mxu0
      %2213 = vmatpush.msra.mxu0 0.0
      %2214 = vmatpush.msra.mxu0 0.0
      %2215 = vmatpush.msra.mxu0 0.0
      %2216 = vmatpush.msra.mxu0 0.0
      %2217 = vmatpush.msra.mxu0 0.0
      %2218 = vmatpush.msra.mxu0 0.0
      %2219 = vmatpush.msra.mxu0 0.0
      %2220 = vmatpush.msra.mxu0 0.0
      %2221 = vmatpush.msra.mxu0 0.0
      %2222 = vmatpush.msra.mxu0 0.0
      %2223 = vmatpush.msra.mxu0 0.0
      %2224 = vmatpush.msra.mxu0 0.0
      %2225 = vmatpush.msra.mxu0 0.0
      %2226 = vmatpush.msra.mxu0 0.0
      %2227 = vmatpush.msra.mxu0 0.0
      %2228 = vmatpush.msra.mxu0 %v2183
      %2229 = vmatmul.f32.gmra.mxu0 %v2191
      %v2230 = vpop.f32.mrf.mxu0
      %v2231 = vadd.f32 0.0, %v2230
      %2232 = vdwg.mxu0
      %2233 = vmatpush.msra.mxu0 0.0
      %2234 = vmatpush.msra.mxu0 0.0
      %2235 = vmatpush.msra.mxu0 0.0
      %2236 = vmatpush.msra.mxu0 0.0
      %2237 = vmatpush.msra.mxu0 0.0
      %2238 = vmatpush.msra.mxu0 0.0
      %2239 = vmatpush.msra.mxu0 0.0
      %2240 = vmatpush.msra.mxu0 0.0
      %2241 = vmatpush.msra.mxu0 0.0
      %2242 = vmatpush.msra.mxu0 0.0
      %2243 = vmatpush.msra.mxu0 0.0
      %2244 = vmatpush.msra.mxu0 0.0
      %2245 = vmatpush.msra.mxu0 0.0
      %2246 = vmatpush.msra.mxu0 0.0
      %2247 = vmatpush.msra.mxu0 0.0
      %2248 = vmatpush.msra.mxu0 %v2184
      %2249 = vmatmul.f32.gmra.mxu0 %v2191
      %v2250 = vpop.f32.mrf.mxu0
      %v2251 = vadd.f32 0.0, %v2250
      %2252 = vdwg.mxu0
      %2253 = vmatpush.msra.mxu0 0.0
      %2254 = vmatpush.msra.mxu0 0.0
      %2255 = vmatpush.msra.mxu0 0.0
      %2256 = vmatpush.msra.mxu0 0.0
      %2257 = vmatpush.msra.mxu0 0.0
      %2258 = vmatpush.msra.mxu0 0.0
      %2259 = vmatpush.msra.mxu0 0.0
      %2260 = vmatpush.msra.mxu0 0.0
      %2261 = vmatpush.msra.mxu0 0.0
      %2262 = vmatpush.msra.mxu0 0.0
      %2263 = vmatpush.msra.mxu0 0.0
      %2264 = vmatpush.msra.mxu0 0.0
      %2265 = vmatpush.msra.mxu0 0.0
      %2266 = vmatpush.msra.mxu0 0.0
      %2267 = vmatpush.msra.mxu0 0.0
      %2268 = vmatpush.msra.mxu0 %v2185
      %2269 = vmatmul.f32.gmra.mxu0 %v2191
      %v2270 = vpop.f32.mrf.mxu0
      %v2271 = vadd.f32 0.0, %v2270
      %2272 = vdwg.mxu0
      %2273 = vmatpush.msra.mxu0 0.0
      %2274 = vmatpush.msra.mxu0 0.0
      %2275 = vmatpush.msra.mxu0 0.0
      %2276 = vmatpush.msra.mxu0 0.0
      %2277 = vmatpush.msra.mxu0 0.0
      %2278 = vmatpush.msra.mxu0 0.0
      %2279 = vmatpush.msra.mxu0 0.0
      %2280 = vmatpush.msra.mxu0 0.0
      %2281 = vmatpush.msra.mxu0 0.0
      %2282 = vmatpush.msra.mxu0 0.0
      %2283 = vmatpush.msra.mxu0 0.0
      %2284 = vmatpush.msra.mxu0 0.0
      %2285 = vmatpush.msra.mxu0 0.0
      %2286 = vmatpush.msra.mxu0 0.0
      %2287 = vmatpush.msra.mxu0 0.0
      %2288 = vmatpush.msra.mxu0 %v2186
      %2289 = vmatmul.f32.gmra.mxu0 %v2191
      %v2290 = vpop.f32.mrf.mxu0
      %v2291 = vadd.f32 0.0, %v2290
      %2292 = vdwg.mxu0
      %2293 = vmatpush.msra.mxu0 0.0
      %2294 = vmatpush.msra.mxu0 0.0
      %2295 = vmatpush.msra.mxu0 0.0
      %2296 = vmatpush.msra.mxu0 0.0
      %2297 = vmatpush.msra.mxu0 0.0
      %2298 = vmatpush.msra.mxu0 0.0
      %2299 = vmatpush.msra.mxu0 0.0
      %2300 = vmatpush.msra.mxu0 0.0
      %2301 = vmatpush.msra.mxu0 0.0
      %2302 = vmatpush.msra.mxu0 0.0
      %2303 = vmatpush.msra.mxu0 0.0
      %2304 = vmatpush.msra.mxu0 0.0
      %2305 = vmatpush.msra.mxu0 0.0
      %2306 = vmatpush.msra.mxu0 0.0
      %2307 = vmatpush.msra.mxu0 0.0
      %2308 = vmatpush.msra.mxu0 %v2187
      %2309 = vmatmul.f32.gmra.mxu0 %v2191
      %v2310 = vpop.f32.mrf.mxu0
      %v2311 = vadd.f32 0.0, %v2310
      %2312 = vdwg.mxu0
      %2313 = vmatpush.msra.mxu0 0.0
      %2314 = vmatpush.msra.mxu0 0.0
      %2315 = vmatpush.msra.mxu0 0.0
      %2316 = vmatpush.msra.mxu0 0.0
      %2317 = vmatpush.msra.mxu0 0.0
      %2318 = vmatpush.msra.mxu0 0.0
      %2319 = vmatpush.msra.mxu0 0.0
      %2320 = vmatpush.msra.mxu0 0.0
      %2321 = vmatpush.msra.mxu0 0.0
      %2322 = vmatpush.msra.mxu0 0.0
      %2323 = vmatpush.msra.mxu0 0.0
      %2324 = vmatpush.msra.mxu0 0.0
      %2325 = vmatpush.msra.mxu0 0.0
      %2326 = vmatpush.msra.mxu0 0.0
      %2327 = vmatpush.msra.mxu0 0.0
      %2328 = vmatpush.msra.mxu0 %v2188
      %2329 = vmatmul.f32.gmra.mxu0 %v2191
      %v2330 = vpop.f32.mrf.mxu0
      %v2331 = vadd.f32 0.0, %v2330
      %2332 = vdwg.mxu0
      %2333 = vmatpush.msra.mxu0 0.0
      %2334 = vmatpush.msra.mxu0 0.0
      %2335 = vmatpush.msra.mxu0 0.0
      %2336 = vmatpush.msra.mxu0 0.0
      %2337 = vmatpush.msra.mxu0 0.0
      %2338 = vmatpush.msra.mxu0 0.0
      %2339 = vmatpush.msra.mxu0 0.0
      %2340 = vmatpush.msra.mxu0 0.0
      %2341 = vmatpush.msra.mxu0 0.0
      %2342 = vmatpush.msra.mxu0 0.0
      %2343 = vmatpush.msra.mxu0 0.0
      %2344 = vmatpush.msra.mxu0 0.0
      %2345 = vmatpush.msra.mxu0 0.0
      %2346 = vmatpush.msra.mxu0 0.0
      %2347 = vmatpush.msra.mxu0 0.0
      %2348 = vmatpush.msra.mxu0 %v2189
      %2349 = vmatmul.f32.gmra.mxu0 %v2191
      %v2350 = vpop.f32.mrf.mxu0
      %v2351 = vadd.f32 0.0, %v2350
      %2352 = vdwg.mxu0
      %v2353 = vsub.f32 %v1886, %v2211
      %v2354 = vsub.f32 %v1887, %v2231
      %v2355 = vsub.f32 %v1888, %v2251
      %v2356 = vsub.f32 %v1889, %v2271
      %v2357 = vsub.f32 %v1890, %v2291
      %v2358 = vsub.f32 %v1891, %v2311
      %v2359 = vsub.f32 %v1892, %v2331
      %v2360 = vsub.f32 %v1893, %v2351
      %v2361 = vmul.f32 %v2353, %v2353
      %v2362 = vmul.f32 %v2354, %v2354
      %v2363 = vmul.f32 %v2355, %v2355
      %v2364 = vmul.f32 %v2356, %v2356
      %v2365 = vmul.f32 %v2357, %v2357
      %v2366 = vmul.f32 %v2358, %v2358
      %v2367 = vmul.f32 %v2359, %v2359
      %v2368 = vmul.f32 %v2360, %v2360
      %2369 = vmatpush.msra.mxu0 %v1909
      %2370 = vmatpush.msra.mxu0 %v1908
      %2371 = vmatpush.msra.mxu0 %v1907
      %2372 = vmatpush.msra.mxu0 %v1906
      %2373 = vmatpush.msra.mxu0 %v1905
      %2374 = vmatpush.msra.mxu0 %v1904
      %2375 = vmatpush.msra.mxu0 %v1903
      %2376 = vmatpush.msra.mxu0 %v1902
      %2377 = vmatpush.msra.mxu0 %v1901
      %2378 = vmatpush.msra.mxu0 %v1900
      %2379 = vmatpush.msra.mxu0 %v1899
      %2380 = vmatpush.msra.mxu0 %v1898
      %2381 = vmatpush.msra.mxu0 %v1897
      %2382 = vmatpush.msra.mxu0 %v1896
      %2383 = vmatpush.msra.mxu0 %v1895
      %2384 = vmatpush.msra.mxu0 %v1894
      %2385 = vmatmul.f32.gmra.mxu0 %v2361
      %v2386 = vpop.f32.mrf.mxu0
      %v2387 = vadd.f32 1e-05, %v2386
      %2388 = vdwg.mxu0
      %2389 = vmatpush.msra.mxu0 %v1925
      %2390 = vmatpush.msra.mxu0 %v1924
      %2391 = vmatpush.msra.mxu0 %v1923
      %2392 = vmatpush.msra.mxu0 %v1922
      %2393 = vmatpush.msra.mxu0 %v1921
      %2394 = vmatpush.msra.mxu0 %v1920
      %2395 = vmatpush.msra.mxu0 %v1919
      %2396 = vmatpush.msra.mxu0 %v1918
      %2397 = vmatpush.msra.mxu0 %v1917
      %2398 = vmatpush.msra.mxu0 %v1916
      %2399 = vmatpush.msra.mxu0 %v1915
      %2400 = vmatpush.msra.mxu0 %v1914
      %2401 = vmatpush.msra.mxu0 %v1913
      %2402 = vmatpush.msra.mxu0 %v1912
      %2403 = vmatpush.msra.mxu0 %v1911
      %2404 = vmatpush.msra.mxu0 %v1910
      %2405 = vmatmul.f32.gmra.mxu0 %v2362
      %v2406 = vpop.f32.mrf.mxu0
      %v2407 = vadd.f32 %v2387, %v2406
      %2408 = vdwg.mxu0
      %2409 = vmatpush.msra.mxu0 %v1941
      %2410 = vmatpush.msra.mxu0 %v1940
      %2411 = vmatpush.msra.mxu0 %v1939
      %2412 = vmatpush.msra.mxu0 %v1938
      %2413 = vmatpush.msra.mxu0 %v1937
      %2414 = vmatpush.msra.mxu0 %v1936
      %2415 = vmatpush.msra.mxu0 %v1935
      %2416 = vmatpush.msra.mxu0 %v1934
      %2417 = vmatpush.msra.mxu0 %v1933
      %2418 = vmatpush.msra.mxu0 %v1932
      %2419 = vmatpush.msra.mxu0 %v1931
      %2420 = vmatpush.msra.mxu0 %v1930
      %2421 = vmatpush.msra.mxu0 %v1929
      %2422 = vmatpush.msra.mxu0 %v1928
      %2423 = vmatpush.msra.mxu0 %v1927
      %2424 = vmatpush.msra.mxu0 %v1926
      %2425 = vmatmul.f32.gmra.mxu0 %v2363
      %v2426 = vpop.f32.mrf.mxu0
      %v2427 = vadd.f32 %v2407, %v2426
      %2428 = vdwg.mxu0
      %2429 = vmatpush.msra.mxu0 %v1957
      %2430 = vmatpush.msra.mxu0 %v1956
      %2431 = vmatpush.msra.mxu0 %v1955
      %2432 = vmatpush.msra.mxu0 %v1954
      %2433 = vmatpush.msra.mxu0 %v1953
      %2434 = vmatpush.msra.mxu0 %v1952
      %2435 = vmatpush.msra.mxu0 %v1951
      %2436 = vmatpush.msra.mxu0 %v1950
      %2437 = vmatpush.msra.mxu0 %v1949
      %2438 = vmatpush.msra.mxu0 %v1948
      %2439 = vmatpush.msra.mxu0 %v1947
      %2440 = vmatpush.msra.mxu0 %v1946
      %2441 = vmatpush.msra.mxu0 %v1945
      %2442 = vmatpush.msra.mxu0 %v1944
      %2443 = vmatpush.msra.mxu0 %v1943
      %2444 = vmatpush.msra.mxu0 %v1942
      %2445 = vmatmul.f32.gmra.mxu0 %v2364
      %v2446 = vpop.f32.mrf.mxu0
      %v2447 = vadd.f32 %v2427, %v2446
      %2448 = vdwg.mxu0
      %2449 = vmatpush.msra.mxu0 %v1973
      %2450 = vmatpush.msra.mxu0 %v1972
      %2451 = vmatpush.msra.mxu0 %v1971
      %2452 = vmatpush.msra.mxu0 %v1970
      %2453 = vmatpush.msra.mxu0 %v1969
      %2454 = vmatpush.msra.mxu0 %v1968
      %2455 = vmatpush.msra.mxu0 %v1967
      %2456 = vmatpush.msra.mxu0 %v1966
      %2457 = vmatpush.msra.mxu0 %v1965
      %2458 = vmatpush.msra.mxu0 %v1964
      %2459 = vmatpush.msra.mxu0 %v1963
      %2460 = vmatpush.msra.mxu0 %v1962
      %2461 = vmatpush.msra.mxu0 %v1961
      %2462 = vmatpush.msra.mxu0 %v1960
      %2463 = vmatpush.msra.mxu0 %v1959
      %2464 = vmatpush.msra.mxu0 %v1958
      %2465 = vmatmul.f32.gmra.mxu0 %v2365
      %v2466 = vpop.f32.mrf.mxu0
      %v2467 = vadd.f32 %v2447, %v2466
      %2468 = vdwg.mxu0
      %2469 = vmatpush.msra.mxu0 %v1989
      %2470 = vmatpush.msra.mxu0 %v1988
      %2471 = vmatpush.msra.mxu0 %v1987
      %2472 = vmatpush.msra.mxu0 %v1986
      %2473 = vmatpush.msra.mxu0 %v1985
      %2474 = vmatpush.msra.mxu0 %v1984
      %2475 = vmatpush.msra.mxu0 %v1983
      %2476 = vmatpush.msra.mxu0 %v1982
      %2477 = vmatpush.msra.mxu0 %v1981
      %2478 = vmatpush.msra.mxu0 %v1980
      %2479 = vmatpush.msra.mxu0 %v1979
      %2480 = vmatpush.msra.mxu0 %v1978
      %2481 = vmatpush.msra.mxu0 %v1977
      %2482 = vmatpush.msra.mxu0 %v1976
      %2483 = vmatpush.msra.mxu0 %v1975
      %2484 = vmatpush.msra.mxu0 %v1974
      %2485 = vmatmul.f32.gmra.mxu0 %v2366
      %v2486 = vpop.f32.mrf.mxu0
      %v2487 = vadd.f32 %v2467, %v2486
      %2488 = vdwg.mxu0
      %2489 = vmatpush.msra.mxu0 %v2005
      %2490 = vmatpush.msra.mxu0 %v2004
      %2491 = vmatpush.msra.mxu0 %v2003
      %2492 = vmatpush.msra.mxu0 %v2002
      %2493 = vmatpush.msra.mxu0 %v2001
      %2494 = vmatpush.msra.mxu0 %v2000
      %2495 = vmatpush.msra.mxu0 %v1999
      %2496 = vmatpush.msra.mxu0 %v1998
      %2497 = vmatpush.msra.mxu0 %v1997
      %2498 = vmatpush.msra.mxu0 %v1996
      %2499 = vmatpush.msra.mxu0 %v1995
      %2500 = vmatpush.msra.mxu0 %v1994
      %2501 = vmatpush.msra.mxu0 %v1993
      %2502 = vmatpush.msra.mxu0 %v1992
      %2503 = vmatpush.msra.mxu0 %v1991
      %2504 = vmatpush.msra.mxu0 %v1990
      %2505 = vmatmul.f32.gmra.mxu0 %v2367
      %v2506 = vpop.f32.mrf.mxu0
      %v2507 = vadd.f32 %v2487, %v2506
      %2508 = vdwg.mxu0
      %2509 = vmatpush.msra.mxu0 %v2021
      %2510 = vmatpush.msra.mxu0 %v2020
      %2511 = vmatpush.msra.mxu0 %v2019
      %2512 = vmatpush.msra.mxu0 %v2018
      %2513 = vmatpush.msra.mxu0 %v2017
      %2514 = vmatpush.msra.mxu0 %v2016
      %2515 = vmatpush.msra.mxu0 %v2015
      %2516 = vmatpush.msra.mxu0 %v2014
      %2517 = vmatpush.msra.mxu0 %v2013
      %2518 = vmatpush.msra.mxu0 %v2012
      %2519 = vmatpush.msra.mxu0 %v2011
      %2520 = vmatpush.msra.mxu0 %v2010
      %2521 = vmatpush.msra.mxu0 %v2009
      %2522 = vmatpush.msra.mxu0 %v2008
      %2523 = vmatpush.msra.mxu0 %v2007
      %2524 = vmatpush.msra.mxu0 %v2006
      %2525 = vmatmul.f32.gmra.mxu0 %v2368
      %v2526 = vpop.f32.mrf.mxu0
      %v2527 = vadd.f32 %v2507, %v2526
      %2528 = vdwg.mxu0
      %v2529 = vrsqrt.pop %v2527
      %v2530 = vmul.f32 %v2529, %v2527
      %v2531 = vmul.f32 %v2530, %v2529
      %v2532 = vmul.f32 0.5, %v2531
      %v2533 = vsub.f32 1.5, %v2532
      %v2534 = vmul.f32 %v2529, %v2533
      %vm2535 = vweird.f32 %v2527
      %vm2536 = vweird.f32 %v2529
      %vm2537 = vmor %vm2535, %vm2536
      %v2538 = vsel %vm2537, %v2529, %v2534
      %v2540 = vsel %vm842, %v2538, 0
      %2542 = vmatpush.msra.mxu0 0.0
      %2543 = vmatpush.msra.mxu0 0.0
      %2544 = vmatpush.msra.mxu0 0.0
      %2545 = vmatpush.msra.mxu0 0.0
      %2546 = vmatpush.msra.mxu0 0.0
      %2547 = vmatpush.msra.mxu0 0.0
      %2548 = vmatpush.msra.mxu0 0.0
      %2549 = vmatpush.msra.mxu0 0.0
      %2550 = vmatpush.msra.mxu0 0.0
      %2551 = vmatpush.msra.mxu0 0.0
      %2552 = vmatpush.msra.mxu0 0.0
      %2553 = vmatpush.msra.mxu0 0.0
      %2554 = vmatpush.msra.mxu0 0.0
      %2555 = vmatpush.msra.mxu0 0.0
      %2556 = vmatpush.msra.mxu0 0.0
      %2557 = vmatpush.msra.mxu0 %v2182
      %2558 = vmatmul.f32.gmra.mxu0 %v2540
      %v2559 = vpop.f32.mrf.mxu0
      %v2560 = vadd.f32 0.0, %v2559
      %2561 = vdwg.mxu0
      %2562 = vmatpush.msra.mxu0 0.0
      %2563 = vmatpush.msra.mxu0 0.0
      %2564 = vmatpush.msra.mxu0 0.0
      %2565 = vmatpush.msra.mxu0 0.0
      %2566 = vmatpush.msra.mxu0 0.0
      %2567 = vmatpush.msra.mxu0 0.0
      %2568 = vmatpush.msra.mxu0 0.0
      %2569 = vmatpush.msra.mxu0 0.0
      %2570 = vmatpush.msra.mxu0 0.0
      %2571 = vmatpush.msra.mxu0 0.0
      %2572 = vmatpush.msra.mxu0 0.0
      %2573 = vmatpush.msra.mxu0 0.0
      %2574 = vmatpush.msra.mxu0 0.0
      %2575 = vmatpush.msra.mxu0 0.0
      %2576 = vmatpush.msra.mxu0 0.0
      %2577 = vmatpush.msra.mxu0 %v2183
      %2578 = vmatmul.f32.gmra.mxu0 %v2540
      %v2579 = vpop.f32.mrf.mxu0
      %v2580 = vadd.f32 0.0, %v2579
      %2581 = vdwg.mxu0
      %2582 = vmatpush.msra.mxu0 0.0
      %2583 = vmatpush.msra.mxu0 0.0
      %2584 = vmatpush.msra.mxu0 0.0
      %2585 = vmatpush.msra.mxu0 0.0
      %2586 = vmatpush.msra.mxu0 0.0
      %2587 = vmatpush.msra.mxu0 0.0
      %2588 = vmatpush.msra.mxu0 0.0
      %2589 = vmatpush.msra.mxu0 0.0
      %2590 = vmatpush.msra.mxu0 0.0
      %2591 = vmatpush.msra.mxu0 0.0
      %2592 = vmatpush.msra.mxu0 0.0
      %2593 = vmatpush.msra.mxu0 0.0
      %2594 = vmatpush.msra.mxu0 0.0
      %2595 = vmatpush.msra.mxu0 0.0
      %2596 = vmatpush.msra.mxu0 0.0
      %2597 = vmatpush.msra.mxu0 %v2184
      %2598 = vmatmul.f32.gmra.mxu0 %v2540
      %v2599 = vpop.f32.mrf.mxu0
      %v2600 = vadd.f32 0.0, %v2599
      %2601 = vdwg.mxu0
      %2602 = vmatpush.msra.mxu0 0.0
      %2603 = vmatpush.msra.mxu0 0.0
      %2604 = vmatpush.msra.mxu0 0.0
      %2605 = vmatpush.msra.mxu0 0.0
      %2606 = vmatpush.msra.mxu0 0.0
      %2607 = vmatpush.msra.mxu0 0.0
      %2608 = vmatpush.msra.mxu0 0.0
      %2609 = vmatpush.msra.mxu0 0.0
      %2610 = vmatpush.msra.mxu0 0.0
      %2611 = vmatpush.msra.mxu0 0.0
      %2612 = vmatpush.msra.mxu0 0.0
      %2613 = vmatpush.msra.mxu0 0.0
      %2614 = vmatpush.msra.mxu0 0.0
      %2615 = vmatpush.msra.mxu0 0.0
      %2616 = vmatpush.msra.mxu0 0.0
      %2617 = vmatpush.msra.mxu0 %v2185
      %2618 = vmatmul.f32.gmra.mxu0 %v2540
      %v2619 = vpop.f32.mrf.mxu0
      %v2620 = vadd.f32 0.0, %v2619
      %2621 = vdwg.mxu0
      %2622 = vmatpush.msra.mxu0 0.0
      %2623 = vmatpush.msra.mxu0 0.0
      %2624 = vmatpush.msra.mxu0 0.0
      %2625 = vmatpush.msra.mxu0 0.0
      %2626 = vmatpush.msra.mxu0 0.0
      %2627 = vmatpush.msra.mxu0 0.0
      %2628 = vmatpush.msra.mxu0 0.0
      %2629 = vmatpush.msra.mxu0 0.0
      %2630 = vmatpush.msra.mxu0 0.0
      %2631 = vmatpush.msra.mxu0 0.0
      %2632 = vmatpush.msra.mxu0 0.0
      %2633 = vmatpush.msra.mxu0 0.0
      %2634 = vmatpush.msra.mxu0 0.0
      %2635 = vmatpush.msra.mxu0 0.0
      %2636 = vmatpush.msra.mxu0 0.0
      %2637 = vmatpush.msra.mxu0 %v2186
      %2638 = vmatmul.f32.gmra.mxu0 %v2540
      %v2639 = vpop.f32.mrf.mxu0
      %v2640 = vadd.f32 0.0, %v2639
      %2641 = vdwg.mxu0
      %2642 = vmatpush.msra.mxu0 0.0
      %2643 = vmatpush.msra.mxu0 0.0
      %2644 = vmatpush.msra.mxu0 0.0
      %2645 = vmatpush.msra.mxu0 0.0
      %2646 = vmatpush.msra.mxu0 0.0
      %2647 = vmatpush.msra.mxu0 0.0
      %2648 = vmatpush.msra.mxu0 0.0
      %2649 = vmatpush.msra.mxu0 0.0
      %2650 = vmatpush.msra.mxu0 0.0
      %2651 = vmatpush.msra.mxu0 0.0
      %2652 = vmatpush.msra.mxu0 0.0
      %2653 = vmatpush.msra.mxu0 0.0
      %2654 = vmatpush.msra.mxu0 0.0
      %2655 = vmatpush.msra.mxu0 0.0
      %2656 = vmatpush.msra.mxu0 0.0
      %2657 = vmatpush.msra.mxu0 %v2187
      %2658 = vmatmul.f32.gmra.mxu0 %v2540
      %v2659 = vpop.f32.mrf.mxu0
      %v2660 = vadd.f32 0.0, %v2659
      %2661 = vdwg.mxu0
      %2662 = vmatpush.msra.mxu0 0.0
      %2663 = vmatpush.msra.mxu0 0.0
      %2664 = vmatpush.msra.mxu0 0.0
      %2665 = vmatpush.msra.mxu0 0.0
      %2666 = vmatpush.msra.mxu0 0.0
      %2667 = vmatpush.msra.mxu0 0.0
      %2668 = vmatpush.msra.mxu0 0.0
      %2669 = vmatpush.msra.mxu0 0.0
      %2670 = vmatpush.msra.mxu0 0.0
      %2671 = vmatpush.msra.mxu0 0.0
      %2672 = vmatpush.msra.mxu0 0.0
      %2673 = vmatpush.msra.mxu0 0.0
      %2674 = vmatpush.msra.mxu0 0.0
      %2675 = vmatpush.msra.mxu0 0.0
      %2676 = vmatpush.msra.mxu0 0.0
      %2677 = vmatpush.msra.mxu0 %v2188
      %2678 = vmatmul.f32.gmra.mxu0 %v2540
      %v2679 = vpop.f32.mrf.mxu0
      %v2680 = vadd.f32 0.0, %v2679
      %2681 = vdwg.mxu0
      %2682 = vmatpush.msra.mxu0 0.0
      %2683 = vmatpush.msra.mxu0 0.0
      %2684 = vmatpush.msra.mxu0 0.0
      %2685 = vmatpush.msra.mxu0 0.0
      %2686 = vmatpush.msra.mxu0 0.0
      %2687 = vmatpush.msra.mxu0 0.0
      %2688 = vmatpush.msra.mxu0 0.0
      %2689 = vmatpush.msra.mxu0 0.0
      %2690 = vmatpush.msra.mxu0 0.0
      %2691 = vmatpush.msra.mxu0 0.0
      %2692 = vmatpush.msra.mxu0 0.0
      %2693 = vmatpush.msra.mxu0 0.0
      %2694 = vmatpush.msra.mxu0 0.0
      %2695 = vmatpush.msra.mxu0 0.0
      %2696 = vmatpush.msra.mxu0 0.0
      %2697 = vmatpush.msra.mxu0 %v2189
      %2698 = vmatmul.f32.gmra.mxu0 %v2540
      %v2699 = vpop.f32.mrf.mxu0
      %v2700 = vadd.f32 0.0, %v2699
      %2701 = vdwg.mxu0
      %v2702 = vmul.f32 %v2353, %v2560
      %v2703 = vmul.f32 %v2354, %v2580
      %v2704 = vmul.f32 %v2355, %v2600
      %v2705 = vmul.f32 %v2356, %v2620
      %v2706 = vmul.f32 %v2357, %v2640
      %v2707 = vmul.f32 %v2358, %v2660
      %v2708 = vmul.f32 %v2359, %v2680
      %v2709 = vmul.f32 %v2360, %v2700
      %v2710 = vld [vmem:[%s12] sm:$0xff]
      %v2712 = vperm.slane %v2710, 0
      %v2713 = vperm.slane %v2710, 1
      %v2714 = vperm.slane %v2710, 2
      %v2715 = vperm.slane %v2710, 3
      %v2716 = vperm.slane %v2710, 4
      %v2717 = vperm.slane %v2710, 5
      %v2718 = vperm.slane %v2710, 6
      %v2719 = vperm.slane %v2710, 7
      %v2728 = vmul.f32 %v2702, %v2712
      %v2729 = vmul.f32 %v2703, %v2713
      %v2730 = vmul.f32 %v2704, %v2714
      %v2731 = vmul.f32 %v2705, %v2715
      %v2732 = vmul.f32 %v2706, %v2716
      %v2733 = vmul.f32 %v2707, %v2717
      %v2734 = vmul.f32 %v2708, %v2718
      %v2735 = vmul.f32 %v2709, %v2719
      %v2736 = vld [vmem:[%s13] sm:$0xff]
      %v2738 = vperm.slane %v2736, 0
      %v2739 = vperm.slane %v2736, 1
      %v2740 = vperm.slane %v2736, 2
      %v2741 = vperm.slane %v2736, 3
      %v2742 = vperm.slane %v2736, 4
      %v2743 = vperm.slane %v2736, 5
      %v2744 = vperm.slane %v2736, 6
      %v2745 = vperm.slane %v2736, 7
      %v2754 = vadd.f32 %v2728, %v2738
      %v2755 = vadd.f32 %v2729, %v2739
      %v2756 = vadd.f32 %v2730, %v2740
      %v2757 = vadd.f32 %v2731, %v2741
      %v2758 = vadd.f32 %v2732, %v2742
      %v2759 = vadd.f32 %v2733, %v2743
      %v2760 = vadd.f32 %v2734, %v2744
      %v2761 = vadd.f32 %v2735, %v2745
      %v2762 = vxor.u32 %v2754, 2147483648
      %v2763 = vxor.u32 %v2755, 2147483648
      %v2764 = vxor.u32 %v2756, 2147483648
      %v2765 = vxor.u32 %v2757, 2147483648
      %v2766 = vxor.u32 %v2758, 2147483648
      %v2767 = vxor.u32 %v2759, 2147483648
      %v2768 = vxor.u32 %v2760, 2147483648
      %v2769 = vxor.u32 %v2761, 2147483648
      %v2770 = vmul.f32 %v2762, 1.442695
      %v2771 = vpow.pop %v2770
      %v2772 = vmul.f32 %v2763, 1.442695
      %v2773 = vpow.pop %v2772
      %v2774 = vmul.f32 %v2764, 1.442695
      %v2775 = vpow.pop %v2774
      %v2776 = vmul.f32 %v2765, 1.442695
      %v2777 = vpow.pop %v2776
      %v2778 = vmul.f32 %v2766, 1.442695
      %v2779 = vpow.pop %v2778
      %v2780 = vmul.f32 %v2767, 1.442695
      %v2781 = vpow.pop %v2780
      %v2782 = vmul.f32 %v2768, 1.442695
      %v2783 = vpow.pop %v2782
      %v2784 = vmul.f32 %v2769, 1.442695
      %v2785 = vpow.pop %v2784
      %v2786 = vadd.f32 %v2771, 1.0
      %v2787 = vadd.f32 %v2773, 1.0
      %v2788 = vadd.f32 %v2775, 1.0
      %v2789 = vadd.f32 %v2777, 1.0
      %v2790 = vadd.f32 %v2779, 1.0
      %v2791 = vadd.f32 %v2781, 1.0
      %v2792 = vadd.f32 %v2783, 1.0
      %v2793 = vadd.f32 %v2785, 1.0
      %v2794 = vrcp.pop %v2786
      %v2795 = vmul.f32 %v2786, %v2794
      %v2796 = vsub.f32 1.0, %v2795
      %v2797 = vmul.f32 %v2794, %v2796
      %v2798 = vadd.f32 %v2794, %v2797
      %vm2799 = vweird.f32 %v2786
      %vm2800 = vweird.f32 %v2794
      %vm2801 = vmor %vm2799, %vm2800
      %v2802 = vsel %vm2801, %v2794, %v2798
      %v2803 = vand.u32 2147483647, %v2786
      %vm2804 = vcmp.eq.f32.partialorder %v2803, 8.507059e+37
      %v2805 = vand.u32 %v2786, 2147483648
      %v2806 = vor.u32 1.1754944e-38, %v2805
      %v2807 = vsel %vm2804, %v2806, %v2802
      %v2808 = vmul.f32 1.0, %v2807
      %v2809 = vrcp.pop %v2787
      %v2810 = vmul.f32 %v2787, %v2809
      %v2811 = vsub.f32 1.0, %v2810
      %v2812 = vmul.f32 %v2809, %v2811
      %v2813 = vadd.f32 %v2809, %v2812
      %vm2814 = vweird.f32 %v2787
      %vm2815 = vweird.f32 %v2809
      %vm2816 = vmor %vm2814, %vm2815
      %v2817 = vsel %vm2816, %v2809, %v2813
      %v2818 = vand.u32 2147483647, %v2787
      %vm2819 = vcmp.eq.f32.partialorder %v2818, 8.507059e+37
      %v2820 = vand.u32 %v2787, 2147483648
      %v2821 = vor.u32 1.1754944e-38, %v2820
      %v2822 = vsel %vm2819, %v2821, %v2817
      %v2823 = vmul.f32 1.0, %v2822
      %v2824 = vrcp.pop %v2788
      %v2825 = vmul.f32 %v2788, %v2824
      %v2826 = vsub.f32 1.0, %v2825
      %v2827 = vmul.f32 %v2824, %v2826
      %v2828 = vadd.f32 %v2824, %v2827
      %vm2829 = vweird.f32 %v2788
      %vm2830 = vweird.f32 %v2824
      %vm2831 = vmor %vm2829, %vm2830
      %v2832 = vsel %vm2831, %v2824, %v2828
      %v2833 = vand.u32 2147483647, %v2788
      %vm2834 = vcmp.eq.f32.partialorder %v2833, 8.507059e+37
      %v2835 = vand.u32 %v2788, 2147483648
      %v2836 = vor.u32 1.1754944e-38, %v2835
      %v2837 = vsel %vm2834, %v2836, %v2832
      %v2838 = vmul.f32 1.0, %v2837
      %v2839 = vrcp.pop %v2789
      %v2840 = vmul.f32 %v2789, %v2839
      %v2841 = vsub.f32 1.0, %v2840
      %v2842 = vmul.f32 %v2839, %v2841
      %v2843 = vadd.f32 %v2839, %v2842
      %vm2844 = vweird.f32 %v2789
      %vm2845 = vweird.f32 %v2839
      %vm2846 = vmor %vm2844, %vm2845
      %v2847 = vsel %vm2846, %v2839, %v2843
      %v2848 = vand.u32 2147483647, %v2789
      %vm2849 = vcmp.eq.f32.partialorder %v2848, 8.507059e+37
      %v2850 = vand.u32 %v2789, 2147483648
      %v2851 = vor.u32 1.1754944e-38, %v2850
      %v2852 = vsel %vm2849, %v2851, %v2847
      %v2853 = vmul.f32 1.0, %v2852
      %v2854 = vrcp.pop %v2790
      %v2855 = vmul.f32 %v2790, %v2854
      %v2856 = vsub.f32 1.0, %v2855
      %v2857 = vmul.f32 %v2854, %v2856
      %v2858 = vadd.f32 %v2854, %v2857
      %vm2859 = vweird.f32 %v2790
      %vm2860 = vweird.f32 %v2854
      %vm2861 = vmor %vm2859, %vm2860
      %v2862 = vsel %vm2861, %v2854, %v2858
      %v2863 = vand.u32 2147483647, %v2790
      %vm2864 = vcmp.eq.f32.partialorder %v2863, 8.507059e+37
      %v2865 = vand.u32 %v2790, 2147483648
      %v2866 = vor.u32 1.1754944e-38, %v2865
      %v2867 = vsel %vm2864, %v2866, %v2862
      %v2868 = vmul.f32 1.0, %v2867
      %v2869 = vrcp.pop %v2791
      %v2870 = vmul.f32 %v2791, %v2869
      %v2871 = vsub.f32 1.0, %v2870
      %v2872 = vmul.f32 %v2869, %v2871
      %v2873 = vadd.f32 %v2869, %v2872
      %vm2874 = vweird.f32 %v2791
      %vm2875 = vweird.f32 %v2869
      %vm2876 = vmor %vm2874, %vm2875
      %v2877 = vsel %vm2876, %v2869, %v2873
      %v2878 = vand.u32 2147483647, %v2791
      %vm2879 = vcmp.eq.f32.partialorder %v2878, 8.507059e+37
      %v2880 = vand.u32 %v2791, 2147483648
      %v2881 = vor.u32 1.1754944e-38, %v2880
      %v2882 = vsel %vm2879, %v2881, %v2877
      %v2883 = vmul.f32 1.0, %v2882
      %v2884 = vrcp.pop %v2792
      %v2885 = vmul.f32 %v2792, %v2884
      %v2886 = vsub.f32 1.0, %v2885
      %v2887 = vmul.f32 %v2884, %v2886
      %v2888 = vadd.f32 %v2884, %v2887
      %vm2889 = vweird.f32 %v2792
      %vm2890 = vweird.f32 %v2884
      %vm2891 = vmor %vm2889, %vm2890
      %v2892 = vsel %vm2891, %v2884, %v2888
      %v2893 = vand.u32 2147483647, %v2792
      %vm2894 = vcmp.eq.f32.partialorder %v2893, 8.507059e+37
      %v2895 = vand.u32 %v2792, 2147483648
      %v2896 = vor.u32 1.1754944e-38, %v2895
      %v2897 = vsel %vm2894, %v2896, %v2892
      %v2898 = vmul.f32 1.0, %v2897
      %v2899 = vrcp.pop %v2793
      %v2900 = vmul.f32 %v2793, %v2899
      %v2901 = vsub.f32 1.0, %v2900
      %v2902 = vmul.f32 %v2899, %v2901
      %v2903 = vadd.f32 %v2899, %v2902
      %vm2904 = vweird.f32 %v2793
      %vm2905 = vweird.f32 %v2899
      %vm2906 = vmor %vm2904, %vm2905
      %v2907 = vsel %vm2906, %v2899, %v2903
      %v2908 = vand.u32 2147483647, %v2793
      %vm2909 = vcmp.eq.f32.partialorder %v2908, 8.507059e+37
      %v2910 = vand.u32 %v2793, 2147483648
      %v2911 = vor.u32 1.1754944e-38, %v2910
      %v2912 = vsel %vm2909, %v2911, %v2907
      %v2913 = vmul.f32 1.0, %v2912
      %v2922 = vrot.slane %v2808, 1
      %v2923 = vrot.slane %v2823, 1
      %v2924 = vrot.slane %v2838, 1
      %v2925 = vrot.slane %v2853, 1
      %v2926 = vrot.slane %v2868, 1
      %v2927 = vrot.slane %v2883, 1
      %v2928 = vrot.slane %v2898, 1
      %v2929 = vrot.slane %v2913, 1
      %v2938 = vadd.f32 %v2808, %v2922
      %v2939 = vadd.f32 %v2823, %v2923
      %v2940 = vadd.f32 %v2838, %v2924
      %v2941 = vadd.f32 %v2853, %v2925
      %v2942 = vadd.f32 %v2868, %v2926
      %v2943 = vadd.f32 %v2883, %v2927
      %v2944 = vadd.f32 %v2898, %v2928
      %v2945 = vadd.f32 %v2913, %v2929
      %v2947 = vrot.slane %v2939, 7
      %v2950 = vrot.slane %v2940, 6
      %v2953 = vrot.slane %v2941, 5
      %v2956 = vrot.slane %v2942, 4
      %v2959 = vrot.slane %v2943, 3
      %v2962 = vrot.slane %v2944, 2
      %v2965 = vrot.slane %v2945, 1
      %vm2967 = vcmask 1040384
      %v2968 = vsel %vm2967, %v2938, %v2947
      %vm2969 = vcmask 1041408
      %v2970 = vsel %vm2969, %v2968, %v2950
      %vm2971 = vcmask 1042432
      %v2972 = vsel %vm2971, %v2970, %v2953
      %v2973 = vsel %vm878, %v2972, %v2956
      %vm2974 = vcmask 1044480
      %v2975 = vsel %vm2974, %v2973, %v2959
      %vm2976 = vcmask 1045504
      %v2977 = vsel %vm2976, %v2975, %v2962
      %vm2978 = vcmask 1046528
      %v2979 = vsel %vm2978, %v2977, %v2965
      %2981 = vset.pattern.permute.xlu0 0
      %2982 = vperm.xlu0 %2981, %v941
      %v2983 = vpop.permute.xlu0 %2982
      %v2985 = vmul.f32 %v2979, %v2983
      %v2986 = vrot.slane %v2985, 4
      %v2987 = vadd.f32 %v2985, %v2986
      %v2988 = vrot.slane %v2987, 2
      %v2989 = vadd.f32 %v2987, %v2988
      %v2990 = vrot.slane %v2989, 1
      %v2991 = vadd.f32 %v2989, %v2990
      %v2992 = vxor.u32 %v2991, 2147483648
      %v2993 = vmul.f32 %v2992, 1.442695
      %v2994 = vpow.pop %v2993
      %v2995 = vadd.f32 %v2994, 1.0
      %v2996 = vrcp.pop %v2995
      %v2997 = vmul.f32 %v2995, %v2996
      %v2998 = vsub.f32 1.0, %v2997
      %v2999 = vmul.f32 %v2996, %v2998
      %v3000 = vadd.f32 %v2996, %v2999
      %vm3001 = vweird.f32 %v2995
      %vm3002 = vweird.f32 %v2996
      %vm3003 = vmor %vm3001, %vm3002
      %v3004 = vsel %vm3003, %v2996, %v3000
      %v3005 = vand.u32 2147483647, %v2995
      %vm3006 = vcmp.eq.f32.partialorder %v3005, 8.507059e+37
      %v3007 = vand.u32 %v2995, 2147483648
      %v3008 = vor.u32 1.1754944e-38, %v3007
      %v3009 = vsel %vm3006, %v3008, %v3004
      %v3010 = vmul.f32 1.0, %v3009
      %v3012 = vrot.slane %v2979, 5
      %v3014 = vsel %vm2967, %v3010, %v3012
      %v3015 = vsel %vm2969, %v3014, %v3012
      %v3016 = vsel %vm2971, %v3015, %v2979
      %v3017 = vsel %vm878, %v3016, 0.0
      %3018 = vxpose.xlu0.b32.start [1/16] %v3017, 128
      %3019 = vxpose.xlu0.b32.cont [2/16] 0.0, 128
      %3020 = vxpose.xlu0.b32.cont [3/16] 0.0, 128
      %3021 = vxpose.xlu0.b32.cont [4/16] 0.0, 128
      %3022 = vxpose.xlu0.b32.cont [5/16] 0.0, 128
      %3023 = vxpose.xlu0.b32.cont [6/16] 0.0, 128
      %3024 = vxpose.xlu0.b32.cont [7/16] 0.0, 128
      %3025 = vxpose.xlu0.b32.cont [8/16] 0.0, 128
      %3026 = vxpose.xlu0.b32.cont [9/16] 0.0, 128
      %3027 = vxpose.xlu0.b32.cont [10/16] 0.0, 128
      %3028 = vxpose.xlu0.b32.cont [11/16] 0.0, 128
      %3029 = vxpose.xlu0.b32.cont [12/16] 0.0, 128
      %3030 = vxpose.xlu0.b32.cont [13/16] 0.0, 128
      %3031 = vxpose.xlu0.b32.cont [14/16] 0.0, 128
      %3032 = vxpose.xlu0.b32.cont [15/16] 0.0, 128
      %3033 = vxpose.xlu0.b32.end [16/16] 0.0, 128
      %v3034 = vpop.trf.xlu0
      %v3035 = vpop.trf.xlu0
      %v3036 = vpop.trf.xlu0
      %v3037 = vpop.trf.xlu0
      %v3038 = vpop.trf.xlu0
      %v3039 = vpop.trf.xlu0
      %v3040 = vpop.trf.xlu0
      %v3041 = vpop.trf.xlu0
      %v3042 = vpop.trf.xlu0
      %v3043 = vpop.trf.xlu0
      %v3044 = vpop.trf.xlu0
      %v3045 = vpop.trf.xlu0
      %v3046 = vpop.trf.xlu0
      %v3047 = vpop.trf.xlu0
      %v3048 = vpop.trf.xlu0
      %v3049 = vpop.trf.xlu0
      %3050 = vst.msk [vmem:[%s646] sm:$0xff] %vm842, %v3034
      %3051 = vst.msk [vmem:[%s646 + $0x8] sm:$0xff] %vm842, %v3035
      %3052 = vst.msk [vmem:[%s646 + $0x10] sm:$0xff] %vm842, %v3036
      %3053 = vst.msk [vmem:[%s646 + $0x18] sm:$0xff] %vm842, %v3037
      %3054 = vst.msk [vmem:[%s646 + $0x20] sm:$0xff] %vm842, %v3038
      %3055 = vst.msk [vmem:[%s646 + $0x28] sm:$0xff] %vm842, %v3039
      %3056 = vst.msk [vmem:[%s646 + $0x30] sm:$0xff] %vm842, %v3040
      %3057 = vst.msk [vmem:[%s646 + $0x38] sm:$0xff] %vm842, %v3041
      %3058 = vst.msk [vmem:[%s646 + $0x40] sm:$0xff] %vm842, %v3042
      %3059 = vst.msk [vmem:[%s646 + $0x48] sm:$0xff] %vm842, %v3043
      %3060 = vst.msk [vmem:[%s646 + $0x50] sm:$0xff] %vm842, %v3044
      %3061 = vst.msk [vmem:[%s646 + $0x58] sm:$0xff] %vm842, %v3045
      %3062 = vst.msk [vmem:[%s646 + $0x60] sm:$0xff] %vm842, %v3046
      %3063 = vst.msk [vmem:[%s646 + $0x68] sm:$0xff] %vm842, %v3047
      %3064 = vst.msk [vmem:[%s646 + $0x70] sm:$0xff] %vm842, %v3048
      %3065 = vst.msk [vmem:[%s646 + $0x78] sm:$0xff] %vm842, %v3049
      %p3066 = scmp.lt.s32.totalorder %s31, 1
      %s3067 = scalar_select %p3066, %s31, 1
      %s3068 = smul.addr %s3067, 16
      %s3069 = smul.addr %s3068, 8
      %s3070 = scalar_lea.vmem %s20, %s3069
      // Predicated region
      $region101: #{tpu_custom_call.1} parent=99 // pred_check
        %p3071 = pneg %p479
      $region102: #{tpu_custom_call.1} parent=99 // pred_check_branch
        %3073 = sbr.rel (%p3071) target = $region104
      $region103: #{tpu_custom_call.1} parent=99 // pred_region
        _
      $region104: #{tpu_custom_call.1} parent=99 // pred_fallthru
        _
    $region100: #{tpu_custom_call.1} parent=5 // pred_fallthru
      _
    %p3074 = scmp.le.s32.totalorder 2, %s26
    // Predicated region
    $region105: #{tpu_custom_call.1} parent=5 // pred_check
      %p3075 = pneg %p3074
    $region106: #{tpu_custom_call.1} parent=5 // pred_check_branch
      %3077 = sbr.rel (%p3075) target = $region108
    $region107: #{tpu_custom_call.1} parent=5 // pred_region
      %s3078 = ssub.s32 %s26, 2
      // Predicated region
      $region109: #{tpu_custom_call.1} parent=107 // pred_check
        %p3079 = pneg %p485
      $region110: #{tpu_custom_call.1} parent=107 // pred_check_branch
        %3081 = sbr.rel (%p3079) target = $region112
      $region111: #{tpu_custom_call.1} parent=107 // pred_region
        %p3082 = scmp.lt.s32.totalorder %s32, 1
        %s3083 = scalar_select %p3082, %s32, 1
        %s3084 = smul.addr %s3083, 16
        %s3085 = smul.addr %s3084, 8
        %s3086 = scalar_lea.vmem %s20, %s3085
      $region112: #{tpu_custom_call.1} parent=107 // pred_fallthru
        _
    $region108: #{tpu_custom_call.1} parent=5 // pred_fallthru
      _
  $region6: #{tpu_custom_call.1} parent=0 // loop_footer
    %s30 = sadd.s32 1, %s26
  $region7: #{tpu_custom_call.1} parent=0 // loop_footer_branch
    %25 = sbr.rel target = $region3
  $region8: #{tpu_custom_call.1} parent=0 // loop_exit
    _

</llo_original>
